<compile_context>
chip_gen: v7x
topology: tpu7x:2x2x1
jax: 0.10.0
libtpu: 0.0.40
codegen_flags: <defaults>
</compile_context>

<pallas_src>
import numpy as np
import jax
import jax.numpy as jnp
from jax.experimental import pallas as pl
from jax.experimental.pallas import tpu as pltpu

# ---- model hyper-parameters (from ResidualDegrade.__init__ defaults) ----
N      = 2                        # batch
C_IN   = 4                        # one-hot RNA bases
L_IN   = 110                      # sequence length implied by the module
C1     = 96                       # stage1_conv_channels
K1     = 12                       # stage1_conv_kernel_size
K2     = 5                        # stage2_conv_kernel_size
P2     = (K2 - 1) // 2            # conv_1d_same_padding(5) == 2
POOL   = 10                       # stage3_pool_kernel_size
L1     = L_IN - K1 + 1            # 99  (stage3_pool_in_length)
L_POOL = (L1 - POOL) // POOL + 1  # 9   (stage3_pool_out_length)
C4     = 196                      # stage4_conv_channels
K4     = L_POOL                   # stage4 conv kernel size == 9 -> output length 1
EPS    = 1e-5                     # BatchNorm eps

# ---- stacked-row layout (both batches on one row axis, zero rows as conv padding) ----
def _rnd8(v):
    return (v + 7) // 8 * 8

SEAM  = P2                              # shared zero rows between the two batches
BSTEP = L1 + SEAM                       # 101: row stride between batch starts
R200  = N * L1 + (N - 1) * SEAM         # 200: "valid" coords (conv-b output rows)
LM    = 2 * P2                          # 4: left margin so conv-a output keeps a 2-row pad
R_T   = _rnd8(R200 + 2 * P2)            # 208: conv-a output rows (multiple of 8)
R_H1  = _rnd8(R_T + K2 - 1)             # 216: stage-1 output rows (multiple of 8)


# ------------------------------ Pallas kernel ------------------------------
def residual_degrade_kernel(
        xcol_ref,                       # (R_H1, K1*C_IN) pre-padded im2col  (VMEM)
        pmat_ref,                       # (N*K4, R200) constant avg-pool matrix (VMEM)
        w1_ref,                         # (48, 96)        scale-folded        (VMEM)
        w2a_ref, w2b_ref,               # (5, 96, 96) x2  scale-folded        (VMEM)
        w4_hbm_ref,                     # (9, 96, 196)    scale-folded        (HBM / pl.ANY)
        b96_ref,                        # (8, 96): rows 0..2 = b1, b2a, b2b   (VMEM)
        slab_ref,                       # (8, 256): row0=b4, row1=w5, [2,0]=b5 (VMEM)
        out_ref,                        # (N, 1)
        w4_vmem, w4_sem):               # scratch: stage-4 weight buffer + DMA semaphore
    f32 = jnp.float32

    # Largest operand, needed last: start its DMA now, hide it behind stages 1-3.
    w4_copy = pltpu.make_async_copy(w4_hbm_ref, w4_vmem, w4_sem)
    w4_copy.start()

    b96 = b96_ref[...]
    b1, b2a, b2b = b96[0:1, :], b96[1:2, :], b96[2:3, :]
    slab = slab_ref[...]
    b4, w5r, b5 = slab[0:1, :C4], slab[1:2, :C4], slab[2:3, 0:1]

    # ---- stage1: Conv1d(4->96, k=12, valid) + BN + ReLU — one im2col matmul ----
    h1 = jnp.dot(xcol_ref[...], w1_ref[...], preferred_element_type=f32)      # (216, 96)
    r1 = jax.lax.broadcasted_iota(jnp.int32, (R_H1, C1), 0)
    valid1 = (((r1 >= LM) & (r1 < LM + L1)) |
              ((r1 >= LM + BSTEP) & (r1 < LM + BSTEP + L1)))
    h1 = jnp.where(valid1, jnp.maximum(h1 + b1, 0.0), 0.0)                    # pad rows -> 0

    def shifted(buf, k, rows):
        # buf[k:k+rows] via an XLU roll + aligned slice (start 0, rows % 8 == 0).
        if k == 0:
            return buf[:rows, :]
        return pltpu.roll(buf, shift=buf.shape[0] - k, axis=0)[:rows, :]

    # ---- stage2 conv-a (same-pad k=5) + BN + ReLU: 5 independent taps, tree-summed ----
    da = [jnp.dot(shifted(h1, k, R_T), w2a_ref[k], preferred_element_type=f32)
          for k in range(K2)]
    ta = (da[0] + da[1]) + (da[2] + da[3]) + da[4]                            # (208, 96)
    r2 = jax.lax.broadcasted_iota(jnp.int32, (R_T, C1), 0)
    valid2 = (((r2 >= P2) & (r2 < P2 + L1)) |
              ((r2 >= P2 + BSTEP) & (r2 < P2 + BSTEP + L1)))
    t = jnp.where(valid2, jnp.maximum(ta + b2a, 0.0), 0.0)

    # ---- stage2 conv-b + BN (no ReLU before the residual add) ----
    db = [jnp.dot(shifted(t, k, R200), w2b_ref[k], preferred_element_type=f32)
          for k in range(K2)]
    u = (db[0] + db[1]) + (db[2] + db[3]) + db[4] + b2b                       # (200, 96)

    # ---- residual add + ReLU (h1 valid rows sit at h1[LM:LM+R200] in 200-coords) ----
    h2 = jnp.maximum(shifted(h1, LM, R200) + u, 0.0)                          # (200, 96)

    # ---- stage3: AvgPool1d(10) for both batches as ONE constant matmul ----
    # pool row (N*j + n) = pooling window j of batch n.
    pooled = jnp.dot(pmat_ref[...], h2, preferred_element_type=f32)           # (18, 96)

    # ---- stage4: Conv1d(96->196, k=9) + BN + ReLU: 9 taps with M=2, tree-summed ----
    w4_copy.wait()                                                            # DMA done by now
    d4 = [jnp.dot(pooled[N * k:N * k + N, :], w4_vmem[k], preferred_element_type=f32)
          for k in range(K4)]
    acc = (((d4[0] + d4[1]) + (d4[2] + d4[3]))
           + ((d4[4] + d4[5]) + (d4[6] + d4[7]))) + d4[8]                     # (2, 196)
    h4 = jnp.maximum(acc + b4, 0.0)

    # ---- stage5: Linear(196 -> 1) as VPU multiply + lane reduce ----
    out_ref[...] = jnp.sum(h4 * w5r, axis=-1, keepdims=True) + b5


# --------------------------- wrapper-side constants ---------------------------
def _build_pool_matrix():
    pmat = np.zeros((N * K4, R200), np.float32)
    for j in range(K4):
        for n in range(N):
            c0 = n * BSTEP + j * POOL
            pmat[N * j + n, c0:c0 + POOL] = 1.0 / POOL
    return pmat


_PMAT = _build_pool_matrix()            # numpy -> baked compile-time constant under jit


def build_im2col(x_nlc):
    """(N, 110, 4) NLC -> (R_H1, K1*C_IN) im2col, both batches stacked on the row axis at
    their padded-layout offsets; pad/seam rows stay zero."""
    cols = jnp.concatenate([x_nlc[:, k:k + L1, :] for k in range(K1)], axis=-1)  # (N, L1, 48)
    buf = jnp.zeros((R_H1, K1 * C_IN), jnp.float32)
    buf = buf.at[LM:LM + L1, :].set(cols[0])
    buf = buf.at[LM + BSTEP:LM + BSTEP + L1, :].set(cols[1])
    return buf


@jax.jit
def residual_degrade_forward(x_ncl, kparams):
    xcol = build_im2col(jnp.transpose(x_ncl, (0, 2, 1)))      # NCL -> NLC -> im2col rows
    w1, w2a, w2b, w4, b96, slab = kparams
    vmem = pl.BlockSpec(memory_space=pltpu.MemorySpace.VMEM)
    hbm = pl.BlockSpec(memory_space=pl.ANY)                   # w4 stays in HBM; DMA'd in-kernel
    return pl.pallas_call(
        residual_degrade_kernel,
        out_shape=jax.ShapeDtypeStruct((N, 1), jnp.float32),
        in_specs=[vmem, vmem, vmem, vmem, vmem, hbm, vmem, vmem],
        out_specs=vmem,
        scratch_shapes=[pltpu.VMEM((K4, C1, C4), jnp.float32),
                        pltpu.SemaphoreType.DMA(())],
    )(xcol, jnp.asarray(_PMAT), w1, w2a, w2b, w4, b96, slab)


# --------------------------- parameter utilities ---------------------------
def init_raw_params(key):
    """Deterministic synthetic parameters in PyTorch layouts."""
    ks = jax.random.split(key, 9)

    def conv_p(k, out_c, in_c, ksize):
        kw, kb = jax.random.split(k)
        w = jax.random.normal(kw, (out_c, in_c, ksize), jnp.float32) * 0.1
        b = jax.random.normal(kb, (out_c,), jnp.float32) * 0.1
        return w, b

    def bn_p(k, c):
        k1, k2, k3, k4 = jax.random.split(k, 4)
        gamma = jax.random.uniform(k1, (c,), jnp.float32, 0.5, 1.5)
        beta = jax.random.normal(k2, (c,), jnp.float32) * 0.1
        mean = jax.random.normal(k3, (c,), jnp.float32) * 0.1
        var = jax.random.uniform(k4, (c,), jnp.float32, 0.5, 1.5)
        return gamma, beta, mean, var

    kw5, kb5 = jax.random.split(ks[8])
    return {
        "conv1":  conv_p(ks[0], C1, C_IN, K1), "bn1":  bn_p(ks[1], C1),
        "conv2a": conv_p(ks[2], C1, C1, K2),   "bn2a": bn_p(ks[3], C1),
        "conv2b": conv_p(ks[4], C1, C1, K2),   "bn2b": bn_p(ks[5], C1),
        "conv4":  conv_p(ks[6], C4, C1, K4),   "bn4":  bn_p(ks[7], C4),
        "linear": (jax.random.normal(kw5, (1, C4), jnp.float32) * 0.1,
                   jax.random.normal(kb5, (1,), jnp.float32) * 0.1),
    }


def fold_conv_bn(w, b, bn):
    """Fold eval-mode BN + conv bias into the weights: (O,I,K) PyTorch weight -> (K,I,O)
    scale-folded kernel weight plus a per-output-channel bias."""
    gamma, beta, mean, var = bn
    scale = gamma / jnp.sqrt(var + EPS)
    bias = beta + scale * (b - mean)
    w_kio = jnp.transpose(w, (2, 1, 0)) * scale[None, None, :]
    return w_kio, bias


def fold_params(raw):
    w1, b1 = fold_conv_bn(*raw["conv1"], raw["bn1"])
    w1 = w1.reshape(K1 * C_IN, C1)                  # im2col weight: row index = k*C_IN + ci
    w2a, b2a = fold_conv_bn(*raw["conv2a"], raw["bn2a"])
    w2b, b2b = fold_conv_bn(*raw["conv2b"], raw["bn2b"])
    w4, b4 = fold_conv_bn(*raw["conv4"], raw["bn4"])
    w5, b5 = raw["linear"]
    b96 = jnp.zeros((8, C1), jnp.float32)
    b96 = b96.at[0].set(b1).at[1].set(b2a).at[2].set(b2b)
    slab = jnp.zeros((8, 256), jnp.float32)
    slab = slab.at[0, :C4].set(b4).at[1, :C4].set(w5.reshape(-1)).at[2, 0].set(b5[0])
    return [w1, w2a, w2b, w4, b96, slab]


# --------------------------- pure-JAX reference ---------------------------
def reference_forward(x_ncl, raw):
    def conv1d(x, w, b, pad):
        y = jax.lax.conv_general_dilated(
            x, w, window_strides=(1,), padding=[(pad, pad)],
            dimension_numbers=("NCH", "OIH", "NCH"))
        return y + b[None, :, None]

    def bn(x, p):
        gamma, beta, mean, var = p
        s = gamma / jnp.sqrt(var + EPS)
        return (x - mean[None, :, None]) * s[None, :, None] + beta[None, :, None]

    x = jax.nn.relu(bn(conv1d(x_ncl, *raw["conv1"], pad=0), raw["bn1"]))     # stage1
    t = jax.nn.relu(bn(conv1d(x, *raw["conv2a"], pad=P2), raw["bn2a"]))      # stage2
    t = bn(conv1d(t, *raw["conv2b"], pad=P2), raw["bn2b"])
    x = jax.nn.relu(x + t)
    x = x[:, :, :L_POOL * POOL].reshape(N, C1, L_POOL, POOL).mean(-1)        # stage3
    x = jax.nn.relu(bn(conv1d(x, *raw["conv4"], pad=0), raw["bn4"]))         # stage4
    x = x.reshape(N, -1)                                                     # flatten
    w5, b5 = raw["linear"]
    return x @ w5.T + b5                                                     # stage5


# ----------------------------------- main -----------------------------------
if __name__ == "__main__":
    key = jax.random.PRNGKey(0)
    kx, kp = jax.random.split(key)

    x_ncl = jax.random.normal(kx, (N, C_IN, L_IN), jnp.float32)   # PyTorch NCL layout
    raw = init_raw_params(kp)
    kparams = fold_params(raw)

    out = jax.block_until_ready(residual_degrade_forward(x_ncl, kparams))

    ref = reference_forward(x_ncl, raw)
    assert out.shape == (N, 1), out.shape
    assert jnp.allclose(out, ref, atol=1e-3, rtol=1e-3), (out, ref)
    print("KERNEL_OK")
</pallas_src>

<mosaic_0001>
module attributes {stable_mosaic.version = 11 : i64} {
  func.func @residual_degrade_kernel(%arg0: memref<216x48xf32, #tpu.memory_space<vmem>>, %arg1: memref<18x200xf32, #tpu.memory_space<vmem>>, %arg2: memref<48x96xf32, #tpu.memory_space<vmem>>, %arg3: memref<5x96x96xf32, #tpu.memory_space<vmem>>, %arg4: memref<5x96x96xf32, #tpu.memory_space<vmem>>, %arg5: memref<9x96x196xf32, #tpu.memory_space<any>>, %arg6: memref<8x96xf32, #tpu.memory_space<vmem>>, %arg7: memref<8x256xf32, #tpu.memory_space<vmem>>, %arg8: memref<2x1xf32, #tpu.memory_space<vmem>>, %arg9: memref<9x96x196xf32, #tpu.memory_space<vmem>>, %arg10: memref<!tpu.dma_semaphore, #tpu.memory_space<semaphore_mem>>) attributes {dimension_semantics = [], scalar_prefetch = 0 : i64, scratch_operands = 2 : i64, tpu.core_type = #tpu.core_type<tc>} {
    tpu.enqueue_dma source(%arg5 : memref<9x96x196xf32, #tpu.memory_space<any>>) target(%arg9 : memref<9x96x196xf32, #tpu.memory_space<vmem>>) target_semaphore(%arg10 : memref<!tpu.dma_semaphore, #tpu.memory_space<semaphore_mem>>)
    %c0 = arith.constant 0 : index
    %c0_0 = arith.constant 0 : index
    %0 = vector.load %arg6[%c0, %c0_0] : memref<8x96xf32, #tpu.memory_space<vmem>>, vector<8x96xf32>
    %1 = vector.extract_strided_slice %0 {offsets = [0, 0], sizes = [1, 96], strides = [1, 1]} : vector<8x96xf32> to vector<1x96xf32>
    %2 = vector.extract_strided_slice %0 {offsets = [1, 0], sizes = [1, 96], strides = [1, 1]} : vector<8x96xf32> to vector<1x96xf32>
    %3 = vector.extract_strided_slice %0 {offsets = [2, 0], sizes = [1, 96], strides = [1, 1]} : vector<8x96xf32> to vector<1x96xf32>
    %c0_1 = arith.constant 0 : index
    %c0_2 = arith.constant 0 : index
    %4 = vector.load %arg7[%c0_1, %c0_2] : memref<8x256xf32, #tpu.memory_space<vmem>>, vector<8x256xf32>
    %5 = vector.extract_strided_slice %4 {offsets = [0, 0], sizes = [1, 196], strides = [1, 1]} : vector<8x256xf32> to vector<1x196xf32>
    %6 = vector.extract_strided_slice %4 {offsets = [1, 0], sizes = [1, 196], strides = [1, 1]} : vector<8x256xf32> to vector<1x196xf32>
    %7 = vector.extract_strided_slice %4 {offsets = [2, 0], sizes = [1, 1], strides = [1, 1]} : vector<8x256xf32> to vector<1x1xf32>
    %c0_3 = arith.constant 0 : index
    %c0_4 = arith.constant 0 : index
    %8 = vector.load %arg0[%c0_3, %c0_4] : memref<216x48xf32, #tpu.memory_space<vmem>>, vector<216x48xf32>
    %c0_5 = arith.constant 0 : index
    %c0_6 = arith.constant 0 : index
    %9 = vector.load %arg2[%c0_5, %c0_6] : memref<48x96xf32, #tpu.memory_space<vmem>>, vector<48x96xf32>
    %cst = arith.constant dense<0.000000e+00> : vector<216x96xf32>
    %10 = tpu.matmul %8, %9, %cst {dimension_numbers = #tpu.dot_dimension_numbers<[1], [0], [0], [1], [0, 0, 1, 1], [], []>} : vector<216x48xf32>, vector<48x96xf32>, vector<216x96xf32> -> vector<216x96xf32>
    %11 = tpu.iota {dimensions = array<i32: 0>} : vector<216x96xi32>
    %c4_i32 = arith.constant 4 : i32
    %12 = vector.broadcast %c4_i32 : i32 to vector<216x96xi32>
    %13 = arith.cmpi sge, %11, %12 : vector<216x96xi32>
    %c103_i32 = arith.constant 103 : i32
    %14 = vector.broadcast %c103_i32 : i32 to vector<216x96xi32>
    %15 = arith.cmpi slt, %11, %14 : vector<216x96xi32>
    %16 = arith.andi %13, %15 : vector<216x96xi1>
    %c105_i32 = arith.constant 105 : i32
    %17 = vector.broadcast %c105_i32 : i32 to vector<216x96xi32>
    %18 = arith.cmpi sge, %11, %17 : vector<216x96xi32>
    %c204_i32 = arith.constant 204 : i32
    %19 = vector.broadcast %c204_i32 : i32 to vector<216x96xi32>
    %20 = arith.cmpi slt, %11, %19 : vector<216x96xi32>
    %21 = arith.andi %18, %20 : vector<216x96xi1>
    %22 = arith.ori %16, %21 : vector<216x96xi1>
    %23 = vector.broadcast %1 : vector<1x96xf32> to vector<216x96xf32>
    %24 = arith.addf %10, %23 : vector<216x96xf32>
    %cst_7 = arith.constant 0.000000e+00 : f32
    %25 = vector.broadcast %cst_7 : f32 to vector<216x96xf32>
    %26 = arith.maximumf %24, %25 : vector<216x96xf32>
    %cst_8 = arith.constant 0.000000e+00 : f32
    %27 = vector.broadcast %cst_8 : f32 to vector<216x96xf32>
    %28 = arith.select %22, %26, %27 : vector<216x96xi1>, vector<216x96xf32>
    %29 = vector.extract_strided_slice %28 {offsets = [0, 0], sizes = [208, 96], strides = [1, 1]} : vector<216x96xf32> to vector<208x96xf32>
    %c0_9 = arith.constant 0 : index
    %c0_10 = arith.constant 0 : index
    %c0_11 = arith.constant 0 : index
    %30 = vector.load %arg3[%c0_9, %c0_10, %c0_11] : memref<5x96x96xf32, #tpu.memory_space<vmem>>, vector<1x96x96xf32>
    %31 = vector.shape_cast %30 : vector<1x96x96xf32> to vector<96x96xf32>
    %cst_12 = arith.constant dense<0.000000e+00> : vector<208x96xf32>
    %32 = tpu.matmul %29, %31, %cst_12 {dimension_numbers = #tpu.dot_dimension_numbers<[1], [0], [0], [1], [0, 0, 1, 1], [], []>} : vector<208x96xf32>, vector<96x96xf32>, vector<208x96xf32> -> vector<208x96xf32>
    %c215_i32 = arith.constant 215 : i32
    %33 = tpu.dynamic_rotate %28 by %c215_i32 dim 0 : vector<216x96xf32>, i32 -> vector<216x96xf32>
    %34 = vector.extract_strided_slice %33 {offsets = [0, 0], sizes = [208, 96], strides = [1, 1]} : vector<216x96xf32> to vector<208x96xf32>
    %c1 = arith.constant 1 : index
    %c0_13 = arith.constant 0 : index
    %c0_14 = arith.constant 0 : index
    %35 = vector.load %arg3[%c1, %c0_13, %c0_14] : memref<5x96x96xf32, #tpu.memory_space<vmem>>, vector<1x96x96xf32>
    %36 = vector.shape_cast %35 : vector<1x96x96xf32> to vector<96x96xf32>
    %cst_15 = arith.constant dense<0.000000e+00> : vector<208x96xf32>
    %37 = tpu.matmul %34, %36, %cst_15 {dimension_numbers = #tpu.dot_dimension_numbers<[1], [0], [0], [1], [0, 0, 1, 1], [], []>} : vector<208x96xf32>, vector<96x96xf32>, vector<208x96xf32> -> vector<208x96xf32>
    %c214_i32 = arith.constant 214 : i32
    %38 = tpu.dynamic_rotate %28 by %c214_i32 dim 0 : vector<216x96xf32>, i32 -> vector<216x96xf32>
    %39 = vector.extract_strided_slice %38 {offsets = [0, 0], sizes = [208, 96], strides = [1, 1]} : vector<216x96xf32> to vector<208x96xf32>
    %c2 = arith.constant 2 : index
    %c0_16 = arith.constant 0 : index
    %c0_17 = arith.constant 0 : index
    %40 = vector.load %arg3[%c2, %c0_16, %c0_17] : memref<5x96x96xf32, #tpu.memory_space<vmem>>, vector<1x96x96xf32>
    %41 = vector.shape_cast %40 : vector<1x96x96xf32> to vector<96x96xf32>
    %cst_18 = arith.constant dense<0.000000e+00> : vector<208x96xf32>
    %42 = tpu.matmul %39, %41, %cst_18 {dimension_numbers = #tpu.dot_dimension_numbers<[1], [0], [0], [1], [0, 0, 1, 1], [], []>} : vector<208x96xf32>, vector<96x96xf32>, vector<208x96xf32> -> vector<208x96xf32>
    %c213_i32 = arith.constant 213 : i32
    %43 = tpu.dynamic_rotate %28 by %c213_i32 dim 0 : vector<216x96xf32>, i32 -> vector<216x96xf32>
    %44 = vector.extract_strided_slice %43 {offsets = [0, 0], sizes = [208, 96], strides = [1, 1]} : vector<216x96xf32> to vector<208x96xf32>
    %c3 = arith.constant 3 : index
    %c0_19 = arith.constant 0 : index
    %c0_20 = arith.constant 0 : index
    %45 = vector.load %arg3[%c3, %c0_19, %c0_20] : memref<5x96x96xf32, #tpu.memory_space<vmem>>, vector<1x96x96xf32>
    %46 = vector.shape_cast %45 : vector<1x96x96xf32> to vector<96x96xf32>
    %cst_21 = arith.constant dense<0.000000e+00> : vector<208x96xf32>
    %47 = tpu.matmul %44, %46, %cst_21 {dimension_numbers = #tpu.dot_dimension_numbers<[1], [0], [0], [1], [0, 0, 1, 1], [], []>} : vector<208x96xf32>, vector<96x96xf32>, vector<208x96xf32> -> vector<208x96xf32>
    %c212_i32 = arith.constant 212 : i32
    %48 = tpu.dynamic_rotate %28 by %c212_i32 dim 0 : vector<216x96xf32>, i32 -> vector<216x96xf32>
    %49 = vector.extract_strided_slice %48 {offsets = [0, 0], sizes = [208, 96], strides = [1, 1]} : vector<216x96xf32> to vector<208x96xf32>
    %c4 = arith.constant 4 : index
    %c0_22 = arith.constant 0 : index
    %c0_23 = arith.constant 0 : index
    %50 = vector.load %arg3[%c4, %c0_22, %c0_23] : memref<5x96x96xf32, #tpu.memory_space<vmem>>, vector<1x96x96xf32>
    %51 = vector.shape_cast %50 : vector<1x96x96xf32> to vector<96x96xf32>
    %cst_24 = arith.constant dense<0.000000e+00> : vector<208x96xf32>
    %52 = tpu.matmul %49, %51, %cst_24 {dimension_numbers = #tpu.dot_dimension_numbers<[1], [0], [0], [1], [0, 0, 1, 1], [], []>} : vector<208x96xf32>, vector<96x96xf32>, vector<208x96xf32> -> vector<208x96xf32>
    %53 = arith.addf %32, %37 : vector<208x96xf32>
    %54 = arith.addf %42, %47 : vector<208x96xf32>
    %55 = arith.addf %53, %54 : vector<208x96xf32>
    %56 = arith.addf %55, %52 : vector<208x96xf32>
    %57 = tpu.iota {dimensions = array<i32: 0>} : vector<208x96xi32>
    %c2_i32 = arith.constant 2 : i32
    %58 = vector.broadcast %c2_i32 : i32 to vector<208x96xi32>
    %59 = arith.cmpi sge, %57, %58 : vector<208x96xi32>
    %c101_i32 = arith.constant 101 : i32
    %60 = vector.broadcast %c101_i32 : i32 to vector<208x96xi32>
    %61 = arith.cmpi slt, %57, %60 : vector<208x96xi32>
    %62 = arith.andi %59, %61 : vector<208x96xi1>
    %c103_i32_25 = arith.constant 103 : i32
    %63 = vector.broadcast %c103_i32_25 : i32 to vector<208x96xi32>
    %64 = arith.cmpi sge, %57, %63 : vector<208x96xi32>
    %c202_i32 = arith.constant 202 : i32
    %65 = vector.broadcast %c202_i32 : i32 to vector<208x96xi32>
    %66 = arith.cmpi slt, %57, %65 : vector<208x96xi32>
    %67 = arith.andi %64, %66 : vector<208x96xi1>
    %68 = arith.ori %62, %67 : vector<208x96xi1>
    %69 = vector.broadcast %2 : vector<1x96xf32> to vector<208x96xf32>
    %70 = arith.addf %56, %69 : vector<208x96xf32>
    %cst_26 = arith.constant 0.000000e+00 : f32
    %71 = vector.broadcast %cst_26 : f32 to vector<208x96xf32>
    %72 = arith.maximumf %70, %71 : vector<208x96xf32>
    %cst_27 = arith.constant 0.000000e+00 : f32
    %73 = vector.broadcast %cst_27 : f32 to vector<208x96xf32>
    %74 = arith.select %68, %72, %73 : vector<208x96xi1>, vector<208x96xf32>
    %75 = vector.extract_strided_slice %74 {offsets = [0, 0], sizes = [200, 96], strides = [1, 1]} : vector<208x96xf32> to vector<200x96xf32>
    %c0_28 = arith.constant 0 : index
    %c0_29 = arith.constant 0 : index
    %c0_30 = arith.constant 0 : index
    %76 = vector.load %arg4[%c0_28, %c0_29, %c0_30] : memref<5x96x96xf32, #tpu.memory_space<vmem>>, vector<1x96x96xf32>
    %77 = vector.shape_cast %76 : vector<1x96x96xf32> to vector<96x96xf32>
    %cst_31 = arith.constant dense<0.000000e+00> : vector<200x96xf32>
    %78 = tpu.matmul %75, %77, %cst_31 {dimension_numbers = #tpu.dot_dimension_numbers<[1], [0], [0], [1], [0, 0, 1, 1], [], []>} : vector<200x96xf32>, vector<96x96xf32>, vector<200x96xf32> -> vector<200x96xf32>
    %c207_i32 = arith.constant 207 : i32
    %79 = tpu.dynamic_rotate %74 by %c207_i32 dim 0 : vector<208x96xf32>, i32 -> vector<208x96xf32>
    %80 = vector.extract_strided_slice %79 {offsets = [0, 0], sizes = [200, 96], strides = [1, 1]} : vector<208x96xf32> to vector<200x96xf32>
    %c1_32 = arith.constant 1 : index
    %c0_33 = arith.constant 0 : index
    %c0_34 = arith.constant 0 : index
    %81 = vector.load %arg4[%c1_32, %c0_33, %c0_34] : memref<5x96x96xf32, #tpu.memory_space<vmem>>, vector<1x96x96xf32>
    %82 = vector.shape_cast %81 : vector<1x96x96xf32> to vector<96x96xf32>
    %cst_35 = arith.constant dense<0.000000e+00> : vector<200x96xf32>
    %83 = tpu.matmul %80, %82, %cst_35 {dimension_numbers = #tpu.dot_dimension_numbers<[1], [0], [0], [1], [0, 0, 1, 1], [], []>} : vector<200x96xf32>, vector<96x96xf32>, vector<200x96xf32> -> vector<200x96xf32>
    %c206_i32 = arith.constant 206 : i32
    %84 = tpu.dynamic_rotate %74 by %c206_i32 dim 0 : vector<208x96xf32>, i32 -> vector<208x96xf32>
    %85 = vector.extract_strided_slice %84 {offsets = [0, 0], sizes = [200, 96], strides = [1, 1]} : vector<208x96xf32> to vector<200x96xf32>
    %c2_36 = arith.constant 2 : index
    %c0_37 = arith.constant 0 : index
    %c0_38 = arith.constant 0 : index
    %86 = vector.load %arg4[%c2_36, %c0_37, %c0_38] : memref<5x96x96xf32, #tpu.memory_space<vmem>>, vector<1x96x96xf32>
    %87 = vector.shape_cast %86 : vector<1x96x96xf32> to vector<96x96xf32>
    %cst_39 = arith.constant dense<0.000000e+00> : vector<200x96xf32>
    %88 = tpu.matmul %85, %87, %cst_39 {dimension_numbers = #tpu.dot_dimension_numbers<[1], [0], [0], [1], [0, 0, 1, 1], [], []>} : vector<200x96xf32>, vector<96x96xf32>, vector<200x96xf32> -> vector<200x96xf32>
    %c205_i32 = arith.constant 205 : i32
    %89 = tpu.dynamic_rotate %74 by %c205_i32 dim 0 : vector<208x96xf32>, i32 -> vector<208x96xf32>
    %90 = vector.extract_strided_slice %89 {offsets = [0, 0], sizes = [200, 96], strides = [1, 1]} : vector<208x96xf32> to vector<200x96xf32>
    %c3_40 = arith.constant 3 : index
    %c0_41 = arith.constant 0 : index
    %c0_42 = arith.constant 0 : index
    %91 = vector.load %arg4[%c3_40, %c0_41, %c0_42] : memref<5x96x96xf32, #tpu.memory_space<vmem>>, vector<1x96x96xf32>
    %92 = vector.shape_cast %91 : vector<1x96x96xf32> to vector<96x96xf32>
    %cst_43 = arith.constant dense<0.000000e+00> : vector<200x96xf32>
    %93 = tpu.matmul %90, %92, %cst_43 {dimension_numbers = #tpu.dot_dimension_numbers<[1], [0], [0], [1], [0, 0, 1, 1], [], []>} : vector<200x96xf32>, vector<96x96xf32>, vector<200x96xf32> -> vector<200x96xf32>
    %c204_i32_44 = arith.constant 204 : i32
    %94 = tpu.dynamic_rotate %74 by %c204_i32_44 dim 0 : vector<208x96xf32>, i32 -> vector<208x96xf32>
    %95 = vector.extract_strided_slice %94 {offsets = [0, 0], sizes = [200, 96], strides = [1, 1]} : vector<208x96xf32> to vector<200x96xf32>
    %c4_45 = arith.constant 4 : index
    %c0_46 = arith.constant 0 : index
    %c0_47 = arith.constant 0 : index
    %96 = vector.load %arg4[%c4_45, %c0_46, %c0_47] : memref<5x96x96xf32, #tpu.memory_space<vmem>>, vector<1x96x96xf32>
    %97 = vector.shape_cast %96 : vector<1x96x96xf32> to vector<96x96xf32>
    %cst_48 = arith.constant dense<0.000000e+00> : vector<200x96xf32>
    %98 = tpu.matmul %95, %97, %cst_48 {dimension_numbers = #tpu.dot_dimension_numbers<[1], [0], [0], [1], [0, 0, 1, 1], [], []>} : vector<200x96xf32>, vector<96x96xf32>, vector<200x96xf32> -> vector<200x96xf32>
    %99 = arith.addf %78, %83 : vector<200x96xf32>
    %100 = arith.addf %88, %93 : vector<200x96xf32>
    %101 = arith.addf %99, %100 : vector<200x96xf32>
    %102 = arith.addf %101, %98 : vector<200x96xf32>
    %103 = vector.broadcast %3 : vector<1x96xf32> to vector<200x96xf32>
    %104 = arith.addf %102, %103 : vector<200x96xf32>
    %c212_i32_49 = arith.constant 212 : i32
    %105 = tpu.dynamic_rotate %28 by %c212_i32_49 dim 0 : vector<216x96xf32>, i32 -> vector<216x96xf32>
    %106 = vector.extract_strided_slice %105 {offsets = [0, 0], sizes = [200, 96], strides = [1, 1]} : vector<216x96xf32> to vector<200x96xf32>
    %107 = arith.addf %106, %104 : vector<200x96xf32>
    %cst_50 = arith.constant 0.000000e+00 : f32
    %108 = vector.broadcast %cst_50 : f32 to vector<200x96xf32>
    %109 = arith.maximumf %107, %108 : vector<200x96xf32>
    %c0_51 = arith.constant 0 : index
    %c0_52 = arith.constant 0 : index
    %110 = vector.load %arg1[%c0_51, %c0_52] : memref<18x200xf32, #tpu.memory_space<vmem>>, vector<18x200xf32>
    %cst_53 = arith.constant dense<0.000000e+00> : vector<18x96xf32>
    %111 = tpu.matmul %110, %109, %cst_53 {dimension_numbers = #tpu.dot_dimension_numbers<[1], [0], [0], [1], [0, 0, 1, 1], [], []>} : vector<18x200xf32>, vector<200x96xf32>, vector<18x96xf32> -> vector<18x96xf32>
    tpu.wait_dma2 semaphore(%arg10 : memref<!tpu.dma_semaphore, #tpu.memory_space<semaphore_mem>>) src(%arg5 : memref<9x96x196xf32, #tpu.memory_space<any>>) dst(%arg9 : memref<9x96x196xf32, #tpu.memory_space<vmem>>)
    %112 = vector.extract_strided_slice %111 {offsets = [0, 0], sizes = [2, 96], strides = [1, 1]} : vector<18x96xf32> to vector<2x96xf32>
    %c0_54 = arith.constant 0 : index
    %c0_55 = arith.constant 0 : index
    %c0_56 = arith.constant 0 : index
    %113 = vector.load %arg9[%c0_54, %c0_55, %c0_56] : memref<9x96x196xf32, #tpu.memory_space<vmem>>, vector<1x96x196xf32>
    %114 = vector.shape_cast %113 : vector<1x96x196xf32> to vector<96x196xf32>
    %cst_57 = arith.constant dense<0.000000e+00> : vector<2x196xf32>
    %115 = tpu.matmul %112, %114, %cst_57 {dimension_numbers = #tpu.dot_dimension_numbers<[1], [0], [0], [1], [0, 0, 1, 1], [], []>} : vector<2x96xf32>, vector<96x196xf32>, vector<2x196xf32> -> vector<2x196xf32>
    %116 = vector.extract_strided_slice %111 {offsets = [2, 0], sizes = [2, 96], strides = [1, 1]} : vector<18x96xf32> to vector<2x96xf32>
    %c1_58 = arith.constant 1 : index
    %c0_59 = arith.constant 0 : index
    %c0_60 = arith.constant 0 : index
    %117 = vector.load %arg9[%c1_58, %c0_59, %c0_60] : memref<9x96x196xf32, #tpu.memory_space<vmem>>, vector<1x96x196xf32>
    %118 = vector.shape_cast %117 : vector<1x96x196xf32> to vector<96x196xf32>
    %cst_61 = arith.constant dense<0.000000e+00> : vector<2x196xf32>
    %119 = tpu.matmul %116, %118, %cst_61 {dimension_numbers = #tpu.dot_dimension_numbers<[1], [0], [0], [1], [0, 0, 1, 1], [], []>} : vector<2x96xf32>, vector<96x196xf32>, vector<2x196xf32> -> vector<2x196xf32>
    %120 = vector.extract_strided_slice %111 {offsets = [4, 0], sizes = [2, 96], strides = [1, 1]} : vector<18x96xf32> to vector<2x96xf32>
    %c2_62 = arith.constant 2 : index
    %c0_63 = arith.constant 0 : index
    %c0_64 = arith.constant 0 : index
    %121 = vector.load %arg9[%c2_62, %c0_63, %c0_64] : memref<9x96x196xf32, #tpu.memory_space<vmem>>, vector<1x96x196xf32>
    %122 = vector.shape_cast %121 : vector<1x96x196xf32> to vector<96x196xf32>
    %cst_65 = arith.constant dense<0.000000e+00> : vector<2x196xf32>
    %123 = tpu.matmul %120, %122, %cst_65 {dimension_numbers = #tpu.dot_dimension_numbers<[1], [0], [0], [1], [0, 0, 1, 1], [], []>} : vector<2x96xf32>, vector<96x196xf32>, vector<2x196xf32> -> vector<2x196xf32>
    %124 = vector.extract_strided_slice %111 {offsets = [6, 0], sizes = [2, 96], strides = [1, 1]} : vector<18x96xf32> to vector<2x96xf32>
    %c3_66 = arith.constant 3 : index
    %c0_67 = arith.constant 0 : index
    %c0_68 = arith.constant 0 : index
    %125 = vector.load %arg9[%c3_66, %c0_67, %c0_68] : memref<9x96x196xf32, #tpu.memory_space<vmem>>, vector<1x96x196xf32>
    %126 = vector.shape_cast %125 : vector<1x96x196xf32> to vector<96x196xf32>
    %cst_69 = arith.constant dense<0.000000e+00> : vector<2x196xf32>
    %127 = tpu.matmul %124, %126, %cst_69 {dimension_numbers = #tpu.dot_dimension_numbers<[1], [0], [0], [1], [0, 0, 1, 1], [], []>} : vector<2x96xf32>, vector<96x196xf32>, vector<2x196xf32> -> vector<2x196xf32>
    %128 = vector.extract_strided_slice %111 {offsets = [8, 0], sizes = [2, 96], strides = [1, 1]} : vector<18x96xf32> to vector<2x96xf32>
    %c4_70 = arith.constant 4 : index
    %c0_71 = arith.constant 0 : index
    %c0_72 = arith.constant 0 : index
    %129 = vector.load %arg9[%c4_70, %c0_71, %c0_72] : memref<9x96x196xf32, #tpu.memory_space<vmem>>, vector<1x96x196xf32>
    %130 = vector.shape_cast %129 : vector<1x96x196xf32> to vector<96x196xf32>
    %cst_73 = arith.constant dense<0.000000e+00> : vector<2x196xf32>
    %131 = tpu.matmul %128, %130, %cst_73 {dimension_numbers = #tpu.dot_dimension_numbers<[1], [0], [0], [1], [0, 0, 1, 1], [], []>} : vector<2x96xf32>, vector<96x196xf32>, vector<2x196xf32> -> vector<2x196xf32>
    %132 = vector.extract_strided_slice %111 {offsets = [10, 0], sizes = [2, 96], strides = [1, 1]} : vector<18x96xf32> to vector<2x96xf32>
    %c5 = arith.constant 5 : index
    %c0_74 = arith.constant 0 : index
    %c0_75 = arith.constant 0 : index
    %133 = vector.load %arg9[%c5, %c0_74, %c0_75] : memref<9x96x196xf32, #tpu.memory_space<vmem>>, vector<1x96x196xf32>
    %134 = vector.shape_cast %133 : vector<1x96x196xf32> to vector<96x196xf32>
    %cst_76 = arith.constant dense<0.000000e+00> : vector<2x196xf32>
    %135 = tpu.matmul %132, %134, %cst_76 {dimension_numbers = #tpu.dot_dimension_numbers<[1], [0], [0], [1], [0, 0, 1, 1], [], []>} : vector<2x96xf32>, vector<96x196xf32>, vector<2x196xf32> -> vector<2x196xf32>
    %136 = vector.extract_strided_slice %111 {offsets = [12, 0], sizes = [2, 96], strides = [1, 1]} : vector<18x96xf32> to vector<2x96xf32>
    %c6 = arith.constant 6 : index
    %c0_77 = arith.constant 0 : index
    %c0_78 = arith.constant 0 : index
    %137 = vector.load %arg9[%c6, %c0_77, %c0_78] : memref<9x96x196xf32, #tpu.memory_space<vmem>>, vector<1x96x196xf32>
    %138 = vector.shape_cast %137 : vector<1x96x196xf32> to vector<96x196xf32>
    %cst_79 = arith.constant dense<0.000000e+00> : vector<2x196xf32>
    %139 = tpu.matmul %136, %138, %cst_79 {dimension_numbers = #tpu.dot_dimension_numbers<[1], [0], [0], [1], [0, 0, 1, 1], [], []>} : vector<2x96xf32>, vector<96x196xf32>, vector<2x196xf32> -> vector<2x196xf32>
    %140 = vector.extract_strided_slice %111 {offsets = [14, 0], sizes = [2, 96], strides = [1, 1]} : vector<18x96xf32> to vector<2x96xf32>
    %c7 = arith.constant 7 : index
    %c0_80 = arith.constant 0 : index
    %c0_81 = arith.constant 0 : index
    %141 = vector.load %arg9[%c7, %c0_80, %c0_81] : memref<9x96x196xf32, #tpu.memory_space<vmem>>, vector<1x96x196xf32>
    %142 = vector.shape_cast %141 : vector<1x96x196xf32> to vector<96x196xf32>
    %cst_82 = arith.constant dense<0.000000e+00> : vector<2x196xf32>
    %143 = tpu.matmul %140, %142, %cst_82 {dimension_numbers = #tpu.dot_dimension_numbers<[1], [0], [0], [1], [0, 0, 1, 1], [], []>} : vector<2x96xf32>, vector<96x196xf32>, vector<2x196xf32> -> vector<2x196xf32>
    %144 = vector.extract_strided_slice %111 {offsets = [16, 0], sizes = [2, 96], strides = [1, 1]} : vector<18x96xf32> to vector<2x96xf32>
    %c8 = arith.constant 8 : index
    %c0_83 = arith.constant 0 : index
    %c0_84 = arith.constant 0 : index
    %145 = vector.load %arg9[%c8, %c0_83, %c0_84] : memref<9x96x196xf32, #tpu.memory_space<vmem>>, vector<1x96x196xf32>
    %146 = vector.shape_cast %145 : vector<1x96x196xf32> to vector<96x196xf32>
    %cst_85 = arith.constant dense<0.000000e+00> : vector<2x196xf32>
    %147 = tpu.matmul %144, %146, %cst_85 {dimension_numbers = #tpu.dot_dimension_numbers<[1], [0], [0], [1], [0, 0, 1, 1], [], []>} : vector<2x96xf32>, vector<96x196xf32>, vector<2x196xf32> -> vector<2x196xf32>
    %148 = arith.addf %115, %119 : vector<2x196xf32>
    %149 = arith.addf %123, %127 : vector<2x196xf32>
    %150 = arith.addf %148, %149 : vector<2x196xf32>
    %151 = arith.addf %131, %135 : vector<2x196xf32>
    %152 = arith.addf %139, %143 : vector<2x196xf32>
    %153 = arith.addf %151, %152 : vector<2x196xf32>
    %154 = arith.addf %150, %153 : vector<2x196xf32>
    %155 = arith.addf %154, %147 : vector<2x196xf32>
    %156 = vector.broadcast %5 : vector<1x196xf32> to vector<2x196xf32>
    %157 = arith.addf %155, %156 : vector<2x196xf32>
    %cst_86 = arith.constant 0.000000e+00 : f32
    %158 = vector.broadcast %cst_86 : f32 to vector<2x196xf32>
    %159 = arith.maximumf %157, %158 : vector<2x196xf32>
    %160 = vector.broadcast %6 : vector<1x196xf32> to vector<2x196xf32>
    %161 = arith.mulf %159, %160 : vector<2x196xf32>
    %cst_87 = arith.constant dense<0.000000e+00> : vector<2xf32>
    %162 = vector.multi_reduction <add>, %161, %cst_87 [1] : vector<2x196xf32> to vector<2xf32>
    %163 = vector.shape_cast %162 : vector<2xf32> to vector<2x1xf32>
    %164 = vector.broadcast %7 : vector<1x1xf32> to vector<2x1xf32>
    %165 = arith.addf %163, %164 : vector<2x1xf32>
    %c0_88 = arith.constant 0 : index
    %c0_89 = arith.constant 0 : index
    %166 = vector.load %arg8[%c0_88, %c0_89] : memref<2x1xf32, #tpu.memory_space<vmem>>, vector<2x1xf32>
    tpu.vector_store %arg8[%c0_88, %c0_89], %165 {strides = array<i32>} : memref<2x1xf32, #tpu.memory_space<vmem>>, vector<2x1xf32>,
    return
  }
}

</mosaic_0001>

<llo_original>
// kernel: residual_degrade_forward.1
$region0: #{residual_degrade_forward.1}
  #allocation0 [shape = 'u32[]', space=smem, size = 0x4, offset = 0x4, fixed_abs, tag = 'smem constant byte address 0x4 - core index']
  #allocation1 [shape = 'u32[144,128]{1,0:T(1,128)}', space=vmem, size = 0x12000, scoped, tag = 'internal scratch']
  #allocation2 [shape = 'f32[9,96,196]{2,1,0:T(8,128)}', space=vmem, size = 0xd8000, scoped, tag = 'scratch operand']
  #allocation3 [shape = 's32[1]{0}', space=sflag, size = 0x4, scoped, tag = 'scratch operand']
  #allocation4 [shape = 's32[]', space=sflag, size = 0x4, offset = 0, fixed_abs, tag = 'sflag constant byte address 0x0 - dummy sync flag']
  #allocation5 [shape = 's32[]', space=sflag, size = 0x4, offset = 0, fixed_abs, tag = 'sflag constant byte address 0x0 - dummy sync flag']
  #allocation6 [shape = 'u32[]', space=smem, size = 0x4, offset = 0x44, fixed_abs, tag = 'smem constant byte address 0x44 - assertion arg 0']
  #allocation7 [shape = 'u32[]', space=smem, size = 0x4, offset = 0x48, fixed_abs, tag = 'smem constant byte address 0x48 - assertion arg 1']
  %s0 = inlined_call_operand.vmem [shape: f32[216,48], index: 0, kind: input, shape index: {}]
  %s1 = inlined_call_operand.vmem [shape: f32[18,200], index: 1, kind: input, shape index: {}]
  %s2 = inlined_call_operand.vmem [shape: f32[48,96], index: 2, kind: input, shape index: {}]
  %s3 = inlined_call_operand.vmem [shape: f32[5,96,96], index: 3, kind: input, shape index: {}]
  %s4 = inlined_call_operand.vmem [shape: f32[5,96,96], index: 4, kind: input, shape index: {}]
  %s5 = inlined_call_operand.hbm [shape: f32[9,96,196], index: 5, kind: input, shape index: {}]
  %s6 = inlined_call_operand.vmem [shape: f32[8,96], index: 6, kind: input, shape index: {}]
  %s7 = inlined_call_operand.vmem [shape: f32[8,256], index: 7, kind: input, shape index: {}]
  %s8 = inlined_call_operand.vmem [shape: f32[2,1], index: 8, kind: output, shape index: {}]
  %s9 = sld [smem:[#allocation0]]
  $region42: #{residual_degrade_forward.1} parent=0
    _
  %s11 = ssub.s32 1, %s9
  %s12 = scalar_select 0, %s11, %s9
  // Predicated region
  $region2: #{residual_degrade_forward.1} parent=0 // pred_check
    _
  $region3: #{residual_degrade_forward.1} parent=0 // pred_check_branch
    %14 = sbr.rel (0) target = $region5
  $region4: #{residual_degrade_forward.1} parent=0 // pred_region
    _
  $region5: #{residual_degrade_forward.1} parent=0 // pred_fallthru
    _
  // Predicated region
  $region6: #{residual_degrade_forward.1} parent=0 // pred_check
    _
  $region7: #{residual_degrade_forward.1} parent=0 // pred_check_branch
    %16 = sbr.rel (0) target = $region9
  $region8: #{residual_degrade_forward.1} parent=0 // pred_region
    _
  $region9: #{residual_degrade_forward.1} parent=0 // pred_fallthru
    _
  // Predicated region
  $region10: #{residual_degrade_forward.1} parent=0 // pred_check
    _
  $region11: #{residual_degrade_forward.1} parent=0 // pred_check_branch
    %18 = sbr.rel (0) target = $region13
  $region12: #{residual_degrade_forward.1} parent=0 // pred_region
    _
  $region13: #{residual_degrade_forward.1} parent=0 // pred_fallthru
    _
  // Predicated region
  $region14: #{residual_degrade_forward.1} parent=0 // pred_check
    _
  $region15: #{residual_degrade_forward.1} parent=0 // pred_check_branch
    %20 = sbr.rel (0) target = $region17
  $region16: #{residual_degrade_forward.1} parent=0 // pred_region
    _
  $region17: #{residual_degrade_forward.1} parent=0 // pred_fallthru
    _
  // Predicated region
  $region18: #{residual_degrade_forward.1} parent=0 // pred_check
    _
  $region19: #{residual_degrade_forward.1} parent=0 // pred_check_branch
    %22 = sbr.rel (0) target = $region21
  $region20: #{residual_degrade_forward.1} parent=0 // pred_region
    _
  $region21: #{residual_degrade_forward.1} parent=0 // pred_fallthru
    _
  // Predicated region
  $region22: #{residual_degrade_forward.1} parent=0 // pred_check
    _
  $region23: #{residual_degrade_forward.1} parent=0 // pred_check_branch
    %24 = sbr.rel (0) target = $region25
  $region24: #{residual_degrade_forward.1} parent=0 // pred_region
    _
  $region25: #{residual_degrade_forward.1} parent=0 // pred_fallthru
    _
  // Predicated region
  $region26: #{residual_degrade_forward.1} parent=0 // pred_check
    _
  $region27: #{residual_degrade_forward.1} parent=0 // pred_check_branch
    %26 = sbr.rel (0) target = $region29
  $region28: #{residual_degrade_forward.1} parent=0 // pred_region
    _
  $region29: #{residual_degrade_forward.1} parent=0 // pred_fallthru
    _
  // Predicated region
  $region30: #{residual_degrade_forward.1} parent=0 // pred_check
    _
  $region31: #{residual_degrade_forward.1} parent=0 // pred_check_branch
    %28 = sbr.rel target = $region33
  $region32: #{residual_degrade_forward.1} parent=0 // pred_region
    %29 = sst [smem:[#allocation6]] [#allocation5]
    %30 = sst [smem:[#allocation7]] [#allocation4]
  $region33: #{residual_degrade_forward.1} parent=0 // pred_fallthru
    _
  %32 = shalt.err (0)
  %s34 = sshll.u32 [#allocation2], 4
  %s35 = int_to_ptr.vmem [resolvable:$true] %s34
  %37 = dma.hbm_to_vmem [thread:$0]  %s5, 27648, %s35, [#allocation3]
  %v38 = vld [vmem:[%s6] sm:$0xff]
  %v39 = vld [vmem:[%s7] sm:$0xff]
  %v40 = vld [vmem:[%s7 + $0x8] sm:$0xff]
  %v41 = vld [vmem:[%s0] sm:$0xff]
  %v42 = vld [vmem:[%s0 + $0x8] sm:$0xff]
  %v43 = vld [vmem:[%s0 + $0x10] sm:$0xff]
  %v44 = vld [vmem:[%s0 + $0x18] sm:$0xff]
  %v45 = vld [vmem:[%s0 + $0x20] sm:$0xff]
  %v46 = vld [vmem:[%s0 + $0x28] sm:$0xff]
  %v47 = vld [vmem:[%s0 + $0x30] sm:$0xff]
  %v48 = vld [vmem:[%s0 + $0x38] sm:$0xff]
  %v49 = vld [vmem:[%s0 + $0x40] sm:$0xff]
  %v50 = vld [vmem:[%s0 + $0x48] sm:$0xff]
  %v51 = vld [vmem:[%s0 + $0x50] sm:$0xff]
  %v52 = vld [vmem:[%s0 + $0x58] sm:$0xff]
  %v53 = vld [vmem:[%s0 + $0x60] sm:$0xff]
  %v54 = vld [vmem:[%s0 + $0x68] sm:$0xff]
  %v55 = vld [vmem:[%s0 + $0x70] sm:$0xff]
  %v56 = vld [vmem:[%s0 + $0x78] sm:$0xff]
  %v57 = vld [vmem:[%s0 + $0x80] sm:$0xff]
  %v58 = vld [vmem:[%s0 + $0x88] sm:$0xff]
  %v59 = vld [vmem:[%s0 + $0x90] sm:$0xff]
  %v60 = vld [vmem:[%s0 + $0x98] sm:$0xff]
  %v61 = vld [vmem:[%s0 + $0xa0] sm:$0xff]
  %v62 = vld [vmem:[%s0 + $0xa8] sm:$0xff]
  %v63 = vld [vmem:[%s0 + $0xb0] sm:$0xff]
  %v64 = vld [vmem:[%s0 + $0xb8] sm:$0xff]
  %v65 = vld [vmem:[%s0 + $0xc0] sm:$0xff]
  %v66 = vld [vmem:[%s0 + $0xc8] sm:$0xff]
  %v67 = vld [vmem:[%s0 + $0xd0] sm:$0xff]
  %v68 = vld [vmem:[%s2] sm:$0xff]
  %v69 = vld [vmem:[%s2 + $0x8] sm:$0xff]
  %v70 = vld [vmem:[%s2 + $0x10] sm:$0xff]
  %v71 = vld [vmem:[%s2 + $0x18] sm:$0xff]
  %v72 = vld [vmem:[%s2 + $0x20] sm:$0xff]
  %v73 = vld [vmem:[%s2 + $0x28] sm:$0xff]
  %v74 = vlaneseq
  %v75 = vshrl.u32 %v74, 7
  %v76 = vadd.s32 %v75, 8
  %v77 = vadd.s32 %v75, 16
  %v78 = vadd.s32 %v75, 24
  %v79 = vadd.s32 %v75, 32
  %v80 = vadd.s32 %v75, 40
  %v81 = vadd.s32 %v75, 48
  %v82 = vadd.s32 %v75, 56
  %v83 = vadd.s32 %v75, 64
  %v84 = vadd.s32 %v75, 72
  %v85 = vadd.s32 %v75, 80
  %v86 = vadd.s32 %v75, 88
  %v87 = vadd.s32 %v75, 96
  %v88 = vadd.s32 %v75, 104
  %v89 = vadd.s32 %v75, 112
  %v90 = vadd.s32 %v75, 120
  %v91 = vadd.s32 %v75, 128
  %v92 = vadd.s32 %v75, 136
  %v93 = vadd.s32 %v75, 144
  %v94 = vadd.s32 %v75, 152
  %v95 = vadd.s32 %v75, 160
  %v96 = vadd.s32 %v75, 168
  %v97 = vadd.s32 %v75, 176
  %v98 = vadd.s32 %v75, 184
  %v99 = vadd.s32 %v75, 192
  %v100 = vadd.s32 %v75, 200
  %v101 = vadd.s32 %v75, 208
  %vm102 = vcmp.ge.s32.totalorder %v75, 4
  %vm103 = vcmp.ge.s32.totalorder %v76, 4
  %vm104 = vcmp.ge.s32.totalorder %v77, 4
  %vm105 = vcmp.ge.s32.totalorder %v78, 4
  %vm106 = vcmp.ge.s32.totalorder %v79, 4
  %vm107 = vcmp.ge.s32.totalorder %v80, 4
  %vm108 = vcmp.ge.s32.totalorder %v81, 4
  %vm109 = vcmp.ge.s32.totalorder %v82, 4
  %vm110 = vcmp.ge.s32.totalorder %v83, 4
  %vm111 = vcmp.ge.s32.totalorder %v84, 4
  %vm112 = vcmp.ge.s32.totalorder %v85, 4
  %vm113 = vcmp.ge.s32.totalorder %v86, 4
  %vm114 = vcmp.ge.s32.totalorder %v87, 4
  %vm115 = vcmp.ge.s32.totalorder %v88, 4
  %vm116 = vcmp.ge.s32.totalorder %v89, 4
  %vm117 = vcmp.ge.s32.totalorder %v90, 4
  %vm118 = vcmp.ge.s32.totalorder %v91, 4
  %vm119 = vcmp.ge.s32.totalorder %v92, 4
  %vm120 = vcmp.ge.s32.totalorder %v93, 4
  %vm121 = vcmp.ge.s32.totalorder %v94, 4
  %vm122 = vcmp.ge.s32.totalorder %v95, 4
  %vm123 = vcmp.ge.s32.totalorder %v96, 4
  %vm124 = vcmp.ge.s32.totalorder %v97, 4
  %vm125 = vcmp.ge.s32.totalorder %v98, 4
  %vm126 = vcmp.ge.s32.totalorder %v99, 4
  %vm127 = vcmp.ge.s32.totalorder %v100, 4
  %vm128 = vcmp.ge.s32.totalorder %v101, 4
  %vm129 = vcmp.lt.s32.totalorder %v75, 103
  %vm130 = vcmp.lt.s32.totalorder %v76, 103
  %vm131 = vcmp.lt.s32.totalorder %v77, 103
  %vm132 = vcmp.lt.s32.totalorder %v78, 103
  %vm133 = vcmp.lt.s32.totalorder %v79, 103
  %vm134 = vcmp.lt.s32.totalorder %v80, 103
  %vm135 = vcmp.lt.s32.totalorder %v81, 103
  %vm136 = vcmp.lt.s32.totalorder %v82, 103
  %vm137 = vcmp.lt.s32.totalorder %v83, 103
  %vm138 = vcmp.lt.s32.totalorder %v84, 103
  %vm139 = vcmp.lt.s32.totalorder %v85, 103
  %vm140 = vcmp.lt.s32.totalorder %v86, 103
  %vm141 = vcmp.lt.s32.totalorder %v87, 103
  %vm142 = vcmp.lt.s32.totalorder %v88, 103
  %vm143 = vcmp.lt.s32.totalorder %v89, 103
  %vm144 = vcmp.lt.s32.totalorder %v90, 103
  %vm145 = vcmp.lt.s32.totalorder %v91, 103
  %vm146 = vcmp.lt.s32.totalorder %v92, 103
  %vm147 = vcmp.lt.s32.totalorder %v93, 103
  %vm148 = vcmp.lt.s32.totalorder %v94, 103
  %vm149 = vcmp.lt.s32.totalorder %v95, 103
  %vm150 = vcmp.lt.s32.totalorder %v96, 103
  %vm151 = vcmp.lt.s32.totalorder %v97, 103
  %vm152 = vcmp.lt.s32.totalorder %v98, 103
  %vm153 = vcmp.lt.s32.totalorder %v99, 103
  %vm154 = vcmp.lt.s32.totalorder %v100, 103
  %vm155 = vcmp.lt.s32.totalorder %v101, 103
  %vm156 = vmand %vm102, %vm129
  %vm157 = vmand %vm103, %vm130
  %vm158 = vmand %vm104, %vm131
  %vm159 = vmand %vm105, %vm132
  %vm160 = vmand %vm106, %vm133
  %vm161 = vmand %vm107, %vm134
  %vm162 = vmand %vm108, %vm135
  %vm163 = vmand %vm109, %vm136
  %vm164 = vmand %vm110, %vm137
  %vm165 = vmand %vm111, %vm138
  %vm166 = vmand %vm112, %vm139
  %vm167 = vmand %vm113, %vm140
  %vm168 = vmand %vm114, %vm141
  %vm169 = vmand %vm115, %vm142
  %vm170 = vmand %vm116, %vm143
  %vm171 = vmand %vm117, %vm144
  %vm172 = vmand %vm118, %vm145
  %vm173 = vmand %vm119, %vm146
  %vm174 = vmand %vm120, %vm147
  %vm175 = vmand %vm121, %vm148
  %vm176 = vmand %vm122, %vm149
  %vm177 = vmand %vm123, %vm150
  %vm178 = vmand %vm124, %vm151
  %vm179 = vmand %vm125, %vm152
  %vm180 = vmand %vm126, %vm153
  %vm181 = vmand %vm127, %vm154
  %vm182 = vmand %vm128, %vm155
  %vm183 = vcmp.ge.s32.totalorder %v75, 105
  %vm184 = vcmp.ge.s32.totalorder %v76, 105
  %vm185 = vcmp.ge.s32.totalorder %v77, 105
  %vm186 = vcmp.ge.s32.totalorder %v78, 105
  %vm187 = vcmp.ge.s32.totalorder %v79, 105
  %vm188 = vcmp.ge.s32.totalorder %v80, 105
  %vm189 = vcmp.ge.s32.totalorder %v81, 105
  %vm190 = vcmp.ge.s32.totalorder %v82, 105
  %vm191 = vcmp.ge.s32.totalorder %v83, 105
  %vm192 = vcmp.ge.s32.totalorder %v84, 105
  %vm193 = vcmp.ge.s32.totalorder %v85, 105
  %vm194 = vcmp.ge.s32.totalorder %v86, 105
  %vm195 = vcmp.ge.s32.totalorder %v87, 105
  %vm196 = vcmp.ge.s32.totalorder %v88, 105
  %vm197 = vcmp.ge.s32.totalorder %v89, 105
  %vm198 = vcmp.ge.s32.totalorder %v90, 105
  %vm199 = vcmp.ge.s32.totalorder %v91, 105
  %vm200 = vcmp.ge.s32.totalorder %v92, 105
  %vm201 = vcmp.ge.s32.totalorder %v93, 105
  %vm202 = vcmp.ge.s32.totalorder %v94, 105
  %vm203 = vcmp.ge.s32.totalorder %v95, 105
  %vm204 = vcmp.ge.s32.totalorder %v96, 105
  %vm205 = vcmp.ge.s32.totalorder %v97, 105
  %vm206 = vcmp.ge.s32.totalorder %v98, 105
  %vm207 = vcmp.ge.s32.totalorder %v99, 105
  %vm208 = vcmp.ge.s32.totalorder %v100, 105
  %vm209 = vcmp.ge.s32.totalorder %v101, 105
  %vm210 = vcmp.lt.s32.totalorder %v75, 204
  %vm211 = vcmp.lt.s32.totalorder %v76, 204
  %vm212 = vcmp.lt.s32.totalorder %v77, 204
  %vm213 = vcmp.lt.s32.totalorder %v78, 204
  %vm214 = vcmp.lt.s32.totalorder %v79, 204
  %vm215 = vcmp.lt.s32.totalorder %v80, 204
  %vm216 = vcmp.lt.s32.totalorder %v81, 204
  %vm217 = vcmp.lt.s32.totalorder %v82, 204
  %vm218 = vcmp.lt.s32.totalorder %v83, 204
  %vm219 = vcmp.lt.s32.totalorder %v84, 204
  %vm220 = vcmp.lt.s32.totalorder %v85, 204
  %vm221 = vcmp.lt.s32.totalorder %v86, 204
  %vm222 = vcmp.lt.s32.totalorder %v87, 204
  %vm223 = vcmp.lt.s32.totalorder %v88, 204
  %vm224 = vcmp.lt.s32.totalorder %v89, 204
  %vm225 = vcmp.lt.s32.totalorder %v90, 204
  %vm226 = vcmp.lt.s32.totalorder %v91, 204
  %vm227 = vcmp.lt.s32.totalorder %v92, 204
  %vm228 = vcmp.lt.s32.totalorder %v93, 204
  %vm229 = vcmp.lt.s32.totalorder %v94, 204
  %vm230 = vcmp.lt.s32.totalorder %v95, 204
  %vm231 = vcmp.lt.s32.totalorder %v96, 204
  %vm232 = vcmp.lt.s32.totalorder %v97, 204
  %vm233 = vcmp.lt.s32.totalorder %v98, 204
  %vm234 = vcmp.lt.s32.totalorder %v99, 204
  %vm235 = vcmp.lt.s32.totalorder %v100, 204
  %vm236 = vcmp.lt.s32.totalorder %v101, 204
  %vm237 = vmand %vm183, %vm210
  %vm238 = vmand %vm184, %vm211
  %vm239 = vmand %vm185, %vm212
  %vm240 = vmand %vm186, %vm213
  %vm241 = vmand %vm187, %vm214
  %vm242 = vmand %vm188, %vm215
  %vm243 = vmand %vm189, %vm216
  %vm244 = vmand %vm190, %vm217
  %vm245 = vmand %vm191, %vm218
  %vm246 = vmand %vm192, %vm219
  %vm247 = vmand %vm193, %vm220
  %vm248 = vmand %vm194, %vm221
  %vm249 = vmand %vm195, %vm222
  %vm250 = vmand %vm196, %vm223
  %vm251 = vmand %vm197, %vm224
  %vm252 = vmand %vm198, %vm225
  %vm253 = vmand %vm199, %vm226
  %vm254 = vmand %vm200, %vm227
  %vm255 = vmand %vm201, %vm228
  %vm256 = vmand %vm202, %vm229
  %vm257 = vmand %vm203, %vm230
  %vm258 = vmand %vm204, %vm231
  %vm259 = vmand %vm205, %vm232
  %vm260 = vmand %vm206, %vm233
  %vm261 = vmand %vm207, %vm234
  %vm262 = vmand %vm208, %vm235
  %vm263 = vmand %vm209, %vm236
  %vm264 = vmor %vm156, %vm237
  %vm265 = vmor %vm157, %vm238
  %vm266 = vmor %vm158, %vm239
  %vm267 = vmor %vm159, %vm240
  %vm268 = vmor %vm160, %vm241
  %vm269 = vmor %vm161, %vm242
  %vm270 = vmor %vm162, %vm243
  %vm271 = vmor %vm163, %vm244
  %vm272 = vmor %vm164, %vm245
  %vm273 = vmor %vm165, %vm246
  %vm274 = vmor %vm166, %vm247
  %vm275 = vmor %vm167, %vm248
  %vm276 = vmor %vm168, %vm249
  %vm277 = vmor %vm169, %vm250
  %vm278 = vmor %vm170, %vm251
  %vm279 = vmor %vm171, %vm252
  %vm280 = vmor %vm172, %vm253
  %vm281 = vmor %vm173, %vm254
  %vm282 = vmor %vm174, %vm255
  %vm283 = vmor %vm175, %vm256
  %vm284 = vmor %vm176, %vm257
  %vm285 = vmor %vm177, %vm258
  %vm286 = vmor %vm178, %vm259
  %vm287 = vmor %vm179, %vm260
  %vm288 = vmor %vm180, %vm261
  %vm289 = vmor %vm181, %vm262
  %vm290 = vmor %vm182, %vm263
  %v291 = vlaneseq
  %v292 = vshrl.u32 %v291, 7
  %v293 = vsub.s32 0, %v292
  %v294 = vrot.slane %v38, %v293
  %vm295 = vcmask 392192
  %v297 = vsel %vm295, %v41, 0
  %v300 = vsel %vm295, %v42, 0
  %v303 = vsel %vm295, %v43, 0
  %v306 = vsel %vm295, %v44, 0
  %v309 = vsel %vm295, %v45, 0
  %v312 = vsel %vm295, %v46, 0
  %v315 = vsel %vm295, %v47, 0
  %v318 = vsel %vm295, %v48, 0
  %v321 = vsel %vm295, %v49, 0
  %v324 = vsel %vm295, %v50, 0
  %v327 = vsel %vm295, %v51, 0
  %v330 = vsel %vm295, %v52, 0
  %v333 = vsel %vm295, %v53, 0
  %v336 = vsel %vm295, %v54, 0
  %v339 = vsel %vm295, %v55, 0
  %v342 = vsel %vm295, %v56, 0
  %v345 = vsel %vm295, %v57, 0
  %v348 = vsel %vm295, %v58, 0
  %v351 = vsel %vm295, %v59, 0
  %v354 = vsel %vm295, %v60, 0
  %v357 = vsel %vm295, %v61, 0
  %v360 = vsel %vm295, %v62, 0
  %v363 = vsel %vm295, %v63, 0
  %v366 = vsel %vm295, %v64, 0
  %v369 = vsel %vm295, %v65, 0
  %v372 = vsel %vm295, %v66, 0
  %v375 = vsel %vm295, %v67, 0
  %377 = vmatprep.subr.mxu0 0.0
  %378 = vmatpush1.msra.mxu0 %v68
  %379 = vmatprep.subr.mxu0 0.0
  %380 = vmatpush1.msra.mxu0 %v69
  %381 = vmatprep.subr.mxu0 0.0
  %382 = vmatpush1.msra.mxu0 %v70
  %383 = vmatprep.subr.mxu0 0.0
  %384 = vmatpush1.msra.mxu0 %v71
  %385 = vmatprep.subr.mxu0 0.0
  %386 = vmatpush1.msra.mxu0 %v72
  %387 = vmatprep.subr.mxu0 0.0
  %388 = vmatpush1.msra.mxu0 %v73
  %389 = vmatprep.subr.mxu0 0.0
  %390 = vmatpush1.msra.mxu0 0.0
  %391 = vmatprep.subr.mxu0 0.0
  %392 = vmatpush1.msra.mxu0 0.0
  %393 = vmatprep.subr.mxu0 0.0
  %394 = vmatpush1.msra.mxu0 0.0
  %395 = vmatprep.subr.mxu0 0.0
  %396 = vmatpush1.msra.mxu0 0.0
  %397 = vmatprep.subr.mxu0 0.0
  %398 = vmatpush1.msra.mxu0 0.0
  %399 = vmatprep.subr.mxu0 0.0
  %400 = vmatpush1.msra.mxu0 0.0
  %401 = vmatprep.subr.mxu0 0.0
  %402 = vmatpush1.msra.mxu0 0.0
  %403 = vmatprep.subr.mxu0 0.0
  %404 = vmatpush1.msra.mxu0 0.0
  %405 = vmatprep.subr.mxu0 0.0
  %406 = vmatpush1.msra.mxu0 0.0
  %407 = vmatprep.subr.mxu0 0.0
  %408 = vmatpush1.msra.mxu0 0.0
  %409 = vmatprep.subr.mxu0 0.0
  %410 = vmatpush1.msra.mxu0 0.0
  %411 = vmatprep.subr.mxu0 0.0
  %412 = vmatpush1.msra.mxu0 0.0
  %413 = vmatprep.subr.mxu0 0.0
  %414 = vmatpush1.msra.mxu0 0.0
  %415 = vmatprep.subr.mxu0 0.0
  %416 = vmatpush1.msra.mxu0 0.0
  %417 = vmatprep.subr.mxu0 0.0
  %418 = vmatpush1.msra.mxu0 0.0
  %419 = vmatprep.subr.mxu0 0.0
  %420 = vmatpush1.msra.mxu0 0.0
  %421 = vmatprep.subr.mxu0 0.0
  %422 = vmatpush1.msra.mxu0 0.0
  %423 = vmatprep.subr.mxu0 0.0
  %424 = vmatpush1.msra.mxu0 0.0
  %425 = vmatprep.subr.mxu0 0.0
  %426 = vmatpush1.msra.mxu0 0.0
  %427 = vmatprep.subr.mxu0 0.0
  %428 = vmatpush1.msra.mxu0 0.0
  %429 = vmatprep.subr.mxu0 0.0
  %430 = vmatpush1.msra.mxu0 0.0
  %431 = vmatprep.subr.mxu0 0.0
  %432 = vmatpush1.msra.mxu0 0.0
  %433 = vmatprep.subr.mxu0 0.0
  %434 = vmatpush1.msra.mxu0 0.0
  %435 = vmatprep.subr.mxu0 0.0
  %436 = vmatpush1.msra.mxu0 0.0
  %437 = vmatprep.subr.mxu0 0.0
  %438 = vmatpush1.msra.mxu0 0.0
  %439 = vmatprep.subr.mxu0 0.0
  %440 = vmatpush1.msra.mxu0 0.0
  %441 = vmatprep.mubr.f32.mxu0 0.0
  %442 = vmatmul.mubr.f32.gmra.mrb[0].mxu0 %v297
  %v443 = vpop.f32.mrb[0].mxu0
  %v444 = vadd.f32 %v294, %v443
  %v445 = vpop.f32.mrb[0].mxu0
  %446 = vmatprep.mubr.f32.mxu0 0.0
  %447 = vmatmul.mubr.f32.gmra.mrb[0].mxu0 %v300
  %v448 = vpop.f32.mrb[0].mxu0
  %v449 = vadd.f32 %v294, %v448
  %v450 = vpop.f32.mrb[0].mxu0
  %451 = vmatprep.mubr.f32.mxu0 0.0
  %452 = vmatmul.mubr.f32.gmra.mrb[0].mxu0 %v303
  %v453 = vpop.f32.mrb[0].mxu0
  %v454 = vadd.f32 %v294, %v453
  %v455 = vpop.f32.mrb[0].mxu0
  %456 = vmatprep.mubr.f32.mxu0 0.0
  %457 = vmatmul.mubr.f32.gmra.mrb[0].mxu0 %v306
  %v458 = vpop.f32.mrb[0].mxu0
  %v459 = vadd.f32 %v294, %v458
  %v460 = vpop.f32.mrb[0].mxu0
  %461 = vmatprep.mubr.f32.mxu0 0.0
  %462 = vmatmul.mubr.f32.gmra.mrb[0].mxu0 %v309
  %v463 = vpop.f32.mrb[0].mxu0
  %v464 = vadd.f32 %v294, %v463
  %v465 = vpop.f32.mrb[0].mxu0
  %466 = vmatprep.mubr.f32.mxu0 0.0
  %467 = vmatmul.mubr.f32.gmra.mrb[0].mxu0 %v312
  %v468 = vpop.f32.mrb[0].mxu0
  %v469 = vadd.f32 %v294, %v468
  %v470 = vpop.f32.mrb[0].mxu0
  %471 = vmatprep.mubr.f32.mxu0 0.0
  %472 = vmatmul.mubr.f32.gmra.mrb[0].mxu0 %v315
  %v473 = vpop.f32.mrb[0].mxu0
  %v474 = vadd.f32 %v294, %v473
  %v475 = vpop.f32.mrb[0].mxu0
  %476 = vmatprep.mubr.f32.mxu0 0.0
  %477 = vmatmul.mubr.f32.gmra.mrb[0].mxu0 %v318
  %v478 = vpop.f32.mrb[0].mxu0
  %v479 = vadd.f32 %v294, %v478
  %v480 = vpop.f32.mrb[0].mxu0
  %481 = vmatprep.mubr.f32.mxu0 0.0
  %482 = vmatmul.mubr.f32.gmra.mrb[0].mxu0 %v321
  %v483 = vpop.f32.mrb[0].mxu0
  %v484 = vadd.f32 %v294, %v483
  %v485 = vpop.f32.mrb[0].mxu0
  %486 = vmatprep.mubr.f32.mxu0 0.0
  %487 = vmatmul.mubr.f32.gmra.mrb[0].mxu0 %v324
  %v488 = vpop.f32.mrb[0].mxu0
  %v489 = vadd.f32 %v294, %v488
  %v490 = vpop.f32.mrb[0].mxu0
  %491 = vmatprep.mubr.f32.mxu0 0.0
  %492 = vmatmul.mubr.f32.gmra.mrb[0].mxu0 %v327
  %v493 = vpop.f32.mrb[0].mxu0
  %v494 = vadd.f32 %v294, %v493
  %v495 = vpop.f32.mrb[0].mxu0
  %496 = vmatprep.mubr.f32.mxu0 0.0
  %497 = vmatmul.mubr.f32.gmra.mrb[0].mxu0 %v330
  %v498 = vpop.f32.mrb[0].mxu0
  %v499 = vadd.f32 %v294, %v498
  %v500 = vpop.f32.mrb[0].mxu0
  %501 = vmatprep.mubr.f32.mxu0 0.0
  %502 = vmatmul.mubr.f32.gmra.mrb[0].mxu0 %v333
  %v503 = vpop.f32.mrb[0].mxu0
  %v504 = vadd.f32 %v294, %v503
  %v505 = vpop.f32.mrb[0].mxu0
  %506 = vmatprep.mubr.f32.mxu0 0.0
  %507 = vmatmul.mubr.f32.gmra.mrb[0].mxu0 %v336
  %v508 = vpop.f32.mrb[0].mxu0
  %v509 = vadd.f32 %v294, %v508
  %v510 = vpop.f32.mrb[0].mxu0
  %511 = vmatprep.mubr.f32.mxu0 0.0
  %512 = vmatmul.mubr.f32.gmra.mrb[0].mxu0 %v339
  %v513 = vpop.f32.mrb[0].mxu0
  %v514 = vadd.f32 %v294, %v513
  %v515 = vpop.f32.mrb[0].mxu0
  %516 = vmatprep.mubr.f32.mxu0 0.0
  %517 = vmatmul.mubr.f32.gmra.mrb[0].mxu0 %v342
  %v518 = vpop.f32.mrb[0].mxu0
  %v519 = vadd.f32 %v294, %v518
  %v520 = vpop.f32.mrb[0].mxu0
  %521 = vmatprep.mubr.f32.mxu0 0.0
  %522 = vmatmul.mubr.f32.gmra.mrb[0].mxu0 %v345
  %v523 = vpop.f32.mrb[0].mxu0
  %v524 = vadd.f32 %v294, %v523
  %v525 = vpop.f32.mrb[0].mxu0
  %526 = vmatprep.mubr.f32.mxu0 0.0
  %527 = vmatmul.mubr.f32.gmra.mrb[0].mxu0 %v348
  %v528 = vpop.f32.mrb[0].mxu0
  %v529 = vadd.f32 %v294, %v528
  %v530 = vpop.f32.mrb[0].mxu0
  %531 = vmatprep.mubr.f32.mxu0 0.0
  %532 = vmatmul.mubr.f32.gmra.mrb[0].mxu0 %v351
  %v533 = vpop.f32.mrb[0].mxu0
  %v534 = vadd.f32 %v294, %v533
  %v535 = vpop.f32.mrb[0].mxu0
  %536 = vmatprep.mubr.f32.mxu0 0.0
  %537 = vmatmul.mubr.f32.gmra.mrb[0].mxu0 %v354
  %v538 = vpop.f32.mrb[0].mxu0
  %v539 = vadd.f32 %v294, %v538
  %v540 = vpop.f32.mrb[0].mxu0
  %541 = vmatprep.mubr.f32.mxu0 0.0
  %542 = vmatmul.mubr.f32.gmra.mrb[0].mxu0 %v357
  %v543 = vpop.f32.mrb[0].mxu0
  %v544 = vadd.f32 %v294, %v543
  %v545 = vpop.f32.mrb[0].mxu0
  %546 = vmatprep.mubr.f32.mxu0 0.0
  %547 = vmatmul.mubr.f32.gmra.mrb[0].mxu0 %v360
  %v548 = vpop.f32.mrb[0].mxu0
  %v549 = vadd.f32 %v294, %v548
  %v550 = vpop.f32.mrb[0].mxu0
  %551 = vmatprep.mubr.f32.mxu0 0.0
  %552 = vmatmul.mubr.f32.gmra.mrb[0].mxu0 %v363
  %v553 = vpop.f32.mrb[0].mxu0
  %v554 = vadd.f32 %v294, %v553
  %v555 = vpop.f32.mrb[0].mxu0
  %556 = vmatprep.mubr.f32.mxu0 0.0
  %557 = vmatmul.mubr.f32.gmra.mrb[0].mxu0 %v366
  %v558 = vpop.f32.mrb[0].mxu0
  %v559 = vadd.f32 %v294, %v558
  %v560 = vpop.f32.mrb[0].mxu0
  %561 = vmatprep.mubr.f32.mxu0 0.0
  %562 = vmatmul.mubr.f32.gmra.mrb[0].mxu0 %v369
  %v563 = vpop.f32.mrb[0].mxu0
  %v564 = vadd.f32 %v294, %v563
  %v565 = vpop.f32.mrb[0].mxu0
  %566 = vmatprep.mubr.f32.mxu0 0.0
  %567 = vmatmul.mubr.f32.gmra.mrb[0].mxu0 %v372
  %v568 = vpop.f32.mrb[0].mxu0
  %v569 = vadd.f32 %v294, %v568
  %v570 = vpop.f32.mrb[0].mxu0
  %571 = vmatprep.mubr.f32.mxu0 0.0
  %572 = vmatmul.mubr.f32.gmra.mrb[0].mxu0 %v375
  %v573 = vpop.f32.mrb[0].mxu0
  %v574 = vadd.f32 %v294, %v573
  %v575 = vpop.f32.mrb[0].mxu0
  %576 = vdwg.mxu0
  %v577 = vmax.f32 %v444, 0.0
  %v578 = vmax.f32 %v449, 0.0
  %v579 = vmax.f32 %v454, 0.0
  %v580 = vmax.f32 %v459, 0.0
  %v581 = vmax.f32 %v464, 0.0
  %v582 = vmax.f32 %v469, 0.0
  %v583 = vmax.f32 %v474, 0.0
  %v584 = vmax.f32 %v479, 0.0
  %v585 = vmax.f32 %v484, 0.0
  %v586 = vmax.f32 %v489, 0.0
  %v587 = vmax.f32 %v494, 0.0
  %v588 = vmax.f32 %v499, 0.0
  %v589 = vmax.f32 %v504, 0.0
  %v590 = vmax.f32 %v509, 0.0
  %v591 = vmax.f32 %v514, 0.0
  %v592 = vmax.f32 %v519, 0.0
  %v593 = vmax.f32 %v524, 0.0
  %v594 = vmax.f32 %v529, 0.0
  %v595 = vmax.f32 %v534, 0.0
  %v596 = vmax.f32 %v539, 0.0
  %v597 = vmax.f32 %v544, 0.0
  %v598 = vmax.f32 %v549, 0.0
  %v599 = vmax.f32 %v554, 0.0
  %v600 = vmax.f32 %v559, 0.0
  %v601 = vmax.f32 %v564, 0.0
  %v602 = vmax.f32 %v569, 0.0
  %v603 = vmax.f32 %v574, 0.0
  %v604 = vsel %vm264, %v577, 0.0
  %v605 = vsel %vm265, %v578, 0.0
  %v606 = vsel %vm266, %v579, 0.0
  %v607 = vsel %vm267, %v580, 0.0
  %v608 = vsel %vm268, %v581, 0.0
  %v609 = vsel %vm269, %v582, 0.0
  %v610 = vsel %vm270, %v583, 0.0
  %v611 = vsel %vm271, %v584, 0.0
  %v612 = vsel %vm272, %v585, 0.0
  %v613 = vsel %vm273, %v586, 0.0
  %v614 = vsel %vm274, %v587, 0.0
  %v615 = vsel %vm275, %v588, 0.0
  %v616 = vsel %vm276, %v589, 0.0
  %v617 = vsel %vm277, %v590, 0.0
  %v618 = vsel %vm278, %v591, 0.0
  %v619 = vsel %vm279, %v592, 0.0
  %v620 = vsel %vm280, %v593, 0.0
  %v621 = vsel %vm281, %v594, 0.0
  %v622 = vsel %vm282, %v595, 0.0
  %v623 = vsel %vm283, %v596, 0.0
  %v624 = vsel %vm284, %v597, 0.0
  %v625 = vsel %vm285, %v598, 0.0
  %v626 = vsel %vm286, %v599, 0.0
  %v627 = vsel %vm287, %v600, 0.0
  %v628 = vsel %vm288, %v601, 0.0
  %v629 = vsel %vm289, %v602, 0.0
  %v630 = vsel %vm290, %v603, 0.0
  %v631 = vld [vmem:[%s3] sm:$0xff]
  %v632 = vld [vmem:[%s3 + $0x8] sm:$0xff]
  %v633 = vld [vmem:[%s3 + $0x10] sm:$0xff]
  %v634 = vld [vmem:[%s3 + $0x18] sm:$0xff]
  %v635 = vld [vmem:[%s3 + $0x20] sm:$0xff]
  %v636 = vld [vmem:[%s3 + $0x28] sm:$0xff]
  %v637 = vld [vmem:[%s3 + $0x30] sm:$0xff]
  %v638 = vld [vmem:[%s3 + $0x38] sm:$0xff]
  %v639 = vld [vmem:[%s3 + $0x40] sm:$0xff]
  %v640 = vld [vmem:[%s3 + $0x48] sm:$0xff]
  %v641 = vld [vmem:[%s3 + $0x50] sm:$0xff]
  %v642 = vld [vmem:[%s3 + $0x58] sm:$0xff]
  %v643 = vrot.slane %v604, 1
  %v644 = vrot.slane %v605, 1
  %v645 = vrot.slane %v606, 1
  %v646 = vrot.slane %v607, 1
  %v647 = vrot.slane %v608, 1
  %v648 = vrot.slane %v609, 1
  %v649 = vrot.slane %v610, 1
  %v650 = vrot.slane %v611, 1
  %v651 = vrot.slane %v612, 1
  %v652 = vrot.slane %v613, 1
  %v653 = vrot.slane %v614, 1
  %v654 = vrot.slane %v615, 1
  %v655 = vrot.slane %v616, 1
  %v656 = vrot.slane %v617, 1
  %v657 = vrot.slane %v618, 1
  %v658 = vrot.slane %v619, 1
  %v659 = vrot.slane %v620, 1
  %v660 = vrot.slane %v621, 1
  %v661 = vrot.slane %v622, 1
  %v662 = vrot.slane %v623, 1
  %v663 = vrot.slane %v624, 1
  %v664 = vrot.slane %v625, 1
  %v665 = vrot.slane %v626, 1
  %v666 = vrot.slane %v627, 1
  %v667 = vrot.slane %v628, 1
  %v668 = vrot.slane %v629, 1
  %v669 = vrot.slane %v630, 1
  %vm670 = vcmp.lt.s32.totalorder %v75, 7
  %v671 = vsel %vm670, %v668, %v669
  %v672 = vsel %vm670, %v667, %v668
  %v673 = vsel %vm670, %v666, %v667
  %v674 = vsel %vm670, %v665, %v666
  %v675 = vsel %vm670, %v664, %v665
  %v676 = vsel %vm670, %v663, %v664
  %v677 = vsel %vm670, %v662, %v663
  %v678 = vsel %vm670, %v661, %v662
  %v679 = vsel %vm670, %v660, %v661
  %v680 = vsel %vm670, %v659, %v660
  %v681 = vsel %vm670, %v658, %v659
  %v682 = vsel %vm670, %v657, %v658
  %v683 = vsel %vm670, %v656, %v657
  %v684 = vsel %vm670, %v655, %v656
  %v685 = vsel %vm670, %v654, %v655
  %v686 = vsel %vm670, %v653, %v654
  %v687 = vsel %vm670, %v652, %v653
  %v688 = vsel %vm670, %v651, %v652
  %v689 = vsel %vm670, %v650, %v651
  %v690 = vsel %vm670, %v649, %v650
  %v691 = vsel %vm670, %v648, %v649
  %v692 = vsel %vm670, %v647, %v648
  %v693 = vsel %vm670, %v646, %v647
  %v694 = vsel %vm670, %v645, %v646
  %v695 = vsel %vm670, %v644, %v645
  %v696 = vsel %vm670, %v643, %v644
  %s697 = scalar_lea.vmem %s3, 96
  %v698 = vld [vmem:[%s697] sm:$0xff]
  %v699 = vld [vmem:[%s697 + $0x8] sm:$0xff]
  %v700 = vld [vmem:[%s697 + $0x10] sm:$0xff]
  %v701 = vld [vmem:[%s697 + $0x18] sm:$0xff]
  %v702 = vld [vmem:[%s697 + $0x20] sm:$0xff]
  %v703 = vld [vmem:[%s697 + $0x28] sm:$0xff]
  %v704 = vld [vmem:[%s697 + $0x30] sm:$0xff]
  %v705 = vld [vmem:[%s697 + $0x38] sm:$0xff]
  %v706 = vld [vmem:[%s697 + $0x40] sm:$0xff]
  %v707 = vld [vmem:[%s697 + $0x48] sm:$0xff]
  %v708 = vld [vmem:[%s697 + $0x50] sm:$0xff]
  %v709 = vld [vmem:[%s697 + $0x58] sm:$0xff]
  %vm710 = vcmask 785408
  %v712 = vsel %vm710, %v696, 0
  %v715 = vsel %vm710, %v695, 0
  %v718 = vsel %vm710, %v694, 0
  %v721 = vsel %vm710, %v693, 0
  %v724 = vsel %vm710, %v692, 0
  %v727 = vsel %vm710, %v691, 0
  %v730 = vsel %vm710, %v690, 0
  %v733 = vsel %vm710, %v689, 0
  %v736 = vsel %vm710, %v688, 0
  %v739 = vsel %vm710, %v687, 0
  %v742 = vsel %vm710, %v686, 0
  %v745 = vsel %vm710, %v685, 0
  %v748 = vsel %vm710, %v684, 0
  %v751 = vsel %vm710, %v683, 0
  %v754 = vsel %vm710, %v682, 0
  %v757 = vsel %vm710, %v681, 0
  %v760 = vsel %vm710, %v680, 0
  %v763 = vsel %vm710, %v679, 0
  %v766 = vsel %vm710, %v678, 0
  %v769 = vsel %vm710, %v677, 0
  %v772 = vsel %vm710, %v676, 0
  %v775 = vsel %vm710, %v675, 0
  %v778 = vsel %vm710, %v674, 0
  %v781 = vsel %vm710, %v673, 0
  %v784 = vsel %vm710, %v672, 0
  %v787 = vsel %vm710, %v671, 0
  %789 = vmatprep.subr.mxu0 0.0
  %790 = vmatpush1.msra.mxu0 %v698
  %791 = vmatprep.subr.mxu0 0.0
  %792 = vmatpush1.msra.mxu0 %v699
  %793 = vmatprep.subr.mxu0 0.0
  %794 = vmatpush1.msra.mxu0 %v700
  %795 = vmatprep.subr.mxu0 0.0
  %796 = vmatpush1.msra.mxu0 %v701
  %797 = vmatprep.subr.mxu0 0.0
  %798 = vmatpush1.msra.mxu0 %v702
  %799 = vmatprep.subr.mxu0 0.0
  %800 = vmatpush1.msra.mxu0 %v703
  %801 = vmatprep.subr.mxu0 0.0
  %802 = vmatpush1.msra.mxu0 %v704
  %803 = vmatprep.subr.mxu0 0.0
  %804 = vmatpush1.msra.mxu0 %v705
  %805 = vmatprep.subr.mxu0 0.0
  %806 = vmatpush1.msra.mxu0 %v706
  %807 = vmatprep.subr.mxu0 0.0
  %808 = vmatpush1.msra.mxu0 %v707
  %809 = vmatprep.subr.mxu0 0.0
  %810 = vmatpush1.msra.mxu0 %v708
  %811 = vmatprep.subr.mxu0 0.0
  %812 = vmatpush1.msra.mxu0 %v709
  %813 = vmatprep.subr.mxu0 0.0
  %814 = vmatpush1.msra.mxu0 0.0
  %815 = vmatprep.subr.mxu0 0.0
  %816 = vmatpush1.msra.mxu0 0.0
  %817 = vmatprep.subr.mxu0 0.0
  %818 = vmatpush1.msra.mxu0 0.0
  %819 = vmatprep.subr.mxu0 0.0
  %820 = vmatpush1.msra.mxu0 0.0
  %821 = vmatprep.subr.mxu0 0.0
  %822 = vmatpush1.msra.mxu0 0.0
  %823 = vmatprep.subr.mxu0 0.0
  %824 = vmatpush1.msra.mxu0 0.0
  %825 = vmatprep.subr.mxu0 0.0
  %826 = vmatpush1.msra.mxu0 0.0
  %827 = vmatprep.subr.mxu0 0.0
  %828 = vmatpush1.msra.mxu0 0.0
  %829 = vmatprep.subr.mxu0 0.0
  %830 = vmatpush1.msra.mxu0 0.0
  %831 = vmatprep.subr.mxu0 0.0
  %832 = vmatpush1.msra.mxu0 0.0
  %833 = vmatprep.subr.mxu0 0.0
  %834 = vmatpush1.msra.mxu0 0.0
  %835 = vmatprep.subr.mxu0 0.0
  %836 = vmatpush1.msra.mxu0 0.0
  %837 = vmatprep.subr.mxu0 0.0
  %838 = vmatpush1.msra.mxu0 0.0
  %839 = vmatprep.subr.mxu0 0.0
  %840 = vmatpush1.msra.mxu0 0.0
  %841 = vmatprep.subr.mxu0 0.0
  %842 = vmatpush1.msra.mxu0 0.0
  %843 = vmatprep.subr.mxu0 0.0
  %844 = vmatpush1.msra.mxu0 0.0
  %845 = vmatprep.subr.mxu0 0.0
  %846 = vmatpush1.msra.mxu0 0.0
  %847 = vmatprep.subr.mxu0 0.0
  %848 = vmatpush1.msra.mxu0 0.0
  %849 = vmatprep.subr.mxu0 0.0
  %850 = vmatpush1.msra.mxu0 0.0
  %851 = vmatprep.subr.mxu0 0.0
  %852 = vmatpush1.msra.mxu0 0.0
  %853 = vmatprep.mubr.f32.mxu0 0.0
  %854 = vmatmul.mubr.f32.gmra.mrb[0].mxu0 %v712
  %v855 = vpop.f32.mrb[0].mxu0
  %v856 = vadd.f32 0.0, %v855
  %v857 = vpop.f32.mrb[0].mxu0
  %858 = vmatprep.mubr.f32.mxu0 0.0
  %859 = vmatmul.mubr.f32.gmra.mrb[0].mxu0 %v715
  %v860 = vpop.f32.mrb[0].mxu0
  %v861 = vadd.f32 0.0, %v860
  %v862 = vpop.f32.mrb[0].mxu0
  %863 = vmatprep.mubr.f32.mxu0 0.0
  %864 = vmatmul.mubr.f32.gmra.mrb[0].mxu0 %v718
  %v865 = vpop.f32.mrb[0].mxu0
  %v866 = vadd.f32 0.0, %v865
  %v867 = vpop.f32.mrb[0].mxu0
  %868 = vmatprep.mubr.f32.mxu0 0.0
  %869 = vmatmul.mubr.f32.gmra.mrb[0].mxu0 %v721
  %v870 = vpop.f32.mrb[0].mxu0
  %v871 = vadd.f32 0.0, %v870
  %v872 = vpop.f32.mrb[0].mxu0
  %873 = vmatprep.mubr.f32.mxu0 0.0
  %874 = vmatmul.mubr.f32.gmra.mrb[0].mxu0 %v724
  %v875 = vpop.f32.mrb[0].mxu0
  %v876 = vadd.f32 0.0, %v875
  %v877 = vpop.f32.mrb[0].mxu0
  %878 = vmatprep.mubr.f32.mxu0 0.0
  %879 = vmatmul.mubr.f32.gmra.mrb[0].mxu0 %v727
  %v880 = vpop.f32.mrb[0].mxu0
  %v881 = vadd.f32 0.0, %v880
  %v882 = vpop.f32.mrb[0].mxu0
  %883 = vmatprep.mubr.f32.mxu0 0.0
  %884 = vmatmul.mubr.f32.gmra.mrb[0].mxu0 %v730
  %v885 = vpop.f32.mrb[0].mxu0
  %v886 = vadd.f32 0.0, %v885
  %v887 = vpop.f32.mrb[0].mxu0
  %888 = vmatprep.mubr.f32.mxu0 0.0
  %889 = vmatmul.mubr.f32.gmra.mrb[0].mxu0 %v733
  %v890 = vpop.f32.mrb[0].mxu0
  %v891 = vadd.f32 0.0, %v890
  %v892 = vpop.f32.mrb[0].mxu0
  %893 = vmatprep.mubr.f32.mxu0 0.0
  %894 = vmatmul.mubr.f32.gmra.mrb[0].mxu0 %v736
  %v895 = vpop.f32.mrb[0].mxu0
  %v896 = vadd.f32 0.0, %v895
  %v897 = vpop.f32.mrb[0].mxu0
  %898 = vmatprep.mubr.f32.mxu0 0.0
  %899 = vmatmul.mubr.f32.gmra.mrb[0].mxu0 %v739
  %v900 = vpop.f32.mrb[0].mxu0
  %v901 = vadd.f32 0.0, %v900
  %v902 = vpop.f32.mrb[0].mxu0
  %903 = vmatprep.mubr.f32.mxu0 0.0
  %904 = vmatmul.mubr.f32.gmra.mrb[0].mxu0 %v742
  %v905 = vpop.f32.mrb[0].mxu0
  %v906 = vadd.f32 0.0, %v905
  %v907 = vpop.f32.mrb[0].mxu0
  %908 = vmatprep.mubr.f32.mxu0 0.0
  %909 = vmatmul.mubr.f32.gmra.mrb[0].mxu0 %v745
  %v910 = vpop.f32.mrb[0].mxu0
  %v911 = vadd.f32 0.0, %v910
  %v912 = vpop.f32.mrb[0].mxu0
  %913 = vmatprep.mubr.f32.mxu0 0.0
  %914 = vmatmul.mubr.f32.gmra.mrb[0].mxu0 %v748
  %v915 = vpop.f32.mrb[0].mxu0
  %v916 = vadd.f32 0.0, %v915
  %v917 = vpop.f32.mrb[0].mxu0
  %918 = vmatprep.mubr.f32.mxu0 0.0
  %919 = vmatmul.mubr.f32.gmra.mrb[0].mxu0 %v751
  %v920 = vpop.f32.mrb[0].mxu0
  %v921 = vadd.f32 0.0, %v920
  %v922 = vpop.f32.mrb[0].mxu0
  %923 = vmatprep.mubr.f32.mxu0 0.0
  %924 = vmatmul.mubr.f32.gmra.mrb[0].mxu0 %v754
  %v925 = vpop.f32.mrb[0].mxu0
  %v926 = vadd.f32 0.0, %v925
  %v927 = vpop.f32.mrb[0].mxu0
  %928 = vmatprep.mubr.f32.mxu0 0.0
  %929 = vmatmul.mubr.f32.gmra.mrb[0].mxu0 %v757
  %v930 = vpop.f32.mrb[0].mxu0
  %v931 = vadd.f32 0.0, %v930
  %v932 = vpop.f32.mrb[0].mxu0
  %933 = vmatprep.mubr.f32.mxu0 0.0
  %934 = vmatmul.mubr.f32.gmra.mrb[0].mxu0 %v760
  %v935 = vpop.f32.mrb[0].mxu0
  %v936 = vadd.f32 0.0, %v935
  %v937 = vpop.f32.mrb[0].mxu0
  %938 = vmatprep.mubr.f32.mxu0 0.0
  %939 = vmatmul.mubr.f32.gmra.mrb[0].mxu0 %v763
  %v940 = vpop.f32.mrb[0].mxu0
  %v941 = vadd.f32 0.0, %v940
  %v942 = vpop.f32.mrb[0].mxu0
  %943 = vmatprep.mubr.f32.mxu0 0.0
  %944 = vmatmul.mubr.f32.gmra.mrb[0].mxu0 %v766
  %v945 = vpop.f32.mrb[0].mxu0
  %v946 = vadd.f32 0.0, %v945
  %v947 = vpop.f32.mrb[0].mxu0
  %948 = vmatprep.mubr.f32.mxu0 0.0
  %949 = vmatmul.mubr.f32.gmra.mrb[0].mxu0 %v769
  %v950 = vpop.f32.mrb[0].mxu0
  %v951 = vadd.f32 0.0, %v950
  %v952 = vpop.f32.mrb[0].mxu0
  %953 = vmatprep.mubr.f32.mxu0 0.0
  %954 = vmatmul.mubr.f32.gmra.mrb[0].mxu0 %v772
  %v955 = vpop.f32.mrb[0].mxu0
  %v956 = vadd.f32 0.0, %v955
  %v957 = vpop.f32.mrb[0].mxu0
  %958 = vmatprep.mubr.f32.mxu0 0.0
  %959 = vmatmul.mubr.f32.gmra.mrb[0].mxu0 %v775
  %v960 = vpop.f32.mrb[0].mxu0
  %v961 = vadd.f32 0.0, %v960
  %v962 = vpop.f32.mrb[0].mxu0
  %963 = vmatprep.mubr.f32.mxu0 0.0
  %964 = vmatmul.mubr.f32.gmra.mrb[0].mxu0 %v778
  %v965 = vpop.f32.mrb[0].mxu0
  %v966 = vadd.f32 0.0, %v965
  %v967 = vpop.f32.mrb[0].mxu0
  %968 = vmatprep.mubr.f32.mxu0 0.0
  %969 = vmatmul.mubr.f32.gmra.mrb[0].mxu0 %v781
  %v970 = vpop.f32.mrb[0].mxu0
  %v971 = vadd.f32 0.0, %v970
  %v972 = vpop.f32.mrb[0].mxu0
  %973 = vmatprep.mubr.f32.mxu0 0.0
  %974 = vmatmul.mubr.f32.gmra.mrb[0].mxu0 %v784
  %v975 = vpop.f32.mrb[0].mxu0
  %v976 = vadd.f32 0.0, %v975
  %v977 = vpop.f32.mrb[0].mxu0
  %978 = vmatprep.mubr.f32.mxu0 0.0
  %979 = vmatmul.mubr.f32.gmra.mrb[0].mxu0 %v787
  %v980 = vpop.f32.mrb[0].mxu0
  %v981 = vadd.f32 0.0, %v980
  %v982 = vpop.f32.mrb[0].mxu0
  %983 = vdwg.mxu0
  %v984 = vrot.slane %v604, 2
  %v985 = vrot.slane %v605, 2
  %v986 = vrot.slane %v606, 2
  %v987 = vrot.slane %v607, 2
  %v988 = vrot.slane %v608, 2
  %v989 = vrot.slane %v609, 2
  %v990 = vrot.slane %v610, 2
  %v991 = vrot.slane %v611, 2
  %v992 = vrot.slane %v612, 2
  %v993 = vrot.slane %v613, 2
  %v994 = vrot.slane %v614, 2
  %v995 = vrot.slane %v615, 2
  %v996 = vrot.slane %v616, 2
  %v997 = vrot.slane %v617, 2
  %v998 = vrot.slane %v618, 2
  %v999 = vrot.slane %v619, 2
  %v1000 = vrot.slane %v620, 2
  %v1001 = vrot.slane %v621, 2
  %v1002 = vrot.slane %v622, 2
  %v1003 = vrot.slane %v623, 2
  %v1004 = vrot.slane %v624, 2
  %v1005 = vrot.slane %v625, 2
  %v1006 = vrot.slane %v626, 2
  %v1007 = vrot.slane %v627, 2
  %v1008 = vrot.slane %v628, 2
  %v1009 = vrot.slane %v629, 2
  %v1010 = vrot.slane %v630, 2
  %vm1011 = vcmp.lt.s32.totalorder %v75, 6
  %v1012 = vsel %vm1011, %v1009, %v1010
  %v1013 = vsel %vm1011, %v1008, %v1009
  %v1014 = vsel %vm1011, %v1007, %v1008
  %v1015 = vsel %vm1011, %v1006, %v1007
  %v1016 = vsel %vm1011, %v1005, %v1006
  %v1017 = vsel %vm1011, %v1004, %v1005
  %v1018 = vsel %vm1011, %v1003, %v1004
  %v1019 = vsel %vm1011, %v1002, %v1003
  %v1020 = vsel %vm1011, %v1001, %v1002
  %v1021 = vsel %vm1011, %v1000, %v1001
  %v1022 = vsel %vm1011, %v999, %v1000
  %v1023 = vsel %vm1011, %v998, %v999
  %v1024 = vsel %vm1011, %v997, %v998
  %v1025 = vsel %vm1011, %v996, %v997
  %v1026 = vsel %vm1011, %v995, %v996
  %v1027 = vsel %vm1011, %v994, %v995
  %v1028 = vsel %vm1011, %v993, %v994
  %v1029 = vsel %vm1011, %v992, %v993
  %v1030 = vsel %vm1011, %v991, %v992
  %v1031 = vsel %vm1011, %v990, %v991
  %v1032 = vsel %vm1011, %v989, %v990
  %v1033 = vsel %vm1011, %v988, %v989
  %v1034 = vsel %vm1011, %v987, %v988
  %v1035 = vsel %vm1011, %v986, %v987
  %v1036 = vsel %vm1011, %v985, %v986
  %v1037 = vsel %vm1011, %v984, %v985
  %s1038 = scalar_lea.vmem %s3, 192
  %v1039 = vld [vmem:[%s1038] sm:$0xff]
  %v1040 = vld [vmem:[%s1038 + $0x8] sm:$0xff]
  %v1041 = vld [vmem:[%s1038 + $0x10] sm:$0xff]
  %v1042 = vld [vmem:[%s1038 + $0x18] sm:$0xff]
  %v1043 = vld [vmem:[%s1038 + $0x20] sm:$0xff]
  %v1044 = vld [vmem:[%s1038 + $0x28] sm:$0xff]
  %v1045 = vld [vmem:[%s1038 + $0x30] sm:$0xff]
  %v1046 = vld [vmem:[%s1038 + $0x38] sm:$0xff]
  %v1047 = vld [vmem:[%s1038 + $0x40] sm:$0xff]
  %v1048 = vld [vmem:[%s1038 + $0x48] sm:$0xff]
  %v1049 = vld [vmem:[%s1038 + $0x50] sm:$0xff]
  %v1050 = vld [vmem:[%s1038 + $0x58] sm:$0xff]
  %v1051 = vrot.slane %v604, 3
  %v1052 = vrot.slane %v605, 3
  %v1053 = vrot.slane %v606, 3
  %v1054 = vrot.slane %v607, 3
  %v1055 = vrot.slane %v608, 3
  %v1056 = vrot.slane %v609, 3
  %v1057 = vrot.slane %v610, 3
  %v1058 = vrot.slane %v611, 3
  %v1059 = vrot.slane %v612, 3
  %v1060 = vrot.slane %v613, 3
  %v1061 = vrot.slane %v614, 3
  %v1062 = vrot.slane %v615, 3
  %v1063 = vrot.slane %v616, 3
  %v1064 = vrot.slane %v617, 3
  %v1065 = vrot.slane %v618, 3
  %v1066 = vrot.slane %v619, 3
  %v1067 = vrot.slane %v620, 3
  %v1068 = vrot.slane %v621, 3
  %v1069 = vrot.slane %v622, 3
  %v1070 = vrot.slane %v623, 3
  %v1071 = vrot.slane %v624, 3
  %v1072 = vrot.slane %v625, 3
  %v1073 = vrot.slane %v626, 3
  %v1074 = vrot.slane %v627, 3
  %v1075 = vrot.slane %v628, 3
  %v1076 = vrot.slane %v629, 3
  %v1077 = vrot.slane %v630, 3
  %vm1078 = vcmp.lt.s32.totalorder %v75, 5
  %v1079 = vsel %vm1078, %v1076, %v1077
  %v1080 = vsel %vm1078, %v1075, %v1076
  %v1081 = vsel %vm1078, %v1074, %v1075
  %v1082 = vsel %vm1078, %v1073, %v1074
  %v1083 = vsel %vm1078, %v1072, %v1073
  %v1084 = vsel %vm1078, %v1071, %v1072
  %v1085 = vsel %vm1078, %v1070, %v1071
  %v1086 = vsel %vm1078, %v1069, %v1070
  %v1087 = vsel %vm1078, %v1068, %v1069
  %v1088 = vsel %vm1078, %v1067, %v1068
  %v1089 = vsel %vm1078, %v1066, %v1067
  %v1090 = vsel %vm1078, %v1065, %v1066
  %v1091 = vsel %vm1078, %v1064, %v1065
  %v1092 = vsel %vm1078, %v1063, %v1064
  %v1093 = vsel %vm1078, %v1062, %v1063
  %v1094 = vsel %vm1078, %v1061, %v1062
  %v1095 = vsel %vm1078, %v1060, %v1061
  %v1096 = vsel %vm1078, %v1059, %v1060
  %v1097 = vsel %vm1078, %v1058, %v1059
  %v1098 = vsel %vm1078, %v1057, %v1058
  %v1099 = vsel %vm1078, %v1056, %v1057
  %v1100 = vsel %vm1078, %v1055, %v1056
  %v1101 = vsel %vm1078, %v1054, %v1055
  %v1102 = vsel %vm1078, %v1053, %v1054
  %v1103 = vsel %vm1078, %v1052, %v1053
  %v1104 = vsel %vm1078, %v1051, %v1052
  %s1105 = scalar_lea.vmem %s3, 288
  %v1106 = vld [vmem:[%s1105] sm:$0xff]
  %v1107 = vld [vmem:[%s1105 + $0x8] sm:$0xff]
  %v1108 = vld [vmem:[%s1105 + $0x10] sm:$0xff]
  %v1109 = vld [vmem:[%s1105 + $0x18] sm:$0xff]
  %v1110 = vld [vmem:[%s1105 + $0x20] sm:$0xff]
  %v1111 = vld [vmem:[%s1105 + $0x28] sm:$0xff]
  %v1112 = vld [vmem:[%s1105 + $0x30] sm:$0xff]
  %v1113 = vld [vmem:[%s1105 + $0x38] sm:$0xff]
  %v1114 = vld [vmem:[%s1105 + $0x40] sm:$0xff]
  %v1115 = vld [vmem:[%s1105 + $0x48] sm:$0xff]
  %v1116 = vld [vmem:[%s1105 + $0x50] sm:$0xff]
  %v1117 = vld [vmem:[%s1105 + $0x58] sm:$0xff]
  %v1119 = vsel %vm710, %v1104, 0
  %v1122 = vsel %vm710, %v1103, 0
  %v1125 = vsel %vm710, %v1102, 0
  %v1128 = vsel %vm710, %v1101, 0
  %v1131 = vsel %vm710, %v1100, 0
  %v1134 = vsel %vm710, %v1099, 0
  %v1137 = vsel %vm710, %v1098, 0
  %v1140 = vsel %vm710, %v1097, 0
  %v1143 = vsel %vm710, %v1096, 0
  %v1146 = vsel %vm710, %v1095, 0
  %v1149 = vsel %vm710, %v1094, 0
  %v1152 = vsel %vm710, %v1093, 0
  %v1155 = vsel %vm710, %v1092, 0
  %v1158 = vsel %vm710, %v1091, 0
  %v1161 = vsel %vm710, %v1090, 0
  %v1164 = vsel %vm710, %v1089, 0
  %v1167 = vsel %vm710, %v1088, 0
  %v1170 = vsel %vm710, %v1087, 0
  %v1173 = vsel %vm710, %v1086, 0
  %v1176 = vsel %vm710, %v1085, 0
  %v1179 = vsel %vm710, %v1084, 0
  %v1182 = vsel %vm710, %v1083, 0
  %v1185 = vsel %vm710, %v1082, 0
  %v1188 = vsel %vm710, %v1081, 0
  %v1191 = vsel %vm710, %v1080, 0
  %v1194 = vsel %vm710, %v1079, 0
  %1196 = vmatprep.subr.mxu0 0.0
  %1197 = vmatpush1.msra.mxu0 %v1106
  %1198 = vmatprep.subr.mxu0 0.0
  %1199 = vmatpush1.msra.mxu0 %v1107
  %1200 = vmatprep.subr.mxu0 0.0
  %1201 = vmatpush1.msra.mxu0 %v1108
  %1202 = vmatprep.subr.mxu0 0.0
  %1203 = vmatpush1.msra.mxu0 %v1109
  %1204 = vmatprep.subr.mxu0 0.0
  %1205 = vmatpush1.msra.mxu0 %v1110
  %1206 = vmatprep.subr.mxu0 0.0
  %1207 = vmatpush1.msra.mxu0 %v1111
  %1208 = vmatprep.subr.mxu0 0.0
  %1209 = vmatpush1.msra.mxu0 %v1112
  %1210 = vmatprep.subr.mxu0 0.0
  %1211 = vmatpush1.msra.mxu0 %v1113
  %1212 = vmatprep.subr.mxu0 0.0
  %1213 = vmatpush1.msra.mxu0 %v1114
  %1214 = vmatprep.subr.mxu0 0.0
  %1215 = vmatpush1.msra.mxu0 %v1115
  %1216 = vmatprep.subr.mxu0 0.0
  %1217 = vmatpush1.msra.mxu0 %v1116
  %1218 = vmatprep.subr.mxu0 0.0
  %1219 = vmatpush1.msra.mxu0 %v1117
  %1220 = vmatprep.subr.mxu0 0.0
  %1221 = vmatpush1.msra.mxu0 0.0
  %1222 = vmatprep.subr.mxu0 0.0
  %1223 = vmatpush1.msra.mxu0 0.0
  %1224 = vmatprep.subr.mxu0 0.0
  %1225 = vmatpush1.msra.mxu0 0.0
  %1226 = vmatprep.subr.mxu0 0.0
  %1227 = vmatpush1.msra.mxu0 0.0
  %1228 = vmatprep.subr.mxu0 0.0
  %1229 = vmatpush1.msra.mxu0 0.0
  %1230 = vmatprep.subr.mxu0 0.0
  %1231 = vmatpush1.msra.mxu0 0.0
  %1232 = vmatprep.subr.mxu0 0.0
  %1233 = vmatpush1.msra.mxu0 0.0
  %1234 = vmatprep.subr.mxu0 0.0
  %1235 = vmatpush1.msra.mxu0 0.0
  %1236 = vmatprep.subr.mxu0 0.0
  %1237 = vmatpush1.msra.mxu0 0.0
  %1238 = vmatprep.subr.mxu0 0.0
  %1239 = vmatpush1.msra.mxu0 0.0
  %1240 = vmatprep.subr.mxu0 0.0
  %1241 = vmatpush1.msra.mxu0 0.0
  %1242 = vmatprep.subr.mxu0 0.0
  %1243 = vmatpush1.msra.mxu0 0.0
  %1244 = vmatprep.subr.mxu0 0.0
  %1245 = vmatpush1.msra.mxu0 0.0
  %1246 = vmatprep.subr.mxu0 0.0
  %1247 = vmatpush1.msra.mxu0 0.0
  %1248 = vmatprep.subr.mxu0 0.0
  %1249 = vmatpush1.msra.mxu0 0.0
  %1250 = vmatprep.subr.mxu0 0.0
  %1251 = vmatpush1.msra.mxu0 0.0
  %1252 = vmatprep.subr.mxu0 0.0
  %1253 = vmatpush1.msra.mxu0 0.0
  %1254 = vmatprep.subr.mxu0 0.0
  %1255 = vmatpush1.msra.mxu0 0.0
  %1256 = vmatprep.subr.mxu0 0.0
  %1257 = vmatpush1.msra.mxu0 0.0
  %1258 = vmatprep.subr.mxu0 0.0
  %1259 = vmatpush1.msra.mxu0 0.0
  %1260 = vmatprep.mubr.f32.mxu0 0.0
  %1261 = vmatmul.mubr.f32.gmra.mrb[0].mxu0 %v1119
  %v1262 = vpop.f32.mrb[0].mxu0
  %v1263 = vadd.f32 0.0, %v1262
  %v1264 = vpop.f32.mrb[0].mxu0
  %1265 = vmatprep.mubr.f32.mxu0 0.0
  %1266 = vmatmul.mubr.f32.gmra.mrb[0].mxu0 %v1122
  %v1267 = vpop.f32.mrb[0].mxu0
  %v1268 = vadd.f32 0.0, %v1267
  %v1269 = vpop.f32.mrb[0].mxu0
  %1270 = vmatprep.mubr.f32.mxu0 0.0
  %1271 = vmatmul.mubr.f32.gmra.mrb[0].mxu0 %v1125
  %v1272 = vpop.f32.mrb[0].mxu0
  %v1273 = vadd.f32 0.0, %v1272
  %v1274 = vpop.f32.mrb[0].mxu0
  %1275 = vmatprep.mubr.f32.mxu0 0.0
  %1276 = vmatmul.mubr.f32.gmra.mrb[0].mxu0 %v1128
  %v1277 = vpop.f32.mrb[0].mxu0
  %v1278 = vadd.f32 0.0, %v1277
  %v1279 = vpop.f32.mrb[0].mxu0
  %1280 = vmatprep.mubr.f32.mxu0 0.0
  %1281 = vmatmul.mubr.f32.gmra.mrb[0].mxu0 %v1131
  %v1282 = vpop.f32.mrb[0].mxu0
  %v1283 = vadd.f32 0.0, %v1282
  %v1284 = vpop.f32.mrb[0].mxu0
  %1285 = vmatprep.mubr.f32.mxu0 0.0
  %1286 = vmatmul.mubr.f32.gmra.mrb[0].mxu0 %v1134
  %v1287 = vpop.f32.mrb[0].mxu0
  %v1288 = vadd.f32 0.0, %v1287
  %v1289 = vpop.f32.mrb[0].mxu0
  %1290 = vmatprep.mubr.f32.mxu0 0.0
  %1291 = vmatmul.mubr.f32.gmra.mrb[0].mxu0 %v1137
  %v1292 = vpop.f32.mrb[0].mxu0
  %v1293 = vadd.f32 0.0, %v1292
  %v1294 = vpop.f32.mrb[0].mxu0
  %1295 = vmatprep.mubr.f32.mxu0 0.0
  %1296 = vmatmul.mubr.f32.gmra.mrb[0].mxu0 %v1140
  %v1297 = vpop.f32.mrb[0].mxu0
  %v1298 = vadd.f32 0.0, %v1297
  %v1299 = vpop.f32.mrb[0].mxu0
  %1300 = vmatprep.mubr.f32.mxu0 0.0
  %1301 = vmatmul.mubr.f32.gmra.mrb[0].mxu0 %v1143
  %v1302 = vpop.f32.mrb[0].mxu0
  %v1303 = vadd.f32 0.0, %v1302
  %v1304 = vpop.f32.mrb[0].mxu0
  %1305 = vmatprep.mubr.f32.mxu0 0.0
  %1306 = vmatmul.mubr.f32.gmra.mrb[0].mxu0 %v1146
  %v1307 = vpop.f32.mrb[0].mxu0
  %v1308 = vadd.f32 0.0, %v1307
  %v1309 = vpop.f32.mrb[0].mxu0
  %1310 = vmatprep.mubr.f32.mxu0 0.0
  %1311 = vmatmul.mubr.f32.gmra.mrb[0].mxu0 %v1149
  %v1312 = vpop.f32.mrb[0].mxu0
  %v1313 = vadd.f32 0.0, %v1312
  %v1314 = vpop.f32.mrb[0].mxu0
  %1315 = vmatprep.mubr.f32.mxu0 0.0
  %1316 = vmatmul.mubr.f32.gmra.mrb[0].mxu0 %v1152
  %v1317 = vpop.f32.mrb[0].mxu0
  %v1318 = vadd.f32 0.0, %v1317
  %v1319 = vpop.f32.mrb[0].mxu0
  %1320 = vmatprep.mubr.f32.mxu0 0.0
  %1321 = vmatmul.mubr.f32.gmra.mrb[0].mxu0 %v1155
  %v1322 = vpop.f32.mrb[0].mxu0
  %v1323 = vadd.f32 0.0, %v1322
  %v1324 = vpop.f32.mrb[0].mxu0
  %1325 = vmatprep.mubr.f32.mxu0 0.0
  %1326 = vmatmul.mubr.f32.gmra.mrb[0].mxu0 %v1158
  %v1327 = vpop.f32.mrb[0].mxu0
  %v1328 = vadd.f32 0.0, %v1327
  %v1329 = vpop.f32.mrb[0].mxu0
  %1330 = vmatprep.mubr.f32.mxu0 0.0
  %1331 = vmatmul.mubr.f32.gmra.mrb[0].mxu0 %v1161
  %v1332 = vpop.f32.mrb[0].mxu0
  %v1333 = vadd.f32 0.0, %v1332
  %v1334 = vpop.f32.mrb[0].mxu0
  %1335 = vmatprep.mubr.f32.mxu0 0.0
  %1336 = vmatmul.mubr.f32.gmra.mrb[0].mxu0 %v1164
  %v1337 = vpop.f32.mrb[0].mxu0
  %v1338 = vadd.f32 0.0, %v1337
  %v1339 = vpop.f32.mrb[0].mxu0
  %1340 = vmatprep.mubr.f32.mxu0 0.0
  %1341 = vmatmul.mubr.f32.gmra.mrb[0].mxu0 %v1167
  %v1342 = vpop.f32.mrb[0].mxu0
  %v1343 = vadd.f32 0.0, %v1342
  %v1344 = vpop.f32.mrb[0].mxu0
  %1345 = vmatprep.mubr.f32.mxu0 0.0
  %1346 = vmatmul.mubr.f32.gmra.mrb[0].mxu0 %v1170
  %v1347 = vpop.f32.mrb[0].mxu0
  %v1348 = vadd.f32 0.0, %v1347
  %v1349 = vpop.f32.mrb[0].mxu0
  %1350 = vmatprep.mubr.f32.mxu0 0.0
  %1351 = vmatmul.mubr.f32.gmra.mrb[0].mxu0 %v1173
  %v1352 = vpop.f32.mrb[0].mxu0
  %v1353 = vadd.f32 0.0, %v1352
  %v1354 = vpop.f32.mrb[0].mxu0
  %1355 = vmatprep.mubr.f32.mxu0 0.0
  %1356 = vmatmul.mubr.f32.gmra.mrb[0].mxu0 %v1176
  %v1357 = vpop.f32.mrb[0].mxu0
  %v1358 = vadd.f32 0.0, %v1357
  %v1359 = vpop.f32.mrb[0].mxu0
  %1360 = vmatprep.mubr.f32.mxu0 0.0
  %1361 = vmatmul.mubr.f32.gmra.mrb[0].mxu0 %v1179
  %v1362 = vpop.f32.mrb[0].mxu0
  %v1363 = vadd.f32 0.0, %v1362
  %v1364 = vpop.f32.mrb[0].mxu0
  %1365 = vmatprep.mubr.f32.mxu0 0.0
  %1366 = vmatmul.mubr.f32.gmra.mrb[0].mxu0 %v1182
  %v1367 = vpop.f32.mrb[0].mxu0
  %v1368 = vadd.f32 0.0, %v1367
  %v1369 = vpop.f32.mrb[0].mxu0
  %1370 = vmatprep.mubr.f32.mxu0 0.0
  %1371 = vmatmul.mubr.f32.gmra.mrb[0].mxu0 %v1185
  %v1372 = vpop.f32.mrb[0].mxu0
  %v1373 = vadd.f32 0.0, %v1372
  %v1374 = vpop.f32.mrb[0].mxu0
  %1375 = vmatprep.mubr.f32.mxu0 0.0
  %1376 = vmatmul.mubr.f32.gmra.mrb[0].mxu0 %v1188
  %v1377 = vpop.f32.mrb[0].mxu0
  %v1378 = vadd.f32 0.0, %v1377
  %v1379 = vpop.f32.mrb[0].mxu0
  %1380 = vmatprep.mubr.f32.mxu0 0.0
  %1381 = vmatmul.mubr.f32.gmra.mrb[0].mxu0 %v1191
  %v1382 = vpop.f32.mrb[0].mxu0
  %v1383 = vadd.f32 0.0, %v1382
  %v1384 = vpop.f32.mrb[0].mxu0
  %1385 = vmatprep.mubr.f32.mxu0 0.0
  %1386 = vmatmul.mubr.f32.gmra.mrb[0].mxu0 %v1194
  %v1387 = vpop.f32.mrb[0].mxu0
  %v1388 = vadd.f32 0.0, %v1387
  %v1389 = vpop.f32.mrb[0].mxu0
  %1390 = vdwg.mxu0
  %v1391 = vrot.slane %v604, 4
  %v1392 = vrot.slane %v605, 4
  %v1393 = vrot.slane %v606, 4
  %v1394 = vrot.slane %v607, 4
  %v1395 = vrot.slane %v608, 4
  %v1396 = vrot.slane %v609, 4
  %v1397 = vrot.slane %v610, 4
  %v1398 = vrot.slane %v611, 4
  %v1399 = vrot.slane %v612, 4
  %v1400 = vrot.slane %v613, 4
  %v1401 = vrot.slane %v614, 4
  %v1402 = vrot.slane %v615, 4
  %v1403 = vrot.slane %v616, 4
  %v1404 = vrot.slane %v617, 4
  %v1405 = vrot.slane %v618, 4
  %v1406 = vrot.slane %v619, 4
  %v1407 = vrot.slane %v620, 4
  %v1408 = vrot.slane %v621, 4
  %v1409 = vrot.slane %v622, 4
  %v1410 = vrot.slane %v623, 4
  %v1411 = vrot.slane %v624, 4
  %v1412 = vrot.slane %v625, 4
  %v1413 = vrot.slane %v626, 4
  %v1414 = vrot.slane %v627, 4
  %v1415 = vrot.slane %v628, 4
  %v1416 = vrot.slane %v629, 4
  %v1417 = vrot.slane %v630, 4
  %vm1418 = vcmp.lt.s32.totalorder %v75, 4
  %v1419 = vsel %vm1418, %v1416, %v1417
  %v1420 = vsel %vm1418, %v1415, %v1416
  %v1421 = vsel %vm1418, %v1414, %v1415
  %v1422 = vsel %vm1418, %v1413, %v1414
  %v1423 = vsel %vm1418, %v1412, %v1413
  %v1424 = vsel %vm1418, %v1411, %v1412
  %v1425 = vsel %vm1418, %v1410, %v1411
  %v1426 = vsel %vm1418, %v1409, %v1410
  %v1427 = vsel %vm1418, %v1408, %v1409
  %v1428 = vsel %vm1418, %v1407, %v1408
  %v1429 = vsel %vm1418, %v1406, %v1407
  %v1430 = vsel %vm1418, %v1405, %v1406
  %v1431 = vsel %vm1418, %v1404, %v1405
  %v1432 = vsel %vm1418, %v1403, %v1404
  %v1433 = vsel %vm1418, %v1402, %v1403
  %v1434 = vsel %vm1418, %v1401, %v1402
  %v1435 = vsel %vm1418, %v1400, %v1401
  %v1436 = vsel %vm1418, %v1399, %v1400
  %v1437 = vsel %vm1418, %v1398, %v1399
  %v1438 = vsel %vm1418, %v1397, %v1398
  %v1439 = vsel %vm1418, %v1396, %v1397
  %v1440 = vsel %vm1418, %v1395, %v1396
  %v1441 = vsel %vm1418, %v1394, %v1395
  %v1442 = vsel %vm1418, %v1393, %v1394
  %v1443 = vsel %vm1418, %v1392, %v1393
  %v1444 = vsel %vm1418, %v1391, %v1392
  %s1445 = scalar_lea.vmem %s3, 384
  %v1446 = vld [vmem:[%s1445] sm:$0xff]
  %v1447 = vld [vmem:[%s1445 + $0x8] sm:$0xff]
  %v1448 = vld [vmem:[%s1445 + $0x10] sm:$0xff]
  %v1449 = vld [vmem:[%s1445 + $0x18] sm:$0xff]
  %v1450 = vld [vmem:[%s1445 + $0x20] sm:$0xff]
  %v1451 = vld [vmem:[%s1445 + $0x28] sm:$0xff]
  %v1452 = vld [vmem:[%s1445 + $0x30] sm:$0xff]
  %v1453 = vld [vmem:[%s1445 + $0x38] sm:$0xff]
  %v1454 = vld [vmem:[%s1445 + $0x40] sm:$0xff]
  %v1455 = vld [vmem:[%s1445 + $0x48] sm:$0xff]
  %v1456 = vld [vmem:[%s1445 + $0x50] sm:$0xff]
  %v1457 = vld [vmem:[%s1445 + $0x58] sm:$0xff]
  %v1459 = vsel %vm710, %v1444, 0
  %v1462 = vsel %vm710, %v1443, 0
  %v1465 = vsel %vm710, %v1442, 0
  %v1468 = vsel %vm710, %v1441, 0
  %v1471 = vsel %vm710, %v1440, 0
  %v1474 = vsel %vm710, %v1439, 0
  %v1477 = vsel %vm710, %v1438, 0
  %v1480 = vsel %vm710, %v1437, 0
  %v1483 = vsel %vm710, %v1436, 0
  %v1486 = vsel %vm710, %v1435, 0
  %v1489 = vsel %vm710, %v1434, 0
  %v1492 = vsel %vm710, %v1433, 0
  %v1495 = vsel %vm710, %v1432, 0
  %v1498 = vsel %vm710, %v1431, 0
  %v1501 = vsel %vm710, %v1430, 0
  %v1504 = vsel %vm710, %v1429, 0
  %v1507 = vsel %vm710, %v1428, 0
  %v1510 = vsel %vm710, %v1427, 0
  %v1513 = vsel %vm710, %v1426, 0
  %v1516 = vsel %vm710, %v1425, 0
  %v1519 = vsel %vm710, %v1424, 0
  %v1522 = vsel %vm710, %v1423, 0
  %v1525 = vsel %vm710, %v1422, 0
  %v1528 = vsel %vm710, %v1421, 0
  %v1531 = vsel %vm710, %v1420, 0
  %v1534 = vsel %vm710, %v1419, 0
  %1536 = vmatprep.subr.mxu0 0.0
  %1537 = vmatpush1.msra.mxu0 %v1446
  %1538 = vmatprep.subr.mxu0 0.0
  %1539 = vmatpush1.msra.mxu0 %v1447
  %1540 = vmatprep.subr.mxu0 0.0
  %1541 = vmatpush1.msra.mxu0 %v1448
  %1542 = vmatprep.subr.mxu0 0.0
  %1543 = vmatpush1.msra.mxu0 %v1449
  %1544 = vmatprep.subr.mxu0 0.0
  %1545 = vmatpush1.msra.mxu0 %v1450
  %1546 = vmatprep.subr.mxu0 0.0
  %1547 = vmatpush1.msra.mxu0 %v1451
  %1548 = vmatprep.subr.mxu0 0.0
  %1549 = vmatpush1.msra.mxu0 %v1452
  %1550 = vmatprep.subr.mxu0 0.0
  %1551 = vmatpush1.msra.mxu0 %v1453
  %1552 = vmatprep.subr.mxu0 0.0
  %1553 = vmatpush1.msra.mxu0 %v1454
  %1554 = vmatprep.subr.mxu0 0.0
  %1555 = vmatpush1.msra.mxu0 %v1455
  %1556 = vmatprep.subr.mxu0 0.0
  %1557 = vmatpush1.msra.mxu0 %v1456
  %1558 = vmatprep.subr.mxu0 0.0
  %1559 = vmatpush1.msra.mxu0 %v1457
  %1560 = vmatprep.subr.mxu0 0.0
  %1561 = vmatpush1.msra.mxu0 0.0
  %1562 = vmatprep.subr.mxu0 0.0
  %1563 = vmatpush1.msra.mxu0 0.0
  %1564 = vmatprep.subr.mxu0 0.0
  %1565 = vmatpush1.msra.mxu0 0.0
  %1566 = vmatprep.subr.mxu0 0.0
  %1567 = vmatpush1.msra.mxu0 0.0
  %1568 = vmatprep.subr.mxu0 0.0
  %1569 = vmatpush1.msra.mxu0 0.0
  %1570 = vmatprep.subr.mxu0 0.0
  %1571 = vmatpush1.msra.mxu0 0.0
  %1572 = vmatprep.subr.mxu0 0.0
  %1573 = vmatpush1.msra.mxu0 0.0
  %1574 = vmatprep.subr.mxu0 0.0
  %1575 = vmatpush1.msra.mxu0 0.0
  %1576 = vmatprep.subr.mxu0 0.0
  %1577 = vmatpush1.msra.mxu0 0.0
  %1578 = vmatprep.subr.mxu0 0.0
  %1579 = vmatpush1.msra.mxu0 0.0
  %1580 = vmatprep.subr.mxu0 0.0
  %1581 = vmatpush1.msra.mxu0 0.0
  %1582 = vmatprep.subr.mxu0 0.0
  %1583 = vmatpush1.msra.mxu0 0.0
  %1584 = vmatprep.subr.mxu0 0.0
  %1585 = vmatpush1.msra.mxu0 0.0
  %1586 = vmatprep.subr.mxu0 0.0
  %1587 = vmatpush1.msra.mxu0 0.0
  %1588 = vmatprep.subr.mxu0 0.0
  %1589 = vmatpush1.msra.mxu0 0.0
  %1590 = vmatprep.subr.mxu0 0.0
  %1591 = vmatpush1.msra.mxu0 0.0
  %1592 = vmatprep.subr.mxu0 0.0
  %1593 = vmatpush1.msra.mxu0 0.0
  %1594 = vmatprep.subr.mxu0 0.0
  %1595 = vmatpush1.msra.mxu0 0.0
  %1596 = vmatprep.subr.mxu0 0.0
  %1597 = vmatpush1.msra.mxu0 0.0
  %1598 = vmatprep.subr.mxu0 0.0
  %1599 = vmatpush1.msra.mxu0 0.0
  %1600 = vmatprep.mubr.f32.mxu0 0.0
  %1601 = vmatmul.mubr.f32.gmra.mrb[0].mxu0 %v1459
  %v1602 = vpop.f32.mrb[0].mxu0
  %v1603 = vadd.f32 0.0, %v1602
  %v1604 = vpop.f32.mrb[0].mxu0
  %1605 = vmatprep.mubr.f32.mxu0 0.0
  %1606 = vmatmul.mubr.f32.gmra.mrb[0].mxu0 %v1462
  %v1607 = vpop.f32.mrb[0].mxu0
  %v1608 = vadd.f32 0.0, %v1607
  %v1609 = vpop.f32.mrb[0].mxu0
  %1610 = vmatprep.mubr.f32.mxu0 0.0
  %1611 = vmatmul.mubr.f32.gmra.mrb[0].mxu0 %v1465
  %v1612 = vpop.f32.mrb[0].mxu0
  %v1613 = vadd.f32 0.0, %v1612
  %v1614 = vpop.f32.mrb[0].mxu0
  %1615 = vmatprep.mubr.f32.mxu0 0.0
  %1616 = vmatmul.mubr.f32.gmra.mrb[0].mxu0 %v1468
  %v1617 = vpop.f32.mrb[0].mxu0
  %v1618 = vadd.f32 0.0, %v1617
  %v1619 = vpop.f32.mrb[0].mxu0
  %1620 = vmatprep.mubr.f32.mxu0 0.0
  %1621 = vmatmul.mubr.f32.gmra.mrb[0].mxu0 %v1471
  %v1622 = vpop.f32.mrb[0].mxu0
  %v1623 = vadd.f32 0.0, %v1622
  %v1624 = vpop.f32.mrb[0].mxu0
  %1625 = vmatprep.mubr.f32.mxu0 0.0
  %1626 = vmatmul.mubr.f32.gmra.mrb[0].mxu0 %v1474
  %v1627 = vpop.f32.mrb[0].mxu0
  %v1628 = vadd.f32 0.0, %v1627
  %v1629 = vpop.f32.mrb[0].mxu0
  %1630 = vmatprep.mubr.f32.mxu0 0.0
  %1631 = vmatmul.mubr.f32.gmra.mrb[0].mxu0 %v1477
  %v1632 = vpop.f32.mrb[0].mxu0
  %v1633 = vadd.f32 0.0, %v1632
  %v1634 = vpop.f32.mrb[0].mxu0
  %1635 = vmatprep.mubr.f32.mxu0 0.0
  %1636 = vmatmul.mubr.f32.gmra.mrb[0].mxu0 %v1480
  %v1637 = vpop.f32.mrb[0].mxu0
  %v1638 = vadd.f32 0.0, %v1637
  %v1639 = vpop.f32.mrb[0].mxu0
  %1640 = vmatprep.mubr.f32.mxu0 0.0
  %1641 = vmatmul.mubr.f32.gmra.mrb[0].mxu0 %v1483
  %v1642 = vpop.f32.mrb[0].mxu0
  %v1643 = vadd.f32 0.0, %v1642
  %v1644 = vpop.f32.mrb[0].mxu0
  %1645 = vmatprep.mubr.f32.mxu0 0.0
  %1646 = vmatmul.mubr.f32.gmra.mrb[0].mxu0 %v1486
  %v1647 = vpop.f32.mrb[0].mxu0
  %v1648 = vadd.f32 0.0, %v1647
  %v1649 = vpop.f32.mrb[0].mxu0
  %1650 = vmatprep.mubr.f32.mxu0 0.0
  %1651 = vmatmul.mubr.f32.gmra.mrb[0].mxu0 %v1489
  %v1652 = vpop.f32.mrb[0].mxu0
  %v1653 = vadd.f32 0.0, %v1652
  %v1654 = vpop.f32.mrb[0].mxu0
  %1655 = vmatprep.mubr.f32.mxu0 0.0
  %1656 = vmatmul.mubr.f32.gmra.mrb[0].mxu0 %v1492
  %v1657 = vpop.f32.mrb[0].mxu0
  %v1658 = vadd.f32 0.0, %v1657
  %v1659 = vpop.f32.mrb[0].mxu0
  %1660 = vmatprep.mubr.f32.mxu0 0.0
  %1661 = vmatmul.mubr.f32.gmra.mrb[0].mxu0 %v1495
  %v1662 = vpop.f32.mrb[0].mxu0
  %v1663 = vadd.f32 0.0, %v1662
  %v1664 = vpop.f32.mrb[0].mxu0
  %1665 = vmatprep.mubr.f32.mxu0 0.0
  %1666 = vmatmul.mubr.f32.gmra.mrb[0].mxu0 %v1498
  %v1667 = vpop.f32.mrb[0].mxu0
  %v1668 = vadd.f32 0.0, %v1667
  %v1669 = vpop.f32.mrb[0].mxu0
  %1670 = vmatprep.mubr.f32.mxu0 0.0
  %1671 = vmatmul.mubr.f32.gmra.mrb[0].mxu0 %v1501
  %v1672 = vpop.f32.mrb[0].mxu0
  %v1673 = vadd.f32 0.0, %v1672
  %v1674 = vpop.f32.mrb[0].mxu0
  %1675 = vmatprep.mubr.f32.mxu0 0.0
  %1676 = vmatmul.mubr.f32.gmra.mrb[0].mxu0 %v1504
  %v1677 = vpop.f32.mrb[0].mxu0
  %v1678 = vadd.f32 0.0, %v1677
  %v1679 = vpop.f32.mrb[0].mxu0
  %1680 = vmatprep.mubr.f32.mxu0 0.0
  %1681 = vmatmul.mubr.f32.gmra.mrb[0].mxu0 %v1507
  %v1682 = vpop.f32.mrb[0].mxu0
  %v1683 = vadd.f32 0.0, %v1682
  %v1684 = vpop.f32.mrb[0].mxu0
  %1685 = vmatprep.mubr.f32.mxu0 0.0
  %1686 = vmatmul.mubr.f32.gmra.mrb[0].mxu0 %v1510
  %v1687 = vpop.f32.mrb[0].mxu0
  %v1688 = vadd.f32 0.0, %v1687
  %v1689 = vpop.f32.mrb[0].mxu0
  %1690 = vmatprep.mubr.f32.mxu0 0.0
  %1691 = vmatmul.mubr.f32.gmra.mrb[0].mxu0 %v1513
  %v1692 = vpop.f32.mrb[0].mxu0
  %v1693 = vadd.f32 0.0, %v1692
  %v1694 = vpop.f32.mrb[0].mxu0
  %1695 = vmatprep.mubr.f32.mxu0 0.0
  %1696 = vmatmul.mubr.f32.gmra.mrb[0].mxu0 %v1516
  %v1697 = vpop.f32.mrb[0].mxu0
  %v1698 = vadd.f32 0.0, %v1697
  %v1699 = vpop.f32.mrb[0].mxu0
  %1700 = vmatprep.mubr.f32.mxu0 0.0
  %1701 = vmatmul.mubr.f32.gmra.mrb[0].mxu0 %v1519
  %v1702 = vpop.f32.mrb[0].mxu0
  %v1703 = vadd.f32 0.0, %v1702
  %v1704 = vpop.f32.mrb[0].mxu0
  %1705 = vmatprep.mubr.f32.mxu0 0.0
  %1706 = vmatmul.mubr.f32.gmra.mrb[0].mxu0 %v1522
  %v1707 = vpop.f32.mrb[0].mxu0
  %v1708 = vadd.f32 0.0, %v1707
  %v1709 = vpop.f32.mrb[0].mxu0
  %1710 = vmatprep.mubr.f32.mxu0 0.0
  %1711 = vmatmul.mubr.f32.gmra.mrb[0].mxu0 %v1525
  %v1712 = vpop.f32.mrb[0].mxu0
  %v1713 = vadd.f32 0.0, %v1712
  %v1714 = vpop.f32.mrb[0].mxu0
  %1715 = vmatprep.mubr.f32.mxu0 0.0
  %1716 = vmatmul.mubr.f32.gmra.mrb[0].mxu0 %v1528
  %v1717 = vpop.f32.mrb[0].mxu0
  %v1718 = vadd.f32 0.0, %v1717
  %v1719 = vpop.f32.mrb[0].mxu0
  %1720 = vmatprep.mubr.f32.mxu0 0.0
  %1721 = vmatmul.mubr.f32.gmra.mrb[0].mxu0 %v1531
  %v1722 = vpop.f32.mrb[0].mxu0
  %v1723 = vadd.f32 0.0, %v1722
  %v1724 = vpop.f32.mrb[0].mxu0
  %1725 = vmatprep.mubr.f32.mxu0 0.0
  %1726 = vmatmul.mubr.f32.gmra.mrb[0].mxu0 %v1534
  %v1727 = vpop.f32.mrb[0].mxu0
  %v1728 = vadd.f32 0.0, %v1727
  %v1729 = vpop.f32.mrb[0].mxu0
  %1730 = vdwg.mxu0
  %v1732 = vsel %vm710, %v604, 0
  %v1735 = vsel %vm710, %v605, 0
  %v1738 = vsel %vm710, %v606, 0
  %v1741 = vsel %vm710, %v607, 0
  %v1744 = vsel %vm710, %v608, 0
  %v1747 = vsel %vm710, %v609, 0
  %v1750 = vsel %vm710, %v610, 0
  %v1753 = vsel %vm710, %v611, 0
  %v1756 = vsel %vm710, %v612, 0
  %v1759 = vsel %vm710, %v613, 0
  %v1762 = vsel %vm710, %v614, 0
  %v1765 = vsel %vm710, %v615, 0
  %v1768 = vsel %vm710, %v616, 0
  %v1771 = vsel %vm710, %v617, 0
  %v1774 = vsel %vm710, %v618, 0
  %v1777 = vsel %vm710, %v619, 0
  %v1780 = vsel %vm710, %v620, 0
  %v1783 = vsel %vm710, %v621, 0
  %v1786 = vsel %vm710, %v622, 0
  %v1789 = vsel %vm710, %v623, 0
  %v1792 = vsel %vm710, %v624, 0
  %v1795 = vsel %vm710, %v625, 0
  %v1798 = vsel %vm710, %v626, 0
  %v1801 = vsel %vm710, %v627, 0
  %v1804 = vsel %vm710, %v628, 0
  %v1807 = vsel %vm710, %v629, 0
  %1809 = vmatprep.subr.mxu0 0.0
  %1810 = vmatpush1.msra.mxu0 %v631
  %1811 = vmatprep.subr.mxu0 0.0
  %1812 = vmatpush1.msra.mxu0 %v632
  %1813 = vmatprep.subr.mxu0 0.0
  %1814 = vmatpush1.msra.mxu0 %v633
  %1815 = vmatprep.subr.mxu0 0.0
  %1816 = vmatpush1.msra.mxu0 %v634
  %1817 = vmatprep.subr.mxu0 0.0
  %1818 = vmatpush1.msra.mxu0 %v635
  %1819 = vmatprep.subr.mxu0 0.0
  %1820 = vmatpush1.msra.mxu0 %v636
  %1821 = vmatprep.subr.mxu0 0.0
  %1822 = vmatpush1.msra.mxu0 %v637
  %1823 = vmatprep.subr.mxu0 0.0
  %1824 = vmatpush1.msra.mxu0 %v638
  %1825 = vmatprep.subr.mxu0 0.0
  %1826 = vmatpush1.msra.mxu0 %v639
  %1827 = vmatprep.subr.mxu0 0.0
  %1828 = vmatpush1.msra.mxu0 %v640
  %1829 = vmatprep.subr.mxu0 0.0
  %1830 = vmatpush1.msra.mxu0 %v641
  %1831 = vmatprep.subr.mxu0 0.0
  %1832 = vmatpush1.msra.mxu0 %v642
  %1833 = vmatprep.subr.mxu0 0.0
  %1834 = vmatpush1.msra.mxu0 0.0
  %1835 = vmatprep.subr.mxu0 0.0
  %1836 = vmatpush1.msra.mxu0 0.0
  %1837 = vmatprep.subr.mxu0 0.0
  %1838 = vmatpush1.msra.mxu0 0.0
  %1839 = vmatprep.subr.mxu0 0.0
  %1840 = vmatpush1.msra.mxu0 0.0
  %1841 = vmatprep.subr.mxu0 0.0
  %1842 = vmatpush1.msra.mxu0 0.0
  %1843 = vmatprep.subr.mxu0 0.0
  %1844 = vmatpush1.msra.mxu0 0.0
  %1845 = vmatprep.subr.mxu0 0.0
  %1846 = vmatpush1.msra.mxu0 0.0
  %1847 = vmatprep.subr.mxu0 0.0
  %1848 = vmatpush1.msra.mxu0 0.0
  %1849 = vmatprep.subr.mxu0 0.0
  %1850 = vmatpush1.msra.mxu0 0.0
  %1851 = vmatprep.subr.mxu0 0.0
  %1852 = vmatpush1.msra.mxu0 0.0
  %1853 = vmatprep.subr.mxu0 0.0
  %1854 = vmatpush1.msra.mxu0 0.0
  %1855 = vmatprep.subr.mxu0 0.0
  %1856 = vmatpush1.msra.mxu0 0.0
  %1857 = vmatprep.subr.mxu0 0.0
  %1858 = vmatpush1.msra.mxu0 0.0
  %1859 = vmatprep.subr.mxu0 0.0
  %1860 = vmatpush1.msra.mxu0 0.0
  %1861 = vmatprep.subr.mxu0 0.0
  %1862 = vmatpush1.msra.mxu0 0.0
  %1863 = vmatprep.subr.mxu0 0.0
  %1864 = vmatpush1.msra.mxu0 0.0
  %1865 = vmatprep.subr.mxu0 0.0
  %1866 = vmatpush1.msra.mxu0 0.0
  %1867 = vmatprep.subr.mxu0 0.0
  %1868 = vmatpush1.msra.mxu0 0.0
  %1869 = vmatprep.subr.mxu0 0.0
  %1870 = vmatpush1.msra.mxu0 0.0
  %1871 = vmatprep.subr.mxu0 0.0
  %1872 = vmatpush1.msra.mxu0 0.0
  %1873 = vmatprep.mubr.f32.mxu0 0.0
  %1874 = vmatmul.mubr.f32.gmra.mrb[0].mxu0 %v1732
  %v1875 = vpop.f32.mrb[0].mxu0
  %v1876 = vadd.f32 %v856, %v1875
  %v1877 = vpop.f32.mrb[0].mxu0
  %1878 = vmatprep.mubr.f32.mxu0 0.0
  %1879 = vmatmul.mubr.f32.gmra.mrb[0].mxu0 %v1735
  %v1880 = vpop.f32.mrb[0].mxu0
  %v1881 = vadd.f32 %v861, %v1880
  %v1882 = vpop.f32.mrb[0].mxu0
  %1883 = vmatprep.mubr.f32.mxu0 0.0
  %1884 = vmatmul.mubr.f32.gmra.mrb[0].mxu0 %v1738
  %v1885 = vpop.f32.mrb[0].mxu0
  %v1886 = vadd.f32 %v866, %v1885
  %v1887 = vpop.f32.mrb[0].mxu0
  %1888 = vmatprep.mubr.f32.mxu0 0.0
  %1889 = vmatmul.mubr.f32.gmra.mrb[0].mxu0 %v1741
  %v1890 = vpop.f32.mrb[0].mxu0
  %v1891 = vadd.f32 %v871, %v1890
  %v1892 = vpop.f32.mrb[0].mxu0
  %1893 = vmatprep.mubr.f32.mxu0 0.0
  %1894 = vmatmul.mubr.f32.gmra.mrb[0].mxu0 %v1744
  %v1895 = vpop.f32.mrb[0].mxu0
  %v1896 = vadd.f32 %v876, %v1895
  %v1897 = vpop.f32.mrb[0].mxu0
  %1898 = vmatprep.mubr.f32.mxu0 0.0
  %1899 = vmatmul.mubr.f32.gmra.mrb[0].mxu0 %v1747
  %v1900 = vpop.f32.mrb[0].mxu0
  %v1901 = vadd.f32 %v881, %v1900
  %v1902 = vpop.f32.mrb[0].mxu0
  %1903 = vmatprep.mubr.f32.mxu0 0.0
  %1904 = vmatmul.mubr.f32.gmra.mrb[0].mxu0 %v1750
  %v1905 = vpop.f32.mrb[0].mxu0
  %v1906 = vadd.f32 %v886, %v1905
  %v1907 = vpop.f32.mrb[0].mxu0
  %1908 = vmatprep.mubr.f32.mxu0 0.0
  %1909 = vmatmul.mubr.f32.gmra.mrb[0].mxu0 %v1753
  %v1910 = vpop.f32.mrb[0].mxu0
  %v1911 = vadd.f32 %v891, %v1910
  %v1912 = vpop.f32.mrb[0].mxu0
  %1913 = vmatprep.mubr.f32.mxu0 0.0
  %1914 = vmatmul.mubr.f32.gmra.mrb[0].mxu0 %v1756
  %v1915 = vpop.f32.mrb[0].mxu0
  %v1916 = vadd.f32 %v896, %v1915
  %v1917 = vpop.f32.mrb[0].mxu0
  %1918 = vmatprep.mubr.f32.mxu0 0.0
  %1919 = vmatmul.mubr.f32.gmra.mrb[0].mxu0 %v1759
  %v1920 = vpop.f32.mrb[0].mxu0
  %v1921 = vadd.f32 %v901, %v1920
  %v1922 = vpop.f32.mrb[0].mxu0
  %1923 = vmatprep.mubr.f32.mxu0 0.0
  %1924 = vmatmul.mubr.f32.gmra.mrb[0].mxu0 %v1762
  %v1925 = vpop.f32.mrb[0].mxu0
  %v1926 = vadd.f32 %v906, %v1925
  %v1927 = vpop.f32.mrb[0].mxu0
  %1928 = vmatprep.mubr.f32.mxu0 0.0
  %1929 = vmatmul.mubr.f32.gmra.mrb[0].mxu0 %v1765
  %v1930 = vpop.f32.mrb[0].mxu0
  %v1931 = vadd.f32 %v911, %v1930
  %v1932 = vpop.f32.mrb[0].mxu0
  %1933 = vmatprep.mubr.f32.mxu0 0.0
  %1934 = vmatmul.mubr.f32.gmra.mrb[0].mxu0 %v1768
  %v1935 = vpop.f32.mrb[0].mxu0
  %v1936 = vadd.f32 %v916, %v1935
  %v1937 = vpop.f32.mrb[0].mxu0
  %1938 = vmatprep.mubr.f32.mxu0 0.0
  %1939 = vmatmul.mubr.f32.gmra.mrb[0].mxu0 %v1771
  %v1940 = vpop.f32.mrb[0].mxu0
  %v1941 = vadd.f32 %v921, %v1940
  %v1942 = vpop.f32.mrb[0].mxu0
  %1943 = vmatprep.mubr.f32.mxu0 0.0
  %1944 = vmatmul.mubr.f32.gmra.mrb[0].mxu0 %v1774
  %v1945 = vpop.f32.mrb[0].mxu0
  %v1946 = vadd.f32 %v926, %v1945
  %v1947 = vpop.f32.mrb[0].mxu0
  %1948 = vmatprep.mubr.f32.mxu0 0.0
  %1949 = vmatmul.mubr.f32.gmra.mrb[0].mxu0 %v1777
  %v1950 = vpop.f32.mrb[0].mxu0
  %v1951 = vadd.f32 %v931, %v1950
  %v1952 = vpop.f32.mrb[0].mxu0
  %1953 = vmatprep.mubr.f32.mxu0 0.0
  %1954 = vmatmul.mubr.f32.gmra.mrb[0].mxu0 %v1780
  %v1955 = vpop.f32.mrb[0].mxu0
  %v1956 = vadd.f32 %v936, %v1955
  %v1957 = vpop.f32.mrb[0].mxu0
  %1958 = vmatprep.mubr.f32.mxu0 0.0
  %1959 = vmatmul.mubr.f32.gmra.mrb[0].mxu0 %v1783
  %v1960 = vpop.f32.mrb[0].mxu0
  %v1961 = vadd.f32 %v941, %v1960
  %v1962 = vpop.f32.mrb[0].mxu0
  %1963 = vmatprep.mubr.f32.mxu0 0.0
  %1964 = vmatmul.mubr.f32.gmra.mrb[0].mxu0 %v1786
  %v1965 = vpop.f32.mrb[0].mxu0
  %v1966 = vadd.f32 %v946, %v1965
  %v1967 = vpop.f32.mrb[0].mxu0
  %1968 = vmatprep.mubr.f32.mxu0 0.0
  %1969 = vmatmul.mubr.f32.gmra.mrb[0].mxu0 %v1789
  %v1970 = vpop.f32.mrb[0].mxu0
  %v1971 = vadd.f32 %v951, %v1970
  %v1972 = vpop.f32.mrb[0].mxu0
  %1973 = vmatprep.mubr.f32.mxu0 0.0
  %1974 = vmatmul.mubr.f32.gmra.mrb[0].mxu0 %v1792
  %v1975 = vpop.f32.mrb[0].mxu0
  %v1976 = vadd.f32 %v956, %v1975
  %v1977 = vpop.f32.mrb[0].mxu0
  %1978 = vmatprep.mubr.f32.mxu0 0.0
  %1979 = vmatmul.mubr.f32.gmra.mrb[0].mxu0 %v1795
  %v1980 = vpop.f32.mrb[0].mxu0
  %v1981 = vadd.f32 %v961, %v1980
  %v1982 = vpop.f32.mrb[0].mxu0
  %1983 = vmatprep.mubr.f32.mxu0 0.0
  %1984 = vmatmul.mubr.f32.gmra.mrb[0].mxu0 %v1798
  %v1985 = vpop.f32.mrb[0].mxu0
  %v1986 = vadd.f32 %v966, %v1985
  %v1987 = vpop.f32.mrb[0].mxu0
  %1988 = vmatprep.mubr.f32.mxu0 0.0
  %1989 = vmatmul.mubr.f32.gmra.mrb[0].mxu0 %v1801
  %v1990 = vpop.f32.mrb[0].mxu0
  %v1991 = vadd.f32 %v971, %v1990
  %v1992 = vpop.f32.mrb[0].mxu0
  %1993 = vmatprep.mubr.f32.mxu0 0.0
  %1994 = vmatmul.mubr.f32.gmra.mrb[0].mxu0 %v1804
  %v1995 = vpop.f32.mrb[0].mxu0
  %v1996 = vadd.f32 %v976, %v1995
  %v1997 = vpop.f32.mrb[0].mxu0
  %1998 = vmatprep.mubr.f32.mxu0 0.0
  %1999 = vmatmul.mubr.f32.gmra.mrb[0].mxu0 %v1807
  %v2000 = vpop.f32.mrb[0].mxu0
  %v2001 = vadd.f32 %v981, %v2000
  %v2002 = vpop.f32.mrb[0].mxu0
  %2003 = vdwg.mxu0
  %v2005 = vsel %vm710, %v1037, 0
  %v2008 = vsel %vm710, %v1036, 0
  %v2011 = vsel %vm710, %v1035, 0
  %v2014 = vsel %vm710, %v1034, 0
  %v2017 = vsel %vm710, %v1033, 0
  %v2020 = vsel %vm710, %v1032, 0
  %v2023 = vsel %vm710, %v1031, 0
  %v2026 = vsel %vm710, %v1030, 0
  %v2029 = vsel %vm710, %v1029, 0
  %v2032 = vsel %vm710, %v1028, 0
  %v2035 = vsel %vm710, %v1027, 0
  %v2038 = vsel %vm710, %v1026, 0
  %v2041 = vsel %vm710, %v1025, 0
  %v2044 = vsel %vm710, %v1024, 0
  %v2047 = vsel %vm710, %v1023, 0
  %v2050 = vsel %vm710, %v1022, 0
  %v2053 = vsel %vm710, %v1021, 0
  %v2056 = vsel %vm710, %v1020, 0
  %v2059 = vsel %vm710, %v1019, 0
  %v2062 = vsel %vm710, %v1018, 0
  %v2065 = vsel %vm710, %v1017, 0
  %v2068 = vsel %vm710, %v1016, 0
  %v2071 = vsel %vm710, %v1015, 0
  %v2074 = vsel %vm710, %v1014, 0
  %v2077 = vsel %vm710, %v1013, 0
  %v2080 = vsel %vm710, %v1012, 0
  %2082 = vmatprep.subr.mxu0 0.0
  %2083 = vmatpush1.msra.mxu0 %v1039
  %2084 = vmatprep.subr.mxu0 0.0
  %2085 = vmatpush1.msra.mxu0 %v1040
  %2086 = vmatprep.subr.mxu0 0.0
  %2087 = vmatpush1.msra.mxu0 %v1041
  %2088 = vmatprep.subr.mxu0 0.0
  %2089 = vmatpush1.msra.mxu0 %v1042
  %2090 = vmatprep.subr.mxu0 0.0
  %2091 = vmatpush1.msra.mxu0 %v1043
  %2092 = vmatprep.subr.mxu0 0.0
  %2093 = vmatpush1.msra.mxu0 %v1044
  %2094 = vmatprep.subr.mxu0 0.0
  %2095 = vmatpush1.msra.mxu0 %v1045
  %2096 = vmatprep.subr.mxu0 0.0
  %2097 = vmatpush1.msra.mxu0 %v1046
  %2098 = vmatprep.subr.mxu0 0.0
  %2099 = vmatpush1.msra.mxu0 %v1047
  %2100 = vmatprep.subr.mxu0 0.0
  %2101 = vmatpush1.msra.mxu0 %v1048
  %2102 = vmatprep.subr.mxu0 0.0
  %2103 = vmatpush1.msra.mxu0 %v1049
  %2104 = vmatprep.subr.mxu0 0.0
  %2105 = vmatpush1.msra.mxu0 %v1050
  %2106 = vmatprep.subr.mxu0 0.0
  %2107 = vmatpush1.msra.mxu0 0.0
  %2108 = vmatprep.subr.mxu0 0.0
  %2109 = vmatpush1.msra.mxu0 0.0
  %2110 = vmatprep.subr.mxu0 0.0
  %2111 = vmatpush1.msra.mxu0 0.0
  %2112 = vmatprep.subr.mxu0 0.0
  %2113 = vmatpush1.msra.mxu0 0.0
  %2114 = vmatprep.subr.mxu0 0.0
  %2115 = vmatpush1.msra.mxu0 0.0
  %2116 = vmatprep.subr.mxu0 0.0
  %2117 = vmatpush1.msra.mxu0 0.0
  %2118 = vmatprep.subr.mxu0 0.0
  %2119 = vmatpush1.msra.mxu0 0.0
  %2120 = vmatprep.subr.mxu0 0.0
  %2121 = vmatpush1.msra.mxu0 0.0
  %2122 = vmatprep.subr.mxu0 0.0
  %2123 = vmatpush1.msra.mxu0 0.0
  %2124 = vmatprep.subr.mxu0 0.0
  %2125 = vmatpush1.msra.mxu0 0.0
  %2126 = vmatprep.subr.mxu0 0.0
  %2127 = vmatpush1.msra.mxu0 0.0
  %2128 = vmatprep.subr.mxu0 0.0
  %2129 = vmatpush1.msra.mxu0 0.0
  %2130 = vmatprep.subr.mxu0 0.0
  %2131 = vmatpush1.msra.mxu0 0.0
  %2132 = vmatprep.subr.mxu0 0.0
  %2133 = vmatpush1.msra.mxu0 0.0
  %2134 = vmatprep.subr.mxu0 0.0
  %2135 = vmatpush1.msra.mxu0 0.0
  %2136 = vmatprep.subr.mxu0 0.0
  %2137 = vmatpush1.msra.mxu0 0.0
  %2138 = vmatprep.subr.mxu0 0.0
  %2139 = vmatpush1.msra.mxu0 0.0
  %2140 = vmatprep.subr.mxu0 0.0
  %2141 = vmatpush1.msra.mxu0 0.0
  %2142 = vmatprep.subr.mxu0 0.0
  %2143 = vmatpush1.msra.mxu0 0.0
  %2144 = vmatprep.subr.mxu0 0.0
  %2145 = vmatpush1.msra.mxu0 0.0
  %2146 = vmatprep.mubr.f32.mxu0 0.0
  %2147 = vmatmul.mubr.f32.gmra.mrb[0].mxu0 %v2005
  %v2148 = vpop.f32.mrb[0].mxu0
  %v2149 = vadd.f32 %v1263, %v2148
  %v2150 = vpop.f32.mrb[0].mxu0
  %2151 = vmatprep.mubr.f32.mxu0 0.0
  %2152 = vmatmul.mubr.f32.gmra.mrb[0].mxu0 %v2008
  %v2153 = vpop.f32.mrb[0].mxu0
  %v2154 = vadd.f32 %v1268, %v2153
  %v2155 = vpop.f32.mrb[0].mxu0
  %2156 = vmatprep.mubr.f32.mxu0 0.0
  %2157 = vmatmul.mubr.f32.gmra.mrb[0].mxu0 %v2011
  %v2158 = vpop.f32.mrb[0].mxu0
  %v2159 = vadd.f32 %v1273, %v2158
  %v2160 = vpop.f32.mrb[0].mxu0
  %2161 = vmatprep.mubr.f32.mxu0 0.0
  %2162 = vmatmul.mubr.f32.gmra.mrb[0].mxu0 %v2014
  %v2163 = vpop.f32.mrb[0].mxu0
  %v2164 = vadd.f32 %v1278, %v2163
  %v2165 = vpop.f32.mrb[0].mxu0
  %2166 = vmatprep.mubr.f32.mxu0 0.0
  %2167 = vmatmul.mubr.f32.gmra.mrb[0].mxu0 %v2017
  %v2168 = vpop.f32.mrb[0].mxu0
  %v2169 = vadd.f32 %v1283, %v2168
  %v2170 = vpop.f32.mrb[0].mxu0
  %2171 = vmatprep.mubr.f32.mxu0 0.0
  %2172 = vmatmul.mubr.f32.gmra.mrb[0].mxu0 %v2020
  %v2173 = vpop.f32.mrb[0].mxu0
  %v2174 = vadd.f32 %v1288, %v2173
  %v2175 = vpop.f32.mrb[0].mxu0
  %2176 = vmatprep.mubr.f32.mxu0 0.0
  %2177 = vmatmul.mubr.f32.gmra.mrb[0].mxu0 %v2023
  %v2178 = vpop.f32.mrb[0].mxu0
  %v2179 = vadd.f32 %v1293, %v2178
  %v2180 = vpop.f32.mrb[0].mxu0
  %2181 = vmatprep.mubr.f32.mxu0 0.0
  %2182 = vmatmul.mubr.f32.gmra.mrb[0].mxu0 %v2026
  %v2183 = vpop.f32.mrb[0].mxu0
  %v2184 = vadd.f32 %v1298, %v2183
  %v2185 = vpop.f32.mrb[0].mxu0
  %2186 = vmatprep.mubr.f32.mxu0 0.0
  %2187 = vmatmul.mubr.f32.gmra.mrb[0].mxu0 %v2029
  %v2188 = vpop.f32.mrb[0].mxu0
  %v2189 = vadd.f32 %v1303, %v2188
  %v2190 = vpop.f32.mrb[0].mxu0
  %2191 = vmatprep.mubr.f32.mxu0 0.0
  %2192 = vmatmul.mubr.f32.gmra.mrb[0].mxu0 %v2032
  %v2193 = vpop.f32.mrb[0].mxu0
  %v2194 = vadd.f32 %v1308, %v2193
  %v2195 = vpop.f32.mrb[0].mxu0
  %2196 = vmatprep.mubr.f32.mxu0 0.0
  %2197 = vmatmul.mubr.f32.gmra.mrb[0].mxu0 %v2035
  %v2198 = vpop.f32.mrb[0].mxu0
  %v2199 = vadd.f32 %v1313, %v2198
  %v2200 = vpop.f32.mrb[0].mxu0
  %2201 = vmatprep.mubr.f32.mxu0 0.0
  %2202 = vmatmul.mubr.f32.gmra.mrb[0].mxu0 %v2038
  %v2203 = vpop.f32.mrb[0].mxu0
  %v2204 = vadd.f32 %v1318, %v2203
  %v2205 = vpop.f32.mrb[0].mxu0
  %2206 = vmatprep.mubr.f32.mxu0 0.0
  %2207 = vmatmul.mubr.f32.gmra.mrb[0].mxu0 %v2041
  %v2208 = vpop.f32.mrb[0].mxu0
  %v2209 = vadd.f32 %v1323, %v2208
  %v2210 = vpop.f32.mrb[0].mxu0
  %2211 = vmatprep.mubr.f32.mxu0 0.0
  %2212 = vmatmul.mubr.f32.gmra.mrb[0].mxu0 %v2044
  %v2213 = vpop.f32.mrb[0].mxu0
  %v2214 = vadd.f32 %v1328, %v2213
  %v2215 = vpop.f32.mrb[0].mxu0
  %2216 = vmatprep.mubr.f32.mxu0 0.0
  %2217 = vmatmul.mubr.f32.gmra.mrb[0].mxu0 %v2047
  %v2218 = vpop.f32.mrb[0].mxu0
  %v2219 = vadd.f32 %v1333, %v2218
  %v2220 = vpop.f32.mrb[0].mxu0
  %2221 = vmatprep.mubr.f32.mxu0 0.0
  %2222 = vmatmul.mubr.f32.gmra.mrb[0].mxu0 %v2050
  %v2223 = vpop.f32.mrb[0].mxu0
  %v2224 = vadd.f32 %v1338, %v2223
  %v2225 = vpop.f32.mrb[0].mxu0
  %2226 = vmatprep.mubr.f32.mxu0 0.0
  %2227 = vmatmul.mubr.f32.gmra.mrb[0].mxu0 %v2053
  %v2228 = vpop.f32.mrb[0].mxu0
  %v2229 = vadd.f32 %v1343, %v2228
  %v2230 = vpop.f32.mrb[0].mxu0
  %2231 = vmatprep.mubr.f32.mxu0 0.0
  %2232 = vmatmul.mubr.f32.gmra.mrb[0].mxu0 %v2056
  %v2233 = vpop.f32.mrb[0].mxu0
  %v2234 = vadd.f32 %v1348, %v2233
  %v2235 = vpop.f32.mrb[0].mxu0
  %2236 = vmatprep.mubr.f32.mxu0 0.0
  %2237 = vmatmul.mubr.f32.gmra.mrb[0].mxu0 %v2059
  %v2238 = vpop.f32.mrb[0].mxu0
  %v2239 = vadd.f32 %v1353, %v2238
  %v2240 = vpop.f32.mrb[0].mxu0
  %2241 = vmatprep.mubr.f32.mxu0 0.0
  %2242 = vmatmul.mubr.f32.gmra.mrb[0].mxu0 %v2062
  %v2243 = vpop.f32.mrb[0].mxu0
  %v2244 = vadd.f32 %v1358, %v2243
  %v2245 = vpop.f32.mrb[0].mxu0
  %2246 = vmatprep.mubr.f32.mxu0 0.0
  %2247 = vmatmul.mubr.f32.gmra.mrb[0].mxu0 %v2065
  %v2248 = vpop.f32.mrb[0].mxu0
  %v2249 = vadd.f32 %v1363, %v2248
  %v2250 = vpop.f32.mrb[0].mxu0
  %2251 = vmatprep.mubr.f32.mxu0 0.0
  %2252 = vmatmul.mubr.f32.gmra.mrb[0].mxu0 %v2068
  %v2253 = vpop.f32.mrb[0].mxu0
  %v2254 = vadd.f32 %v1368, %v2253
  %v2255 = vpop.f32.mrb[0].mxu0
  %2256 = vmatprep.mubr.f32.mxu0 0.0
  %2257 = vmatmul.mubr.f32.gmra.mrb[0].mxu0 %v2071
  %v2258 = vpop.f32.mrb[0].mxu0
  %v2259 = vadd.f32 %v1373, %v2258
  %v2260 = vpop.f32.mrb[0].mxu0
  %2261 = vmatprep.mubr.f32.mxu0 0.0
  %2262 = vmatmul.mubr.f32.gmra.mrb[0].mxu0 %v2074
  %v2263 = vpop.f32.mrb[0].mxu0
  %v2264 = vadd.f32 %v1378, %v2263
  %v2265 = vpop.f32.mrb[0].mxu0
  %2266 = vmatprep.mubr.f32.mxu0 0.0
  %2267 = vmatmul.mubr.f32.gmra.mrb[0].mxu0 %v2077
  %v2268 = vpop.f32.mrb[0].mxu0
  %v2269 = vadd.f32 %v1383, %v2268
  %v2270 = vpop.f32.mrb[0].mxu0
  %2271 = vmatprep.mubr.f32.mxu0 0.0
  %2272 = vmatmul.mubr.f32.gmra.mrb[0].mxu0 %v2080
  %v2273 = vpop.f32.mrb[0].mxu0
  %v2274 = vadd.f32 %v1388, %v2273
  %v2275 = vpop.f32.mrb[0].mxu0
  %2276 = vdwg.mxu0
  %v2277 = vadd.f32 %v1876, %v2149
  %v2278 = vadd.f32 %v1881, %v2154
  %v2279 = vadd.f32 %v1886, %v2159
  %v2280 = vadd.f32 %v1891, %v2164
  %v2281 = vadd.f32 %v1896, %v2169
  %v2282 = vadd.f32 %v1901, %v2174
  %v2283 = vadd.f32 %v1906, %v2179
  %v2284 = vadd.f32 %v1911, %v2184
  %v2285 = vadd.f32 %v1916, %v2189
  %v2286 = vadd.f32 %v1921, %v2194
  %v2287 = vadd.f32 %v1926, %v2199
  %v2288 = vadd.f32 %v1931, %v2204
  %v2289 = vadd.f32 %v1936, %v2209
  %v2290 = vadd.f32 %v1941, %v2214
  %v2291 = vadd.f32 %v1946, %v2219
  %v2292 = vadd.f32 %v1951, %v2224
  %v2293 = vadd.f32 %v1956, %v2229
  %v2294 = vadd.f32 %v1961, %v2234
  %v2295 = vadd.f32 %v1966, %v2239
  %v2296 = vadd.f32 %v1971, %v2244
  %v2297 = vadd.f32 %v1976, %v2249
  %v2298 = vadd.f32 %v1981, %v2254
  %v2299 = vadd.f32 %v1986, %v2259
  %v2300 = vadd.f32 %v1991, %v2264
  %v2301 = vadd.f32 %v1996, %v2269
  %v2302 = vadd.f32 %v2001, %v2274
  %v2303 = vadd.f32 %v2277, %v1603
  %v2304 = vadd.f32 %v2278, %v1608
  %v2305 = vadd.f32 %v2279, %v1613
  %v2306 = vadd.f32 %v2280, %v1618
  %v2307 = vadd.f32 %v2281, %v1623
  %v2308 = vadd.f32 %v2282, %v1628
  %v2309 = vadd.f32 %v2283, %v1633
  %v2310 = vadd.f32 %v2284, %v1638
  %v2311 = vadd.f32 %v2285, %v1643
  %v2312 = vadd.f32 %v2286, %v1648
  %v2313 = vadd.f32 %v2287, %v1653
  %v2314 = vadd.f32 %v2288, %v1658
  %v2315 = vadd.f32 %v2289, %v1663
  %v2316 = vadd.f32 %v2290, %v1668
  %v2317 = vadd.f32 %v2291, %v1673
  %v2318 = vadd.f32 %v2292, %v1678
  %v2319 = vadd.f32 %v2293, %v1683
  %v2320 = vadd.f32 %v2294, %v1688
  %v2321 = vadd.f32 %v2295, %v1693
  %v2322 = vadd.f32 %v2296, %v1698
  %v2323 = vadd.f32 %v2297, %v1703
  %v2324 = vadd.f32 %v2298, %v1708
  %v2325 = vadd.f32 %v2299, %v1713
  %v2326 = vadd.f32 %v2300, %v1718
  %v2327 = vadd.f32 %v2301, %v1723
  %v2328 = vadd.f32 %v2302, %v1728
  %vm2329 = vcmp.ge.s32.totalorder %v75, 2
  %vm2330 = vcmp.ge.s32.totalorder %v76, 2
  %vm2331 = vcmp.ge.s32.totalorder %v77, 2
  %vm2332 = vcmp.ge.s32.totalorder %v78, 2
  %vm2333 = vcmp.ge.s32.totalorder %v79, 2
  %vm2334 = vcmp.ge.s32.totalorder %v80, 2
  %vm2335 = vcmp.ge.s32.totalorder %v81, 2
  %vm2336 = vcmp.ge.s32.totalorder %v82, 2
  %vm2337 = vcmp.ge.s32.totalorder %v83, 2
  %vm2338 = vcmp.ge.s32.totalorder %v84, 2
  %vm2339 = vcmp.ge.s32.totalorder %v85, 2
  %vm2340 = vcmp.ge.s32.totalorder %v86, 2
  %vm2341 = vcmp.ge.s32.totalorder %v87, 2
  %vm2342 = vcmp.ge.s32.totalorder %v88, 2
  %vm2343 = vcmp.ge.s32.totalorder %v89, 2
  %vm2344 = vcmp.ge.s32.totalorder %v90, 2
  %vm2345 = vcmp.ge.s32.totalorder %v91, 2
  %vm2346 = vcmp.ge.s32.totalorder %v92, 2
  %vm2347 = vcmp.ge.s32.totalorder %v93, 2
  %vm2348 = vcmp.ge.s32.totalorder %v94, 2
  %vm2349 = vcmp.ge.s32.totalorder %v95, 2
  %vm2350 = vcmp.ge.s32.totalorder %v96, 2
  %vm2351 = vcmp.ge.s32.totalorder %v97, 2
  %vm2352 = vcmp.ge.s32.totalorder %v98, 2
  %vm2353 = vcmp.ge.s32.totalorder %v99, 2
  %vm2354 = vcmp.ge.s32.totalorder %v100, 2
  %vm2355 = vcmp.lt.s32.totalorder %v75, 101
  %vm2356 = vcmp.lt.s32.totalorder %v76, 101
  %vm2357 = vcmp.lt.s32.totalorder %v77, 101
  %vm2358 = vcmp.lt.s32.totalorder %v78, 101
  %vm2359 = vcmp.lt.s32.totalorder %v79, 101
  %vm2360 = vcmp.lt.s32.totalorder %v80, 101
  %vm2361 = vcmp.lt.s32.totalorder %v81, 101
  %vm2362 = vcmp.lt.s32.totalorder %v82, 101
  %vm2363 = vcmp.lt.s32.totalorder %v83, 101
  %vm2364 = vcmp.lt.s32.totalorder %v84, 101
  %vm2365 = vcmp.lt.s32.totalorder %v85, 101
  %vm2366 = vcmp.lt.s32.totalorder %v86, 101
  %vm2367 = vcmp.lt.s32.totalorder %v87, 101
  %vm2368 = vcmp.lt.s32.totalorder %v88, 101
  %vm2369 = vcmp.lt.s32.totalorder %v89, 101
  %vm2370 = vcmp.lt.s32.totalorder %v90, 101
  %vm2371 = vcmp.lt.s32.totalorder %v91, 101
  %vm2372 = vcmp.lt.s32.totalorder %v92, 101
  %vm2373 = vcmp.lt.s32.totalorder %v93, 101
  %vm2374 = vcmp.lt.s32.totalorder %v94, 101
  %vm2375 = vcmp.lt.s32.totalorder %v95, 101
  %vm2376 = vcmp.lt.s32.totalorder %v96, 101
  %vm2377 = vcmp.lt.s32.totalorder %v97, 101
  %vm2378 = vcmp.lt.s32.totalorder %v98, 101
  %vm2379 = vcmp.lt.s32.totalorder %v99, 101
  %vm2380 = vcmp.lt.s32.totalorder %v100, 101
  %vm2381 = vmand %vm2329, %vm2355
  %vm2382 = vmand %vm2330, %vm2356
  %vm2383 = vmand %vm2331, %vm2357
  %vm2384 = vmand %vm2332, %vm2358
  %vm2385 = vmand %vm2333, %vm2359
  %vm2386 = vmand %vm2334, %vm2360
  %vm2387 = vmand %vm2335, %vm2361
  %vm2388 = vmand %vm2336, %vm2362
  %vm2389 = vmand %vm2337, %vm2363
  %vm2390 = vmand %vm2338, %vm2364
  %vm2391 = vmand %vm2339, %vm2365
  %vm2392 = vmand %vm2340, %vm2366
  %vm2393 = vmand %vm2341, %vm2367
  %vm2394 = vmand %vm2342, %vm2368
  %vm2395 = vmand %vm2343, %vm2369
  %vm2396 = vmand %vm2344, %vm2370
  %vm2397 = vmand %vm2345, %vm2371
  %vm2398 = vmand %vm2346, %vm2372
  %vm2399 = vmand %vm2347, %vm2373
  %vm2400 = vmand %vm2348, %vm2374
  %vm2401 = vmand %vm2349, %vm2375
  %vm2402 = vmand %vm2350, %vm2376
  %vm2403 = vmand %vm2351, %vm2377
  %vm2404 = vmand %vm2352, %vm2378
  %vm2405 = vmand %vm2353, %vm2379
  %vm2406 = vmand %vm2354, %vm2380
  %vm2407 = vcmp.ge.s32.totalorder %v75, 103
  %vm2408 = vcmp.ge.s32.totalorder %v76, 103
  %vm2409 = vcmp.ge.s32.totalorder %v77, 103
  %vm2410 = vcmp.ge.s32.totalorder %v78, 103
  %vm2411 = vcmp.ge.s32.totalorder %v79, 103
  %vm2412 = vcmp.ge.s32.totalorder %v80, 103
  %vm2413 = vcmp.ge.s32.totalorder %v81, 103
  %vm2414 = vcmp.ge.s32.totalorder %v82, 103
  %vm2415 = vcmp.ge.s32.totalorder %v83, 103
  %vm2416 = vcmp.ge.s32.totalorder %v84, 103
  %vm2417 = vcmp.ge.s32.totalorder %v85, 103
  %vm2418 = vcmp.ge.s32.totalorder %v86, 103
  %vm2419 = vcmp.ge.s32.totalorder %v87, 103
  %vm2420 = vcmp.ge.s32.totalorder %v88, 103
  %vm2421 = vcmp.ge.s32.totalorder %v89, 103
  %vm2422 = vcmp.ge.s32.totalorder %v90, 103
  %vm2423 = vcmp.ge.s32.totalorder %v91, 103
  %vm2424 = vcmp.ge.s32.totalorder %v92, 103
  %vm2425 = vcmp.ge.s32.totalorder %v93, 103
  %vm2426 = vcmp.ge.s32.totalorder %v94, 103
  %vm2427 = vcmp.ge.s32.totalorder %v95, 103
  %vm2428 = vcmp.ge.s32.totalorder %v96, 103
  %vm2429 = vcmp.ge.s32.totalorder %v97, 103
  %vm2430 = vcmp.ge.s32.totalorder %v98, 103
  %vm2431 = vcmp.ge.s32.totalorder %v99, 103
  %vm2432 = vcmp.ge.s32.totalorder %v100, 103
  %vm2433 = vcmp.lt.s32.totalorder %v75, 202
  %vm2434 = vcmp.lt.s32.totalorder %v76, 202
  %vm2435 = vcmp.lt.s32.totalorder %v77, 202
  %vm2436 = vcmp.lt.s32.totalorder %v78, 202
  %vm2437 = vcmp.lt.s32.totalorder %v79, 202
  %vm2438 = vcmp.lt.s32.totalorder %v80, 202
  %vm2439 = vcmp.lt.s32.totalorder %v81, 202
  %vm2440 = vcmp.lt.s32.totalorder %v82, 202
  %vm2441 = vcmp.lt.s32.totalorder %v83, 202
  %vm2442 = vcmp.lt.s32.totalorder %v84, 202
  %vm2443 = vcmp.lt.s32.totalorder %v85, 202
  %vm2444 = vcmp.lt.s32.totalorder %v86, 202
  %vm2445 = vcmp.lt.s32.totalorder %v87, 202
  %vm2446 = vcmp.lt.s32.totalorder %v88, 202
  %vm2447 = vcmp.lt.s32.totalorder %v89, 202
  %vm2448 = vcmp.lt.s32.totalorder %v90, 202
  %vm2449 = vcmp.lt.s32.totalorder %v91, 202
  %vm2450 = vcmp.lt.s32.totalorder %v92, 202
  %vm2451 = vcmp.lt.s32.totalorder %v93, 202
  %vm2452 = vcmp.lt.s32.totalorder %v94, 202
  %vm2453 = vcmp.lt.s32.totalorder %v95, 202
  %vm2454 = vcmp.lt.s32.totalorder %v96, 202
  %vm2455 = vcmp.lt.s32.totalorder %v97, 202
  %vm2456 = vcmp.lt.s32.totalorder %v98, 202
  %vm2457 = vcmp.lt.s32.totalorder %v99, 202
  %vm2458 = vcmp.lt.s32.totalorder %v100, 202
  %vm2459 = vmand %vm2407, %vm2433
  %vm2460 = vmand %vm2408, %vm2434
  %vm2461 = vmand %vm2409, %vm2435
  %vm2462 = vmand %vm2410, %vm2436
  %vm2463 = vmand %vm2411, %vm2437
  %vm2464 = vmand %vm2412, %vm2438
  %vm2465 = vmand %vm2413, %vm2439
  %vm2466 = vmand %vm2414, %vm2440
  %vm2467 = vmand %vm2415, %vm2441
  %vm2468 = vmand %vm2416, %vm2442
  %vm2469 = vmand %vm2417, %vm2443
  %vm2470 = vmand %vm2418, %vm2444
  %vm2471 = vmand %vm2419, %vm2445
  %vm2472 = vmand %vm2420, %vm2446
  %vm2473 = vmand %vm2421, %vm2447
  %vm2474 = vmand %vm2422, %vm2448
  %vm2475 = vmand %vm2423, %vm2449
  %vm2476 = vmand %vm2424, %vm2450
  %vm2477 = vmand %vm2425, %vm2451
  %vm2478 = vmand %vm2426, %vm2452
  %vm2479 = vmand %vm2427, %vm2453
  %vm2480 = vmand %vm2428, %vm2454
  %vm2481 = vmand %vm2429, %vm2455
  %vm2482 = vmand %vm2430, %vm2456
  %vm2483 = vmand %vm2431, %vm2457
  %vm2484 = vmand %vm2432, %vm2458
  %vm2485 = vmor %vm2381, %vm2459
  %vm2486 = vmor %vm2382, %vm2460
  %vm2487 = vmor %vm2383, %vm2461
  %vm2488 = vmor %vm2384, %vm2462
  %vm2489 = vmor %vm2385, %vm2463
  %vm2490 = vmor %vm2386, %vm2464
  %vm2491 = vmor %vm2387, %vm2465
  %vm2492 = vmor %vm2388, %vm2466
  %vm2493 = vmor %vm2389, %vm2467
  %vm2494 = vmor %vm2390, %vm2468
  %vm2495 = vmor %vm2391, %vm2469
  %vm2496 = vmor %vm2392, %vm2470
  %vm2497 = vmor %vm2393, %vm2471
  %vm2498 = vmor %vm2394, %vm2472
  %vm2499 = vmor %vm2395, %vm2473
  %vm2500 = vmor %vm2396, %vm2474
  %vm2501 = vmor %vm2397, %vm2475
  %vm2502 = vmor %vm2398, %vm2476
  %vm2503 = vmor %vm2399, %vm2477
  %vm2504 = vmor %vm2400, %vm2478
  %vm2505 = vmor %vm2401, %vm2479
  %vm2506 = vmor %vm2402, %vm2480
  %vm2507 = vmor %vm2403, %vm2481
  %vm2508 = vmor %vm2404, %vm2482
  %vm2509 = vmor %vm2405, %vm2483
  %vm2510 = vmor %vm2406, %vm2484
  %v2511 = vlaneseq
  %v2512 = vshrl.u32 %v2511, 7
  %v2513 = vsub.s32 1, %v2512
  %v2514 = vrot.slane %v38, %v2513
  %v2515 = vadd.f32 %v2303, %v2514
  %v2516 = vadd.f32 %v2304, %v2514
  %v2517 = vadd.f32 %v2305, %v2514
  %v2518 = vadd.f32 %v2306, %v2514
  %v2519 = vadd.f32 %v2307, %v2514
  %v2520 = vadd.f32 %v2308, %v2514
  %v2521 = vadd.f32 %v2309, %v2514
  %v2522 = vadd.f32 %v2310, %v2514
  %v2523 = vadd.f32 %v2311, %v2514
  %v2524 = vadd.f32 %v2312, %v2514
  %v2525 = vadd.f32 %v2313, %v2514
  %v2526 = vadd.f32 %v2314, %v2514
  %v2527 = vadd.f32 %v2315, %v2514
  %v2528 = vadd.f32 %v2316, %v2514
  %v2529 = vadd.f32 %v2317, %v2514
  %v2530 = vadd.f32 %v2318, %v2514
  %v2531 = vadd.f32 %v2319, %v2514
  %v2532 = vadd.f32 %v2320, %v2514
  %v2533 = vadd.f32 %v2321, %v2514
  %v2534 = vadd.f32 %v2322, %v2514
  %v2535 = vadd.f32 %v2323, %v2514
  %v2536 = vadd.f32 %v2324, %v2514
  %v2537 = vadd.f32 %v2325, %v2514
  %v2538 = vadd.f32 %v2326, %v2514
  %v2539 = vadd.f32 %v2327, %v2514
  %v2540 = vadd.f32 %v2328, %v2514
  %v2541 = vmax.f32 %v2515, 0.0
  %v2542 = vmax.f32 %v2516, 0.0
  %v2543 = vmax.f32 %v2517, 0.0
  %v2544 = vmax.f32 %v2518, 0.0
  %v2545 = vmax.f32 %v2519, 0.0
  %v2546 = vmax.f32 %v2520, 0.0
  %v2547 = vmax.f32 %v2521, 0.0
  %v2548 = vmax.f32 %v2522, 0.0
  %v2549 = vmax.f32 %v2523, 0.0
  %v2550 = vmax.f32 %v2524, 0.0
  %v2551 = vmax.f32 %v2525, 0.0
  %v2552 = vmax.f32 %v2526, 0.0
  %v2553 = vmax.f32 %v2527, 0.0
  %v2554 = vmax.f32 %v2528, 0.0
  %v2555 = vmax.f32 %v2529, 0.0
  %v2556 = vmax.f32 %v2530, 0.0
  %v2557 = vmax.f32 %v2531, 0.0
  %v2558 = vmax.f32 %v2532, 0.0
  %v2559 = vmax.f32 %v2533, 0.0
  %v2560 = vmax.f32 %v2534, 0.0
  %v2561 = vmax.f32 %v2535, 0.0
  %v2562 = vmax.f32 %v2536, 0.0
  %v2563 = vmax.f32 %v2537, 0.0
  %v2564 = vmax.f32 %v2538, 0.0
  %v2565 = vmax.f32 %v2539, 0.0
  %v2566 = vmax.f32 %v2540, 0.0
  %v2567 = vsel %vm2485, %v2541, 0.0
  %v2568 = vsel %vm2486, %v2542, 0.0
  %v2569 = vsel %vm2487, %v2543, 0.0
  %v2570 = vsel %vm2488, %v2544, 0.0
  %v2571 = vsel %vm2489, %v2545, 0.0
  %v2572 = vsel %vm2490, %v2546, 0.0
  %v2573 = vsel %vm2491, %v2547, 0.0
  %v2574 = vsel %vm2492, %v2548, 0.0
  %v2575 = vsel %vm2493, %v2549, 0.0
  %v2576 = vsel %vm2494, %v2550, 0.0
  %v2577 = vsel %vm2495, %v2551, 0.0
  %v2578 = vsel %vm2496, %v2552, 0.0
  %v2579 = vsel %vm2497, %v2553, 0.0
  %v2580 = vsel %vm2498, %v2554, 0.0
  %v2581 = vsel %vm2499, %v2555, 0.0
  %v2582 = vsel %vm2500, %v2556, 0.0
  %v2583 = vsel %vm2501, %v2557, 0.0
  %v2584 = vsel %vm2502, %v2558, 0.0
  %v2585 = vsel %vm2503, %v2559, 0.0
  %v2586 = vsel %vm2504, %v2560, 0.0
  %v2587 = vsel %vm2505, %v2561, 0.0
  %v2588 = vsel %vm2506, %v2562, 0.0
  %v2589 = vsel %vm2507, %v2563, 0.0
  %v2590 = vsel %vm2508, %v2564, 0.0
  %v2591 = vsel %vm2509, %v2565, 0.0
  %v2592 = vsel %vm2510, %v2566, 0.0
  %v2593 = vld [vmem:[%s4] sm:$0xff]
  %v2594 = vld [vmem:[%s4 + $0x8] sm:$0xff]
  %v2595 = vld [vmem:[%s4 + $0x10] sm:$0xff]
  %v2596 = vld [vmem:[%s4 + $0x18] sm:$0xff]
  %v2597 = vld [vmem:[%s4 + $0x20] sm:$0xff]
  %v2598 = vld [vmem:[%s4 + $0x28] sm:$0xff]
  %v2599 = vld [vmem:[%s4 + $0x30] sm:$0xff]
  %v2600 = vld [vmem:[%s4 + $0x38] sm:$0xff]
  %v2601 = vld [vmem:[%s4 + $0x40] sm:$0xff]
  %v2602 = vld [vmem:[%s4 + $0x48] sm:$0xff]
  %v2603 = vld [vmem:[%s4 + $0x50] sm:$0xff]
  %v2604 = vld [vmem:[%s4 + $0x58] sm:$0xff]
  %v2605 = vrot.slane %v2567, 1
  %v2606 = vrot.slane %v2568, 1
  %v2607 = vrot.slane %v2569, 1
  %v2608 = vrot.slane %v2570, 1
  %v2609 = vrot.slane %v2571, 1
  %v2610 = vrot.slane %v2572, 1
  %v2611 = vrot.slane %v2573, 1
  %v2612 = vrot.slane %v2574, 1
  %v2613 = vrot.slane %v2575, 1
  %v2614 = vrot.slane %v2576, 1
  %v2615 = vrot.slane %v2577, 1
  %v2616 = vrot.slane %v2578, 1
  %v2617 = vrot.slane %v2579, 1
  %v2618 = vrot.slane %v2580, 1
  %v2619 = vrot.slane %v2581, 1
  %v2620 = vrot.slane %v2582, 1
  %v2621 = vrot.slane %v2583, 1
  %v2622 = vrot.slane %v2584, 1
  %v2623 = vrot.slane %v2585, 1
  %v2624 = vrot.slane %v2586, 1
  %v2625 = vrot.slane %v2587, 1
  %v2626 = vrot.slane %v2588, 1
  %v2627 = vrot.slane %v2589, 1
  %v2628 = vrot.slane %v2590, 1
  %v2629 = vrot.slane %v2591, 1
  %v2630 = vrot.slane %v2592, 1
  %v2631 = vsel %vm670, %v2629, %v2630
  %v2632 = vsel %vm670, %v2628, %v2629
  %v2633 = vsel %vm670, %v2627, %v2628
  %v2634 = vsel %vm670, %v2626, %v2627
  %v2635 = vsel %vm670, %v2625, %v2626
  %v2636 = vsel %vm670, %v2624, %v2625
  %v2637 = vsel %vm670, %v2623, %v2624
  %v2638 = vsel %vm670, %v2622, %v2623
  %v2639 = vsel %vm670, %v2621, %v2622
  %v2640 = vsel %vm670, %v2620, %v2621
  %v2641 = vsel %vm670, %v2619, %v2620
  %v2642 = vsel %vm670, %v2618, %v2619
  %v2643 = vsel %vm670, %v2617, %v2618
  %v2644 = vsel %vm670, %v2616, %v2617
  %v2645 = vsel %vm670, %v2615, %v2616
  %v2646 = vsel %vm670, %v2614, %v2615
  %v2647 = vsel %vm670, %v2613, %v2614
  %v2648 = vsel %vm670, %v2612, %v2613
  %v2649 = vsel %vm670, %v2611, %v2612
  %v2650 = vsel %vm670, %v2610, %v2611
  %v2651 = vsel %vm670, %v2609, %v2610
  %v2652 = vsel %vm670, %v2608, %v2609
  %v2653 = vsel %vm670, %v2607, %v2608
  %v2654 = vsel %vm670, %v2606, %v2607
  %v2655 = vsel %vm670, %v2605, %v2606
  %s2656 = scalar_lea.vmem %s4, 96
  %v2657 = vld [vmem:[%s2656] sm:$0xff]
  %v2658 = vld [vmem:[%s2656 + $0x8] sm:$0xff]
  %v2659 = vld [vmem:[%s2656 + $0x10] sm:$0xff]
  %v2660 = vld [vmem:[%s2656 + $0x18] sm:$0xff]
  %v2661 = vld [vmem:[%s2656 + $0x20] sm:$0xff]
  %v2662 = vld [vmem:[%s2656 + $0x28] sm:$0xff]
  %v2663 = vld [vmem:[%s2656 + $0x30] sm:$0xff]
  %v2664 = vld [vmem:[%s2656 + $0x38] sm:$0xff]
  %v2665 = vld [vmem:[%s2656 + $0x40] sm:$0xff]
  %v2666 = vld [vmem:[%s2656 + $0x48] sm:$0xff]
  %v2667 = vld [vmem:[%s2656 + $0x50] sm:$0xff]
  %v2668 = vld [vmem:[%s2656 + $0x58] sm:$0xff]
  %v2670 = vsel %vm710, %v2655, 0
  %v2673 = vsel %vm710, %v2654, 0
  %v2676 = vsel %vm710, %v2653, 0
  %v2679 = vsel %vm710, %v2652, 0
  %v2682 = vsel %vm710, %v2651, 0
  %v2685 = vsel %vm710, %v2650, 0
  %v2688 = vsel %vm710, %v2649, 0
  %v2691 = vsel %vm710, %v2648, 0
  %v2694 = vsel %vm710, %v2647, 0
  %v2697 = vsel %vm710, %v2646, 0
  %v2700 = vsel %vm710, %v2645, 0
  %v2703 = vsel %vm710, %v2644, 0
  %v2706 = vsel %vm710, %v2643, 0
  %v2709 = vsel %vm710, %v2642, 0
  %v2712 = vsel %vm710, %v2641, 0
  %v2715 = vsel %vm710, %v2640, 0
  %v2718 = vsel %vm710, %v2639, 0
  %v2721 = vsel %vm710, %v2638, 0
  %v2724 = vsel %vm710, %v2637, 0
  %v2727 = vsel %vm710, %v2636, 0
  %v2730 = vsel %vm710, %v2635, 0
  %v2733 = vsel %vm710, %v2634, 0
  %v2736 = vsel %vm710, %v2633, 0
  %v2739 = vsel %vm710, %v2632, 0
  %v2742 = vsel %vm710, %v2631, 0
  %2744 = vmatprep.subr.mxu0 0.0
  %2745 = vmatpush1.msra.mxu0 %v2657
  %2746 = vmatprep.subr.mxu0 0.0
  %2747 = vmatpush1.msra.mxu0 %v2658
  %2748 = vmatprep.subr.mxu0 0.0
  %2749 = vmatpush1.msra.mxu0 %v2659
  %2750 = vmatprep.subr.mxu0 0.0
  %2751 = vmatpush1.msra.mxu0 %v2660
  %2752 = vmatprep.subr.mxu0 0.0
  %2753 = vmatpush1.msra.mxu0 %v2661
  %2754 = vmatprep.subr.mxu0 0.0
  %2755 = vmatpush1.msra.mxu0 %v2662
  %2756 = vmatprep.subr.mxu0 0.0
  %2757 = vmatpush1.msra.mxu0 %v2663
  %2758 = vmatprep.subr.mxu0 0.0
  %2759 = vmatpush1.msra.mxu0 %v2664
  %2760 = vmatprep.subr.mxu0 0.0
  %2761 = vmatpush1.msra.mxu0 %v2665
  %2762 = vmatprep.subr.mxu0 0.0
  %2763 = vmatpush1.msra.mxu0 %v2666
  %2764 = vmatprep.subr.mxu0 0.0
  %2765 = vmatpush1.msra.mxu0 %v2667
  %2766 = vmatprep.subr.mxu0 0.0
  %2767 = vmatpush1.msra.mxu0 %v2668
  %2768 = vmatprep.subr.mxu0 0.0
  %2769 = vmatpush1.msra.mxu0 0.0
  %2770 = vmatprep.subr.mxu0 0.0
  %2771 = vmatpush1.msra.mxu0 0.0
  %2772 = vmatprep.subr.mxu0 0.0
  %2773 = vmatpush1.msra.mxu0 0.0
  %2774 = vmatprep.subr.mxu0 0.0
  %2775 = vmatpush1.msra.mxu0 0.0
  %2776 = vmatprep.subr.mxu0 0.0
  %2777 = vmatpush1.msra.mxu0 0.0
  %2778 = vmatprep.subr.mxu0 0.0
  %2779 = vmatpush1.msra.mxu0 0.0
  %2780 = vmatprep.subr.mxu0 0.0
  %2781 = vmatpush1.msra.mxu0 0.0
  %2782 = vmatprep.subr.mxu0 0.0
  %2783 = vmatpush1.msra.mxu0 0.0
  %2784 = vmatprep.subr.mxu0 0.0
  %2785 = vmatpush1.msra.mxu0 0.0
  %2786 = vmatprep.subr.mxu0 0.0
  %2787 = vmatpush1.msra.mxu0 0.0
  %2788 = vmatprep.subr.mxu0 0.0
  %2789 = vmatpush1.msra.mxu0 0.0
  %2790 = vmatprep.subr.mxu0 0.0
  %2791 = vmatpush1.msra.mxu0 0.0
  %2792 = vmatprep.subr.mxu0 0.0
  %2793 = vmatpush1.msra.mxu0 0.0
  %2794 = vmatprep.subr.mxu0 0.0
  %2795 = vmatpush1.msra.mxu0 0.0
  %2796 = vmatprep.subr.mxu0 0.0
  %2797 = vmatpush1.msra.mxu0 0.0
  %2798 = vmatprep.subr.mxu0 0.0
  %2799 = vmatpush1.msra.mxu0 0.0
  %2800 = vmatprep.subr.mxu0 0.0
  %2801 = vmatpush1.msra.mxu0 0.0
  %2802 = vmatprep.subr.mxu0 0.0
  %2803 = vmatpush1.msra.mxu0 0.0
  %2804 = vmatprep.subr.mxu0 0.0
  %2805 = vmatpush1.msra.mxu0 0.0
  %2806 = vmatprep.subr.mxu0 0.0
  %2807 = vmatpush1.msra.mxu0 0.0
  %2808 = vmatprep.mubr.f32.mxu0 0.0
  %2809 = vmatmul.mubr.f32.gmra.mrb[0].mxu0 %v2670
  %v2810 = vpop.f32.mrb[0].mxu0
  %v2811 = vadd.f32 0.0, %v2810
  %v2812 = vpop.f32.mrb[0].mxu0
  %2813 = vmatprep.mubr.f32.mxu0 0.0
  %2814 = vmatmul.mubr.f32.gmra.mrb[0].mxu0 %v2673
  %v2815 = vpop.f32.mrb[0].mxu0
  %v2816 = vadd.f32 0.0, %v2815
  %v2817 = vpop.f32.mrb[0].mxu0
  %2818 = vmatprep.mubr.f32.mxu0 0.0
  %2819 = vmatmul.mubr.f32.gmra.mrb[0].mxu0 %v2676
  %v2820 = vpop.f32.mrb[0].mxu0
  %v2821 = vadd.f32 0.0, %v2820
  %v2822 = vpop.f32.mrb[0].mxu0
  %2823 = vmatprep.mubr.f32.mxu0 0.0
  %2824 = vmatmul.mubr.f32.gmra.mrb[0].mxu0 %v2679
  %v2825 = vpop.f32.mrb[0].mxu0
  %v2826 = vadd.f32 0.0, %v2825
  %v2827 = vpop.f32.mrb[0].mxu0
  %2828 = vmatprep.mubr.f32.mxu0 0.0
  %2829 = vmatmul.mubr.f32.gmra.mrb[0].mxu0 %v2682
  %v2830 = vpop.f32.mrb[0].mxu0
  %v2831 = vadd.f32 0.0, %v2830
  %v2832 = vpop.f32.mrb[0].mxu0
  %2833 = vmatprep.mubr.f32.mxu0 0.0
  %2834 = vmatmul.mubr.f32.gmra.mrb[0].mxu0 %v2685
  %v2835 = vpop.f32.mrb[0].mxu0
  %v2836 = vadd.f32 0.0, %v2835
  %v2837 = vpop.f32.mrb[0].mxu0
  %2838 = vmatprep.mubr.f32.mxu0 0.0
  %2839 = vmatmul.mubr.f32.gmra.mrb[0].mxu0 %v2688
  %v2840 = vpop.f32.mrb[0].mxu0
  %v2841 = vadd.f32 0.0, %v2840
  %v2842 = vpop.f32.mrb[0].mxu0
  %2843 = vmatprep.mubr.f32.mxu0 0.0
  %2844 = vmatmul.mubr.f32.gmra.mrb[0].mxu0 %v2691
  %v2845 = vpop.f32.mrb[0].mxu0
  %v2846 = vadd.f32 0.0, %v2845
  %v2847 = vpop.f32.mrb[0].mxu0
  %2848 = vmatprep.mubr.f32.mxu0 0.0
  %2849 = vmatmul.mubr.f32.gmra.mrb[0].mxu0 %v2694
  %v2850 = vpop.f32.mrb[0].mxu0
  %v2851 = vadd.f32 0.0, %v2850
  %v2852 = vpop.f32.mrb[0].mxu0
  %2853 = vmatprep.mubr.f32.mxu0 0.0
  %2854 = vmatmul.mubr.f32.gmra.mrb[0].mxu0 %v2697
  %v2855 = vpop.f32.mrb[0].mxu0
  %v2856 = vadd.f32 0.0, %v2855
  %v2857 = vpop.f32.mrb[0].mxu0
  %2858 = vmatprep.mubr.f32.mxu0 0.0
  %2859 = vmatmul.mubr.f32.gmra.mrb[0].mxu0 %v2700
  %v2860 = vpop.f32.mrb[0].mxu0
  %v2861 = vadd.f32 0.0, %v2860
  %v2862 = vpop.f32.mrb[0].mxu0
  %2863 = vmatprep.mubr.f32.mxu0 0.0
  %2864 = vmatmul.mubr.f32.gmra.mrb[0].mxu0 %v2703
  %v2865 = vpop.f32.mrb[0].mxu0
  %v2866 = vadd.f32 0.0, %v2865
  %v2867 = vpop.f32.mrb[0].mxu0
  %2868 = vmatprep.mubr.f32.mxu0 0.0
  %2869 = vmatmul.mubr.f32.gmra.mrb[0].mxu0 %v2706
  %v2870 = vpop.f32.mrb[0].mxu0
  %v2871 = vadd.f32 0.0, %v2870
  %v2872 = vpop.f32.mrb[0].mxu0
  %2873 = vmatprep.mubr.f32.mxu0 0.0
  %2874 = vmatmul.mubr.f32.gmra.mrb[0].mxu0 %v2709
  %v2875 = vpop.f32.mrb[0].mxu0
  %v2876 = vadd.f32 0.0, %v2875
  %v2877 = vpop.f32.mrb[0].mxu0
  %2878 = vmatprep.mubr.f32.mxu0 0.0
  %2879 = vmatmul.mubr.f32.gmra.mrb[0].mxu0 %v2712
  %v2880 = vpop.f32.mrb[0].mxu0
  %v2881 = vadd.f32 0.0, %v2880
  %v2882 = vpop.f32.mrb[0].mxu0
  %2883 = vmatprep.mubr.f32.mxu0 0.0
  %2884 = vmatmul.mubr.f32.gmra.mrb[0].mxu0 %v2715
  %v2885 = vpop.f32.mrb[0].mxu0
  %v2886 = vadd.f32 0.0, %v2885
  %v2887 = vpop.f32.mrb[0].mxu0
  %2888 = vmatprep.mubr.f32.mxu0 0.0
  %2889 = vmatmul.mubr.f32.gmra.mrb[0].mxu0 %v2718
  %v2890 = vpop.f32.mrb[0].mxu0
  %v2891 = vadd.f32 0.0, %v2890
  %v2892 = vpop.f32.mrb[0].mxu0
  %2893 = vmatprep.mubr.f32.mxu0 0.0
  %2894 = vmatmul.mubr.f32.gmra.mrb[0].mxu0 %v2721
  %v2895 = vpop.f32.mrb[0].mxu0
  %v2896 = vadd.f32 0.0, %v2895
  %v2897 = vpop.f32.mrb[0].mxu0
  %2898 = vmatprep.mubr.f32.mxu0 0.0
  %2899 = vmatmul.mubr.f32.gmra.mrb[0].mxu0 %v2724
  %v2900 = vpop.f32.mrb[0].mxu0
  %v2901 = vadd.f32 0.0, %v2900
  %v2902 = vpop.f32.mrb[0].mxu0
  %2903 = vmatprep.mubr.f32.mxu0 0.0
  %2904 = vmatmul.mubr.f32.gmra.mrb[0].mxu0 %v2727
  %v2905 = vpop.f32.mrb[0].mxu0
  %v2906 = vadd.f32 0.0, %v2905
  %v2907 = vpop.f32.mrb[0].mxu0
  %2908 = vmatprep.mubr.f32.mxu0 0.0
  %2909 = vmatmul.mubr.f32.gmra.mrb[0].mxu0 %v2730
  %v2910 = vpop.f32.mrb[0].mxu0
  %v2911 = vadd.f32 0.0, %v2910
  %v2912 = vpop.f32.mrb[0].mxu0
  %2913 = vmatprep.mubr.f32.mxu0 0.0
  %2914 = vmatmul.mubr.f32.gmra.mrb[0].mxu0 %v2733
  %v2915 = vpop.f32.mrb[0].mxu0
  %v2916 = vadd.f32 0.0, %v2915
  %v2917 = vpop.f32.mrb[0].mxu0
  %2918 = vmatprep.mubr.f32.mxu0 0.0
  %2919 = vmatmul.mubr.f32.gmra.mrb[0].mxu0 %v2736
  %v2920 = vpop.f32.mrb[0].mxu0
  %v2921 = vadd.f32 0.0, %v2920
  %v2922 = vpop.f32.mrb[0].mxu0
  %2923 = vmatprep.mubr.f32.mxu0 0.0
  %2924 = vmatmul.mubr.f32.gmra.mrb[0].mxu0 %v2739
  %v2925 = vpop.f32.mrb[0].mxu0
  %v2926 = vadd.f32 0.0, %v2925
  %v2927 = vpop.f32.mrb[0].mxu0
  %2928 = vmatprep.mubr.f32.mxu0 0.0
  %2929 = vmatmul.mubr.f32.gmra.mrb[0].mxu0 %v2742
  %v2930 = vpop.f32.mrb[0].mxu0
  %v2931 = vadd.f32 0.0, %v2930
  %v2932 = vpop.f32.mrb[0].mxu0
  %2933 = vdwg.mxu0
  %v2934 = vrot.slane %v2567, 2
  %v2935 = vrot.slane %v2568, 2
  %v2936 = vrot.slane %v2569, 2
  %v2937 = vrot.slane %v2570, 2
  %v2938 = vrot.slane %v2571, 2
  %v2939 = vrot.slane %v2572, 2
  %v2940 = vrot.slane %v2573, 2
  %v2941 = vrot.slane %v2574, 2
  %v2942 = vrot.slane %v2575, 2
  %v2943 = vrot.slane %v2576, 2
  %v2944 = vrot.slane %v2577, 2
  %v2945 = vrot.slane %v2578, 2
  %v2946 = vrot.slane %v2579, 2
  %v2947 = vrot.slane %v2580, 2
  %v2948 = vrot.slane %v2581, 2
  %v2949 = vrot.slane %v2582, 2
  %v2950 = vrot.slane %v2583, 2
  %v2951 = vrot.slane %v2584, 2
  %v2952 = vrot.slane %v2585, 2
  %v2953 = vrot.slane %v2586, 2
  %v2954 = vrot.slane %v2587, 2
  %v2955 = vrot.slane %v2588, 2
  %v2956 = vrot.slane %v2589, 2
  %v2957 = vrot.slane %v2590, 2
  %v2958 = vrot.slane %v2591, 2
  %v2959 = vrot.slane %v2592, 2
  %v2960 = vsel %vm1011, %v2958, %v2959
  %v2961 = vsel %vm1011, %v2957, %v2958
  %v2962 = vsel %vm1011, %v2956, %v2957
  %v2963 = vsel %vm1011, %v2955, %v2956
  %v2964 = vsel %vm1011, %v2954, %v2955
  %v2965 = vsel %vm1011, %v2953, %v2954
  %v2966 = vsel %vm1011, %v2952, %v2953
  %v2967 = vsel %vm1011, %v2951, %v2952
  %v2968 = vsel %vm1011, %v2950, %v2951
  %v2969 = vsel %vm1011, %v2949, %v2950
  %v2970 = vsel %vm1011, %v2948, %v2949
  %v2971 = vsel %vm1011, %v2947, %v2948
  %v2972 = vsel %vm1011, %v2946, %v2947
  %v2973 = vsel %vm1011, %v2945, %v2946
  %v2974 = vsel %vm1011, %v2944, %v2945
  %v2975 = vsel %vm1011, %v2943, %v2944
  %v2976 = vsel %vm1011, %v2942, %v2943
  %v2977 = vsel %vm1011, %v2941, %v2942
  %v2978 = vsel %vm1011, %v2940, %v2941
  %v2979 = vsel %vm1011, %v2939, %v2940
  %v2980 = vsel %vm1011, %v2938, %v2939
  %v2981 = vsel %vm1011, %v2937, %v2938
  %v2982 = vsel %vm1011, %v2936, %v2937
  %v2983 = vsel %vm1011, %v2935, %v2936
  %v2984 = vsel %vm1011, %v2934, %v2935
  %s2985 = scalar_lea.vmem %s4, 192
  %v2986 = vld [vmem:[%s2985] sm:$0xff]
  %v2987 = vld [vmem:[%s2985 + $0x8] sm:$0xff]
  %v2988 = vld [vmem:[%s2985 + $0x10] sm:$0xff]
  %v2989 = vld [vmem:[%s2985 + $0x18] sm:$0xff]
  %v2990 = vld [vmem:[%s2985 + $0x20] sm:$0xff]
  %v2991 = vld [vmem:[%s2985 + $0x28] sm:$0xff]
  %v2992 = vld [vmem:[%s2985 + $0x30] sm:$0xff]
  %v2993 = vld [vmem:[%s2985 + $0x38] sm:$0xff]
  %v2994 = vld [vmem:[%s2985 + $0x40] sm:$0xff]
  %v2995 = vld [vmem:[%s2985 + $0x48] sm:$0xff]
  %v2996 = vld [vmem:[%s2985 + $0x50] sm:$0xff]
  %v2997 = vld [vmem:[%s2985 + $0x58] sm:$0xff]
  %v2998 = vrot.slane %v2567, 3
  %v2999 = vrot.slane %v2568, 3
  %v3000 = vrot.slane %v2569, 3
  %v3001 = vrot.slane %v2570, 3
  %v3002 = vrot.slane %v2571, 3
  %v3003 = vrot.slane %v2572, 3
  %v3004 = vrot.slane %v2573, 3
  %v3005 = vrot.slane %v2574, 3
  %v3006 = vrot.slane %v2575, 3
  %v3007 = vrot.slane %v2576, 3
  %v3008 = vrot.slane %v2577, 3
  %v3009 = vrot.slane %v2578, 3
  %v3010 = vrot.slane %v2579, 3
  %v3011 = vrot.slane %v2580, 3
  %v3012 = vrot.slane %v2581, 3
  %v3013 = vrot.slane %v2582, 3
  %v3014 = vrot.slane %v2583, 3
  %v3015 = vrot.slane %v2584, 3
  %v3016 = vrot.slane %v2585, 3
  %v3017 = vrot.slane %v2586, 3
  %v3018 = vrot.slane %v2587, 3
  %v3019 = vrot.slane %v2588, 3
  %v3020 = vrot.slane %v2589, 3
  %v3021 = vrot.slane %v2590, 3
  %v3022 = vrot.slane %v2591, 3
  %v3023 = vrot.slane %v2592, 3
  %v3024 = vsel %vm1078, %v3022, %v3023
  %v3025 = vsel %vm1078, %v3021, %v3022
  %v3026 = vsel %vm1078, %v3020, %v3021
  %v3027 = vsel %vm1078, %v3019, %v3020
  %v3028 = vsel %vm1078, %v3018, %v3019
  %v3029 = vsel %vm1078, %v3017, %v3018
  %v3030 = vsel %vm1078, %v3016, %v3017
  %v3031 = vsel %vm1078, %v3015, %v3016
  %v3032 = vsel %vm1078, %v3014, %v3015
  %v3033 = vsel %vm1078, %v3013, %v3014
  %v3034 = vsel %vm1078, %v3012, %v3013
  %v3035 = vsel %vm1078, %v3011, %v3012
  %v3036 = vsel %vm1078, %v3010, %v3011
  %v3037 = vsel %vm1078, %v3009, %v3010
  %v3038 = vsel %vm1078, %v3008, %v3009
  %v3039 = vsel %vm1078, %v3007, %v3008
  %v3040 = vsel %vm1078, %v3006, %v3007
  %v3041 = vsel %vm1078, %v3005, %v3006
  %v3042 = vsel %vm1078, %v3004, %v3005
  %v3043 = vsel %vm1078, %v3003, %v3004
  %v3044 = vsel %vm1078, %v3002, %v3003
  %v3045 = vsel %vm1078, %v3001, %v3002
  %v3046 = vsel %vm1078, %v3000, %v3001
  %v3047 = vsel %vm1078, %v2999, %v3000
  %v3048 = vsel %vm1078, %v2998, %v2999
  %s3049 = scalar_lea.vmem %s4, 288
  %v3050 = vld [vmem:[%s3049] sm:$0xff]
  %v3051 = vld [vmem:[%s3049 + $0x8] sm:$0xff]
  %v3052 = vld [vmem:[%s3049 + $0x10] sm:$0xff]
  %v3053 = vld [vmem:[%s3049 + $0x18] sm:$0xff]
  %v3054 = vld [vmem:[%s3049 + $0x20] sm:$0xff]
  %v3055 = vld [vmem:[%s3049 + $0x28] sm:$0xff]
  %v3056 = vld [vmem:[%s3049 + $0x30] sm:$0xff]
  %v3057 = vld [vmem:[%s3049 + $0x38] sm:$0xff]
  %v3058 = vld [vmem:[%s3049 + $0x40] sm:$0xff]
  %v3059 = vld [vmem:[%s3049 + $0x48] sm:$0xff]
  %v3060 = vld [vmem:[%s3049 + $0x50] sm:$0xff]
  %v3061 = vld [vmem:[%s3049 + $0x58] sm:$0xff]
  %v3063 = vsel %vm710, %v3048, 0
  %v3066 = vsel %vm710, %v3047, 0
  %v3069 = vsel %vm710, %v3046, 0
  %v3072 = vsel %vm710, %v3045, 0
  %v3075 = vsel %vm710, %v3044, 0
  %v3078 = vsel %vm710, %v3043, 0
  %v3081 = vsel %vm710, %v3042, 0
  %v3084 = vsel %vm710, %v3041, 0
  %v3087 = vsel %vm710, %v3040, 0
  %v3090 = vsel %vm710, %v3039, 0
  %v3093 = vsel %vm710, %v3038, 0
  %v3096 = vsel %vm710, %v3037, 0
  %v3099 = vsel %vm710, %v3036, 0
  %v3102 = vsel %vm710, %v3035, 0
  %v3105 = vsel %vm710, %v3034, 0
  %v3108 = vsel %vm710, %v3033, 0
  %v3111 = vsel %vm710, %v3032, 0
  %v3114 = vsel %vm710, %v3031, 0
  %v3117 = vsel %vm710, %v3030, 0
  %v3120 = vsel %vm710, %v3029, 0
  %v3123 = vsel %vm710, %v3028, 0
  %v3126 = vsel %vm710, %v3027, 0
  %v3129 = vsel %vm710, %v3026, 0
  %v3132 = vsel %vm710, %v3025, 0
  %v3135 = vsel %vm710, %v3024, 0
  %3137 = vmatprep.subr.mxu0 0.0
  %3138 = vmatpush1.msra.mxu0 %v3050
  %3139 = vmatprep.subr.mxu0 0.0
  %3140 = vmatpush1.msra.mxu0 %v3051
  %3141 = vmatprep.subr.mxu0 0.0
  %3142 = vmatpush1.msra.mxu0 %v3052
  %3143 = vmatprep.subr.mxu0 0.0
  %3144 = vmatpush1.msra.mxu0 %v3053
  %3145 = vmatprep.subr.mxu0 0.0
  %3146 = vmatpush1.msra.mxu0 %v3054
  %3147 = vmatprep.subr.mxu0 0.0
  %3148 = vmatpush1.msra.mxu0 %v3055
  %3149 = vmatprep.subr.mxu0 0.0
  %3150 = vmatpush1.msra.mxu0 %v3056
  %3151 = vmatprep.subr.mxu0 0.0
  %3152 = vmatpush1.msra.mxu0 %v3057
  %3153 = vmatprep.subr.mxu0 0.0
  %3154 = vmatpush1.msra.mxu0 %v3058
  %3155 = vmatprep.subr.mxu0 0.0
  %3156 = vmatpush1.msra.mxu0 %v3059
  %3157 = vmatprep.subr.mxu0 0.0
  %3158 = vmatpush1.msra.mxu0 %v3060
  %3159 = vmatprep.subr.mxu0 0.0
  %3160 = vmatpush1.msra.mxu0 %v3061
  %3161 = vmatprep.subr.mxu0 0.0
  %3162 = vmatpush1.msra.mxu0 0.0
  %3163 = vmatprep.subr.mxu0 0.0
  %3164 = vmatpush1.msra.mxu0 0.0
  %3165 = vmatprep.subr.mxu0 0.0
  %3166 = vmatpush1.msra.mxu0 0.0
  %3167 = vmatprep.subr.mxu0 0.0
  %3168 = vmatpush1.msra.mxu0 0.0
  %3169 = vmatprep.subr.mxu0 0.0
  %3170 = vmatpush1.msra.mxu0 0.0
  %3171 = vmatprep.subr.mxu0 0.0
  %3172 = vmatpush1.msra.mxu0 0.0
  %3173 = vmatprep.subr.mxu0 0.0
  %3174 = vmatpush1.msra.mxu0 0.0
  %3175 = vmatprep.subr.mxu0 0.0
  %3176 = vmatpush1.msra.mxu0 0.0
  %3177 = vmatprep.subr.mxu0 0.0
  %3178 = vmatpush1.msra.mxu0 0.0
  %3179 = vmatprep.subr.mxu0 0.0
  %3180 = vmatpush1.msra.mxu0 0.0
  %3181 = vmatprep.subr.mxu0 0.0
  %3182 = vmatpush1.msra.mxu0 0.0
  %3183 = vmatprep.subr.mxu0 0.0
  %3184 = vmatpush1.msra.mxu0 0.0
  %3185 = vmatprep.subr.mxu0 0.0
  %3186 = vmatpush1.msra.mxu0 0.0
  %3187 = vmatprep.subr.mxu0 0.0
  %3188 = vmatpush1.msra.mxu0 0.0
  %3189 = vmatprep.subr.mxu0 0.0
  %3190 = vmatpush1.msra.mxu0 0.0
  %3191 = vmatprep.subr.mxu0 0.0
  %3192 = vmatpush1.msra.mxu0 0.0
  %3193 = vmatprep.subr.mxu0 0.0
  %3194 = vmatpush1.msra.mxu0 0.0
  %3195 = vmatprep.subr.mxu0 0.0
  %3196 = vmatpush1.msra.mxu0 0.0
  %3197 = vmatprep.subr.mxu0 0.0
  %3198 = vmatpush1.msra.mxu0 0.0
  %3199 = vmatprep.subr.mxu0 0.0
  %3200 = vmatpush1.msra.mxu0 0.0
  %3201 = vmatprep.mubr.f32.mxu0 0.0
  %3202 = vmatmul.mubr.f32.gmra.mrb[0].mxu0 %v3063
  %v3203 = vpop.f32.mrb[0].mxu0
  %v3204 = vadd.f32 0.0, %v3203
  %v3205 = vpop.f32.mrb[0].mxu0
  %3206 = vmatprep.mubr.f32.mxu0 0.0
  %3207 = vmatmul.mubr.f32.gmra.mrb[0].mxu0 %v3066
  %v3208 = vpop.f32.mrb[0].mxu0
  %v3209 = vadd.f32 0.0, %v3208
  %v3210 = vpop.f32.mrb[0].mxu0
  %3211 = vmatprep.mubr.f32.mxu0 0.0
  %3212 = vmatmul.mubr.f32.gmra.mrb[0].mxu0 %v3069
  %v3213 = vpop.f32.mrb[0].mxu0
  %v3214 = vadd.f32 0.0, %v3213
  %v3215 = vpop.f32.mrb[0].mxu0
  %3216 = vmatprep.mubr.f32.mxu0 0.0
  %3217 = vmatmul.mubr.f32.gmra.mrb[0].mxu0 %v3072
  %v3218 = vpop.f32.mrb[0].mxu0
  %v3219 = vadd.f32 0.0, %v3218
  %v3220 = vpop.f32.mrb[0].mxu0
  %3221 = vmatprep.mubr.f32.mxu0 0.0
  %3222 = vmatmul.mubr.f32.gmra.mrb[0].mxu0 %v3075
  %v3223 = vpop.f32.mrb[0].mxu0
  %v3224 = vadd.f32 0.0, %v3223
  %v3225 = vpop.f32.mrb[0].mxu0
  %3226 = vmatprep.mubr.f32.mxu0 0.0
  %3227 = vmatmul.mubr.f32.gmra.mrb[0].mxu0 %v3078
  %v3228 = vpop.f32.mrb[0].mxu0
  %v3229 = vadd.f32 0.0, %v3228
  %v3230 = vpop.f32.mrb[0].mxu0
  %3231 = vmatprep.mubr.f32.mxu0 0.0
  %3232 = vmatmul.mubr.f32.gmra.mrb[0].mxu0 %v3081
  %v3233 = vpop.f32.mrb[0].mxu0
  %v3234 = vadd.f32 0.0, %v3233
  %v3235 = vpop.f32.mrb[0].mxu0
  %3236 = vmatprep.mubr.f32.mxu0 0.0
  %3237 = vmatmul.mubr.f32.gmra.mrb[0].mxu0 %v3084
  %v3238 = vpop.f32.mrb[0].mxu0
  %v3239 = vadd.f32 0.0, %v3238
  %v3240 = vpop.f32.mrb[0].mxu0
  %3241 = vmatprep.mubr.f32.mxu0 0.0
  %3242 = vmatmul.mubr.f32.gmra.mrb[0].mxu0 %v3087
  %v3243 = vpop.f32.mrb[0].mxu0
  %v3244 = vadd.f32 0.0, %v3243
  %v3245 = vpop.f32.mrb[0].mxu0
  %3246 = vmatprep.mubr.f32.mxu0 0.0
  %3247 = vmatmul.mubr.f32.gmra.mrb[0].mxu0 %v3090
  %v3248 = vpop.f32.mrb[0].mxu0
  %v3249 = vadd.f32 0.0, %v3248
  %v3250 = vpop.f32.mrb[0].mxu0
  %3251 = vmatprep.mubr.f32.mxu0 0.0
  %3252 = vmatmul.mubr.f32.gmra.mrb[0].mxu0 %v3093
  %v3253 = vpop.f32.mrb[0].mxu0
  %v3254 = vadd.f32 0.0, %v3253
  %v3255 = vpop.f32.mrb[0].mxu0
  %3256 = vmatprep.mubr.f32.mxu0 0.0
  %3257 = vmatmul.mubr.f32.gmra.mrb[0].mxu0 %v3096
  %v3258 = vpop.f32.mrb[0].mxu0
  %v3259 = vadd.f32 0.0, %v3258
  %v3260 = vpop.f32.mrb[0].mxu0
  %3261 = vmatprep.mubr.f32.mxu0 0.0
  %3262 = vmatmul.mubr.f32.gmra.mrb[0].mxu0 %v3099
  %v3263 = vpop.f32.mrb[0].mxu0
  %v3264 = vadd.f32 0.0, %v3263
  %v3265 = vpop.f32.mrb[0].mxu0
  %3266 = vmatprep.mubr.f32.mxu0 0.0
  %3267 = vmatmul.mubr.f32.gmra.mrb[0].mxu0 %v3102
  %v3268 = vpop.f32.mrb[0].mxu0
  %v3269 = vadd.f32 0.0, %v3268
  %v3270 = vpop.f32.mrb[0].mxu0
  %3271 = vmatprep.mubr.f32.mxu0 0.0
  %3272 = vmatmul.mubr.f32.gmra.mrb[0].mxu0 %v3105
  %v3273 = vpop.f32.mrb[0].mxu0
  %v3274 = vadd.f32 0.0, %v3273
  %v3275 = vpop.f32.mrb[0].mxu0
  %3276 = vmatprep.mubr.f32.mxu0 0.0
  %3277 = vmatmul.mubr.f32.gmra.mrb[0].mxu0 %v3108
  %v3278 = vpop.f32.mrb[0].mxu0
  %v3279 = vadd.f32 0.0, %v3278
  %v3280 = vpop.f32.mrb[0].mxu0
  %3281 = vmatprep.mubr.f32.mxu0 0.0
  %3282 = vmatmul.mubr.f32.gmra.mrb[0].mxu0 %v3111
  %v3283 = vpop.f32.mrb[0].mxu0
  %v3284 = vadd.f32 0.0, %v3283
  %v3285 = vpop.f32.mrb[0].mxu0
  %3286 = vmatprep.mubr.f32.mxu0 0.0
  %3287 = vmatmul.mubr.f32.gmra.mrb[0].mxu0 %v3114
  %v3288 = vpop.f32.mrb[0].mxu0
  %v3289 = vadd.f32 0.0, %v3288
  %v3290 = vpop.f32.mrb[0].mxu0
  %3291 = vmatprep.mubr.f32.mxu0 0.0
  %3292 = vmatmul.mubr.f32.gmra.mrb[0].mxu0 %v3117
  %v3293 = vpop.f32.mrb[0].mxu0
  %v3294 = vadd.f32 0.0, %v3293
  %v3295 = vpop.f32.mrb[0].mxu0
  %3296 = vmatprep.mubr.f32.mxu0 0.0
  %3297 = vmatmul.mubr.f32.gmra.mrb[0].mxu0 %v3120
  %v3298 = vpop.f32.mrb[0].mxu0
  %v3299 = vadd.f32 0.0, %v3298
  %v3300 = vpop.f32.mrb[0].mxu0
  %3301 = vmatprep.mubr.f32.mxu0 0.0
  %3302 = vmatmul.mubr.f32.gmra.mrb[0].mxu0 %v3123
  %v3303 = vpop.f32.mrb[0].mxu0
  %v3304 = vadd.f32 0.0, %v3303
  %v3305 = vpop.f32.mrb[0].mxu0
  %3306 = vmatprep.mubr.f32.mxu0 0.0
  %3307 = vmatmul.mubr.f32.gmra.mrb[0].mxu0 %v3126
  %v3308 = vpop.f32.mrb[0].mxu0
  %v3309 = vadd.f32 0.0, %v3308
  %v3310 = vpop.f32.mrb[0].mxu0
  %3311 = vmatprep.mubr.f32.mxu0 0.0
  %3312 = vmatmul.mubr.f32.gmra.mrb[0].mxu0 %v3129
  %v3313 = vpop.f32.mrb[0].mxu0
  %v3314 = vadd.f32 0.0, %v3313
  %v3315 = vpop.f32.mrb[0].mxu0
  %3316 = vmatprep.mubr.f32.mxu0 0.0
  %3317 = vmatmul.mubr.f32.gmra.mrb[0].mxu0 %v3132
  %v3318 = vpop.f32.mrb[0].mxu0
  %v3319 = vadd.f32 0.0, %v3318
  %v3320 = vpop.f32.mrb[0].mxu0
  %3321 = vmatprep.mubr.f32.mxu0 0.0
  %3322 = vmatmul.mubr.f32.gmra.mrb[0].mxu0 %v3135
  %v3323 = vpop.f32.mrb[0].mxu0
  %v3324 = vadd.f32 0.0, %v3323
  %v3325 = vpop.f32.mrb[0].mxu0
  %3326 = vdwg.mxu0
  %v3327 = vrot.slane %v2567, 4
  %v3328 = vrot.slane %v2568, 4
  %v3329 = vrot.slane %v2569, 4
  %v3330 = vrot.slane %v2570, 4
  %v3331 = vrot.slane %v2571, 4
  %v3332 = vrot.slane %v2572, 4
  %v3333 = vrot.slane %v2573, 4
  %v3334 = vrot.slane %v2574, 4
  %v3335 = vrot.slane %v2575, 4
  %v3336 = vrot.slane %v2576, 4
  %v3337 = vrot.slane %v2577, 4
  %v3338 = vrot.slane %v2578, 4
  %v3339 = vrot.slane %v2579, 4
  %v3340 = vrot.slane %v2580, 4
  %v3341 = vrot.slane %v2581, 4
  %v3342 = vrot.slane %v2582, 4
  %v3343 = vrot.slane %v2583, 4
  %v3344 = vrot.slane %v2584, 4
  %v3345 = vrot.slane %v2585, 4
  %v3346 = vrot.slane %v2586, 4
  %v3347 = vrot.slane %v2587, 4
  %v3348 = vrot.slane %v2588, 4
  %v3349 = vrot.slane %v2589, 4
  %v3350 = vrot.slane %v2590, 4
  %v3351 = vrot.slane %v2591, 4
  %v3352 = vrot.slane %v2592, 4
  %v3353 = vsel %vm1418, %v3351, %v3352
  %v3354 = vsel %vm1418, %v3350, %v3351
  %v3355 = vsel %vm1418, %v3349, %v3350
  %v3356 = vsel %vm1418, %v3348, %v3349
  %v3357 = vsel %vm1418, %v3347, %v3348
  %v3358 = vsel %vm1418, %v3346, %v3347
  %v3359 = vsel %vm1418, %v3345, %v3346
  %v3360 = vsel %vm1418, %v3344, %v3345
  %v3361 = vsel %vm1418, %v3343, %v3344
  %v3362 = vsel %vm1418, %v3342, %v3343
  %v3363 = vsel %vm1418, %v3341, %v3342
  %v3364 = vsel %vm1418, %v3340, %v3341
  %v3365 = vsel %vm1418, %v3339, %v3340
  %v3366 = vsel %vm1418, %v3338, %v3339
  %v3367 = vsel %vm1418, %v3337, %v3338
  %v3368 = vsel %vm1418, %v3336, %v3337
  %v3369 = vsel %vm1418, %v3335, %v3336
  %v3370 = vsel %vm1418, %v3334, %v3335
  %v3371 = vsel %vm1418, %v3333, %v3334
  %v3372 = vsel %vm1418, %v3332, %v3333
  %v3373 = vsel %vm1418, %v3331, %v3332
  %v3374 = vsel %vm1418, %v3330, %v3331
  %v3375 = vsel %vm1418, %v3329, %v3330
  %v3376 = vsel %vm1418, %v3328, %v3329
  %v3377 = vsel %vm1418, %v3327, %v3328
  %s3378 = scalar_lea.vmem %s4, 384
  %v3379 = vld [vmem:[%s3378] sm:$0xff]
  %v3380 = vld [vmem:[%s3378 + $0x8] sm:$0xff]
  %v3381 = vld [vmem:[%s3378 + $0x10] sm:$0xff]
  %v3382 = vld [vmem:[%s3378 + $0x18] sm:$0xff]
  %v3383 = vld [vmem:[%s3378 + $0x20] sm:$0xff]
  %v3384 = vld [vmem:[%s3378 + $0x28] sm:$0xff]
  %v3385 = vld [vmem:[%s3378 + $0x30] sm:$0xff]
  %v3386 = vld [vmem:[%s3378 + $0x38] sm:$0xff]
  %v3387 = vld [vmem:[%s3378 + $0x40] sm:$0xff]
  %v3388 = vld [vmem:[%s3378 + $0x48] sm:$0xff]
  %v3389 = vld [vmem:[%s3378 + $0x50] sm:$0xff]
  %v3390 = vld [vmem:[%s3378 + $0x58] sm:$0xff]
  %v3392 = vsel %vm710, %v3377, 0
  %v3395 = vsel %vm710, %v3376, 0
  %v3398 = vsel %vm710, %v3375, 0
  %v3401 = vsel %vm710, %v3374, 0
  %v3404 = vsel %vm710, %v3373, 0
  %v3407 = vsel %vm710, %v3372, 0
  %v3410 = vsel %vm710, %v3371, 0
  %v3413 = vsel %vm710, %v3370, 0
  %v3416 = vsel %vm710, %v3369, 0
  %v3419 = vsel %vm710, %v3368, 0
  %v3422 = vsel %vm710, %v3367, 0
  %v3425 = vsel %vm710, %v3366, 0
  %v3428 = vsel %vm710, %v3365, 0
  %v3431 = vsel %vm710, %v3364, 0
  %v3434 = vsel %vm710, %v3363, 0
  %v3437 = vsel %vm710, %v3362, 0
  %v3440 = vsel %vm710, %v3361, 0
  %v3443 = vsel %vm710, %v3360, 0
  %v3446 = vsel %vm710, %v3359, 0
  %v3449 = vsel %vm710, %v3358, 0
  %v3452 = vsel %vm710, %v3357, 0
  %v3455 = vsel %vm710, %v3356, 0
  %v3458 = vsel %vm710, %v3355, 0
  %v3461 = vsel %vm710, %v3354, 0
  %v3464 = vsel %vm710, %v3353, 0
  %3466 = vmatprep.subr.mxu0 0.0
  %3467 = vmatpush1.msra.mxu0 %v3379
  %3468 = vmatprep.subr.mxu0 0.0
  %3469 = vmatpush1.msra.mxu0 %v3380
  %3470 = vmatprep.subr.mxu0 0.0
  %3471 = vmatpush1.msra.mxu0 %v3381
  %3472 = vmatprep.subr.mxu0 0.0
  %3473 = vmatpush1.msra.mxu0 %v3382
  %3474 = vmatprep.subr.mxu0 0.0
  %3475 = vmatpush1.msra.mxu0 %v3383
  %3476 = vmatprep.subr.mxu0 0.0
  %3477 = vmatpush1.msra.mxu0 %v3384
  %3478 = vmatprep.subr.mxu0 0.0
  %3479 = vmatpush1.msra.mxu0 %v3385
  %3480 = vmatprep.subr.mxu0 0.0
  %3481 = vmatpush1.msra.mxu0 %v3386
  %3482 = vmatprep.subr.mxu0 0.0
  %3483 = vmatpush1.msra.mxu0 %v3387
  %3484 = vmatprep.subr.mxu0 0.0
  %3485 = vmatpush1.msra.mxu0 %v3388
  %3486 = vmatprep.subr.mxu0 0.0
  %3487 = vmatpush1.msra.mxu0 %v3389
  %3488 = vmatprep.subr.mxu0 0.0
  %3489 = vmatpush1.msra.mxu0 %v3390
  %3490 = vmatprep.subr.mxu0 0.0
  %3491 = vmatpush1.msra.mxu0 0.0
  %3492 = vmatprep.subr.mxu0 0.0
  %3493 = vmatpush1.msra.mxu0 0.0
  %3494 = vmatprep.subr.mxu0 0.0
  %3495 = vmatpush1.msra.mxu0 0.0
  %3496 = vmatprep.subr.mxu0 0.0
  %3497 = vmatpush1.msra.mxu0 0.0
  %3498 = vmatprep.subr.mxu0 0.0
  %3499 = vmatpush1.msra.mxu0 0.0
  %3500 = vmatprep.subr.mxu0 0.0
  %3501 = vmatpush1.msra.mxu0 0.0
  %3502 = vmatprep.subr.mxu0 0.0
  %3503 = vmatpush1.msra.mxu0 0.0
  %3504 = vmatprep.subr.mxu0 0.0
  %3505 = vmatpush1.msra.mxu0 0.0
  %3506 = vmatprep.subr.mxu0 0.0
  %3507 = vmatpush1.msra.mxu0 0.0
  %3508 = vmatprep.subr.mxu0 0.0
  %3509 = vmatpush1.msra.mxu0 0.0
  %3510 = vmatprep.subr.mxu0 0.0
  %3511 = vmatpush1.msra.mxu0 0.0
  %3512 = vmatprep.subr.mxu0 0.0
  %3513 = vmatpush1.msra.mxu0 0.0
  %3514 = vmatprep.subr.mxu0 0.0
  %3515 = vmatpush1.msra.mxu0 0.0
  %3516 = vmatprep.subr.mxu0 0.0
  %3517 = vmatpush1.msra.mxu0 0.0
  %3518 = vmatprep.subr.mxu0 0.0
  %3519 = vmatpush1.msra.mxu0 0.0
  %3520 = vmatprep.subr.mxu0 0.0
  %3521 = vmatpush1.msra.mxu0 0.0
  %3522 = vmatprep.subr.mxu0 0.0
  %3523 = vmatpush1.msra.mxu0 0.0
  %3524 = vmatprep.subr.mxu0 0.0
  %3525 = vmatpush1.msra.mxu0 0.0
  %3526 = vmatprep.subr.mxu0 0.0
  %3527 = vmatpush1.msra.mxu0 0.0
  %3528 = vmatprep.subr.mxu0 0.0
  %3529 = vmatpush1.msra.mxu0 0.0
  %3530 = vmatprep.mubr.f32.mxu0 0.0
  %3531 = vmatmul.mubr.f32.gmra.mrb[0].mxu0 %v3392
  %v3532 = vpop.f32.mrb[0].mxu0
  %v3533 = vadd.f32 0.0, %v3532
  %v3534 = vpop.f32.mrb[0].mxu0
  %3535 = vmatprep.mubr.f32.mxu0 0.0
  %3536 = vmatmul.mubr.f32.gmra.mrb[0].mxu0 %v3395
  %v3537 = vpop.f32.mrb[0].mxu0
  %v3538 = vadd.f32 0.0, %v3537
  %v3539 = vpop.f32.mrb[0].mxu0
  %3540 = vmatprep.mubr.f32.mxu0 0.0
  %3541 = vmatmul.mubr.f32.gmra.mrb[0].mxu0 %v3398
  %v3542 = vpop.f32.mrb[0].mxu0
  %v3543 = vadd.f32 0.0, %v3542
  %v3544 = vpop.f32.mrb[0].mxu0
  %3545 = vmatprep.mubr.f32.mxu0 0.0
  %3546 = vmatmul.mubr.f32.gmra.mrb[0].mxu0 %v3401
  %v3547 = vpop.f32.mrb[0].mxu0
  %v3548 = vadd.f32 0.0, %v3547
  %v3549 = vpop.f32.mrb[0].mxu0
  %3550 = vmatprep.mubr.f32.mxu0 0.0
  %3551 = vmatmul.mubr.f32.gmra.mrb[0].mxu0 %v3404
  %v3552 = vpop.f32.mrb[0].mxu0
  %v3553 = vadd.f32 0.0, %v3552
  %v3554 = vpop.f32.mrb[0].mxu0
  %3555 = vmatprep.mubr.f32.mxu0 0.0
  %3556 = vmatmul.mubr.f32.gmra.mrb[0].mxu0 %v3407
  %v3557 = vpop.f32.mrb[0].mxu0
  %v3558 = vadd.f32 0.0, %v3557
  %v3559 = vpop.f32.mrb[0].mxu0
  %3560 = vmatprep.mubr.f32.mxu0 0.0
  %3561 = vmatmul.mubr.f32.gmra.mrb[0].mxu0 %v3410
  %v3562 = vpop.f32.mrb[0].mxu0
  %v3563 = vadd.f32 0.0, %v3562
  %v3564 = vpop.f32.mrb[0].mxu0
  %3565 = vmatprep.mubr.f32.mxu0 0.0
  %3566 = vmatmul.mubr.f32.gmra.mrb[0].mxu0 %v3413
  %v3567 = vpop.f32.mrb[0].mxu0
  %v3568 = vadd.f32 0.0, %v3567
  %v3569 = vpop.f32.mrb[0].mxu0
  %3570 = vmatprep.mubr.f32.mxu0 0.0
  %3571 = vmatmul.mubr.f32.gmra.mrb[0].mxu0 %v3416
  %v3572 = vpop.f32.mrb[0].mxu0
  %v3573 = vadd.f32 0.0, %v3572
  %v3574 = vpop.f32.mrb[0].mxu0
  %3575 = vmatprep.mubr.f32.mxu0 0.0
  %3576 = vmatmul.mubr.f32.gmra.mrb[0].mxu0 %v3419
  %v3577 = vpop.f32.mrb[0].mxu0
  %v3578 = vadd.f32 0.0, %v3577
  %v3579 = vpop.f32.mrb[0].mxu0
  %3580 = vmatprep.mubr.f32.mxu0 0.0
  %3581 = vmatmul.mubr.f32.gmra.mrb[0].mxu0 %v3422
  %v3582 = vpop.f32.mrb[0].mxu0
  %v3583 = vadd.f32 0.0, %v3582
  %v3584 = vpop.f32.mrb[0].mxu0
  %3585 = vmatprep.mubr.f32.mxu0 0.0
  %3586 = vmatmul.mubr.f32.gmra.mrb[0].mxu0 %v3425
  %v3587 = vpop.f32.mrb[0].mxu0
  %v3588 = vadd.f32 0.0, %v3587
  %v3589 = vpop.f32.mrb[0].mxu0
  %3590 = vmatprep.mubr.f32.mxu0 0.0
  %3591 = vmatmul.mubr.f32.gmra.mrb[0].mxu0 %v3428
  %v3592 = vpop.f32.mrb[0].mxu0
  %v3593 = vadd.f32 0.0, %v3592
  %v3594 = vpop.f32.mrb[0].mxu0
  %3595 = vmatprep.mubr.f32.mxu0 0.0
  %3596 = vmatmul.mubr.f32.gmra.mrb[0].mxu0 %v3431
  %v3597 = vpop.f32.mrb[0].mxu0
  %v3598 = vadd.f32 0.0, %v3597
  %v3599 = vpop.f32.mrb[0].mxu0
  %3600 = vmatprep.mubr.f32.mxu0 0.0
  %3601 = vmatmul.mubr.f32.gmra.mrb[0].mxu0 %v3434
  %v3602 = vpop.f32.mrb[0].mxu0
  %v3603 = vadd.f32 0.0, %v3602
  %v3604 = vpop.f32.mrb[0].mxu0
  %3605 = vmatprep.mubr.f32.mxu0 0.0
  %3606 = vmatmul.mubr.f32.gmra.mrb[0].mxu0 %v3437
  %v3607 = vpop.f32.mrb[0].mxu0
  %v3608 = vadd.f32 0.0, %v3607
  %v3609 = vpop.f32.mrb[0].mxu0
  %3610 = vmatprep.mubr.f32.mxu0 0.0
  %3611 = vmatmul.mubr.f32.gmra.mrb[0].mxu0 %v3440
  %v3612 = vpop.f32.mrb[0].mxu0
  %v3613 = vadd.f32 0.0, %v3612
  %v3614 = vpop.f32.mrb[0].mxu0
  %3615 = vmatprep.mubr.f32.mxu0 0.0
  %3616 = vmatmul.mubr.f32.gmra.mrb[0].mxu0 %v3443
  %v3617 = vpop.f32.mrb[0].mxu0
  %v3618 = vadd.f32 0.0, %v3617
  %v3619 = vpop.f32.mrb[0].mxu0
  %3620 = vmatprep.mubr.f32.mxu0 0.0
  %3621 = vmatmul.mubr.f32.gmra.mrb[0].mxu0 %v3446
  %v3622 = vpop.f32.mrb[0].mxu0
  %v3623 = vadd.f32 0.0, %v3622
  %v3624 = vpop.f32.mrb[0].mxu0
  %3625 = vmatprep.mubr.f32.mxu0 0.0
  %3626 = vmatmul.mubr.f32.gmra.mrb[0].mxu0 %v3449
  %v3627 = vpop.f32.mrb[0].mxu0
  %v3628 = vadd.f32 0.0, %v3627
  %v3629 = vpop.f32.mrb[0].mxu0
  %3630 = vmatprep.mubr.f32.mxu0 0.0
  %3631 = vmatmul.mubr.f32.gmra.mrb[0].mxu0 %v3452
  %v3632 = vpop.f32.mrb[0].mxu0
  %v3633 = vadd.f32 0.0, %v3632
  %v3634 = vpop.f32.mrb[0].mxu0
  %3635 = vmatprep.mubr.f32.mxu0 0.0
  %3636 = vmatmul.mubr.f32.gmra.mrb[0].mxu0 %v3455
  %v3637 = vpop.f32.mrb[0].mxu0
  %v3638 = vadd.f32 0.0, %v3637
  %v3639 = vpop.f32.mrb[0].mxu0
  %3640 = vmatprep.mubr.f32.mxu0 0.0
  %3641 = vmatmul.mubr.f32.gmra.mrb[0].mxu0 %v3458
  %v3642 = vpop.f32.mrb[0].mxu0
  %v3643 = vadd.f32 0.0, %v3642
  %v3644 = vpop.f32.mrb[0].mxu0
  %3645 = vmatprep.mubr.f32.mxu0 0.0
  %3646 = vmatmul.mubr.f32.gmra.mrb[0].mxu0 %v3461
  %v3647 = vpop.f32.mrb[0].mxu0
  %v3648 = vadd.f32 0.0, %v3647
  %v3649 = vpop.f32.mrb[0].mxu0
  %3650 = vmatprep.mubr.f32.mxu0 0.0
  %3651 = vmatmul.mubr.f32.gmra.mrb[0].mxu0 %v3464
  %v3652 = vpop.f32.mrb[0].mxu0
  %v3653 = vadd.f32 0.0, %v3652
  %v3654 = vpop.f32.mrb[0].mxu0
  %3655 = vdwg.mxu0
  %v3657 = vsel %vm710, %v2567, 0
  %v3660 = vsel %vm710, %v2568, 0
  %v3663 = vsel %vm710, %v2569, 0
  %v3666 = vsel %vm710, %v2570, 0
  %v3669 = vsel %vm710, %v2571, 0
  %v3672 = vsel %vm710, %v2572, 0
  %v3675 = vsel %vm710, %v2573, 0
  %v3678 = vsel %vm710, %v2574, 0
  %v3681 = vsel %vm710, %v2575, 0
  %v3684 = vsel %vm710, %v2576, 0
  %v3687 = vsel %vm710, %v2577, 0
  %v3690 = vsel %vm710, %v2578, 0
  %v3693 = vsel %vm710, %v2579, 0
  %v3696 = vsel %vm710, %v2580, 0
  %v3699 = vsel %vm710, %v2581, 0
  %v3702 = vsel %vm710, %v2582, 0
  %v3705 = vsel %vm710, %v2583, 0
  %v3708 = vsel %vm710, %v2584, 0
  %v3711 = vsel %vm710, %v2585, 0
  %v3714 = vsel %vm710, %v2586, 0
  %v3717 = vsel %vm710, %v2587, 0
  %v3720 = vsel %vm710, %v2588, 0
  %v3723 = vsel %vm710, %v2589, 0
  %v3726 = vsel %vm710, %v2590, 0
  %v3729 = vsel %vm710, %v2591, 0
  %3731 = vmatprep.subr.mxu0 0.0
  %3732 = vmatpush1.msra.mxu0 %v2593
  %3733 = vmatprep.subr.mxu0 0.0
  %3734 = vmatpush1.msra.mxu0 %v2594
  %3735 = vmatprep.subr.mxu0 0.0
  %3736 = vmatpush1.msra.mxu0 %v2595
  %3737 = vmatprep.subr.mxu0 0.0
  %3738 = vmatpush1.msra.mxu0 %v2596
  %3739 = vmatprep.subr.mxu0 0.0
  %3740 = vmatpush1.msra.mxu0 %v2597
  %3741 = vmatprep.subr.mxu0 0.0
  %3742 = vmatpush1.msra.mxu0 %v2598
  %3743 = vmatprep.subr.mxu0 0.0
  %3744 = vmatpush1.msra.mxu0 %v2599
  %3745 = vmatprep.subr.mxu0 0.0
  %3746 = vmatpush1.msra.mxu0 %v2600
  %3747 = vmatprep.subr.mxu0 0.0
  %3748 = vmatpush1.msra.mxu0 %v2601
  %3749 = vmatprep.subr.mxu0 0.0
  %3750 = vmatpush1.msra.mxu0 %v2602
  %3751 = vmatprep.subr.mxu0 0.0
  %3752 = vmatpush1.msra.mxu0 %v2603
  %3753 = vmatprep.subr.mxu0 0.0
  %3754 = vmatpush1.msra.mxu0 %v2604
  %3755 = vmatprep.subr.mxu0 0.0
  %3756 = vmatpush1.msra.mxu0 0.0
  %3757 = vmatprep.subr.mxu0 0.0
  %3758 = vmatpush1.msra.mxu0 0.0
  %3759 = vmatprep.subr.mxu0 0.0
  %3760 = vmatpush1.msra.mxu0 0.0
  %3761 = vmatprep.subr.mxu0 0.0
  %3762 = vmatpush1.msra.mxu0 0.0
  %3763 = vmatprep.subr.mxu0 0.0
  %3764 = vmatpush1.msra.mxu0 0.0
  %3765 = vmatprep.subr.mxu0 0.0
  %3766 = vmatpush1.msra.mxu0 0.0
  %3767 = vmatprep.subr.mxu0 0.0
  %3768 = vmatpush1.msra.mxu0 0.0
  %3769 = vmatprep.subr.mxu0 0.0
  %3770 = vmatpush1.msra.mxu0 0.0
  %3771 = vmatprep.subr.mxu0 0.0
  %3772 = vmatpush1.msra.mxu0 0.0
  %3773 = vmatprep.subr.mxu0 0.0
  %3774 = vmatpush1.msra.mxu0 0.0
  %3775 = vmatprep.subr.mxu0 0.0
  %3776 = vmatpush1.msra.mxu0 0.0
  %3777 = vmatprep.subr.mxu0 0.0
  %3778 = vmatpush1.msra.mxu0 0.0
  %3779 = vmatprep.subr.mxu0 0.0
  %3780 = vmatpush1.msra.mxu0 0.0
  %3781 = vmatprep.subr.mxu0 0.0
  %3782 = vmatpush1.msra.mxu0 0.0
  %3783 = vmatprep.subr.mxu0 0.0
  %3784 = vmatpush1.msra.mxu0 0.0
  %3785 = vmatprep.subr.mxu0 0.0
  %3786 = vmatpush1.msra.mxu0 0.0
  %3787 = vmatprep.subr.mxu0 0.0
  %3788 = vmatpush1.msra.mxu0 0.0
  %3789 = vmatprep.subr.mxu0 0.0
  %3790 = vmatpush1.msra.mxu0 0.0
  %3791 = vmatprep.subr.mxu0 0.0
  %3792 = vmatpush1.msra.mxu0 0.0
  %3793 = vmatprep.subr.mxu0 0.0
  %3794 = vmatpush1.msra.mxu0 0.0
  %3795 = vmatprep.mubr.f32.mxu0 0.0
  %3796 = vmatmul.mubr.f32.gmra.mrb[0].mxu0 %v3657
  %v3797 = vpop.f32.mrb[0].mxu0
  %v3798 = vadd.f32 %v2811, %v3797
  %v3799 = vpop.f32.mrb[0].mxu0
  %3800 = vmatprep.mubr.f32.mxu0 0.0
  %3801 = vmatmul.mubr.f32.gmra.mrb[0].mxu0 %v3660
  %v3802 = vpop.f32.mrb[0].mxu0
  %v3803 = vadd.f32 %v2816, %v3802
  %v3804 = vpop.f32.mrb[0].mxu0
  %3805 = vmatprep.mubr.f32.mxu0 0.0
  %3806 = vmatmul.mubr.f32.gmra.mrb[0].mxu0 %v3663
  %v3807 = vpop.f32.mrb[0].mxu0
  %v3808 = vadd.f32 %v2821, %v3807
  %v3809 = vpop.f32.mrb[0].mxu0
  %3810 = vmatprep.mubr.f32.mxu0 0.0
  %3811 = vmatmul.mubr.f32.gmra.mrb[0].mxu0 %v3666
  %v3812 = vpop.f32.mrb[0].mxu0
  %v3813 = vadd.f32 %v2826, %v3812
  %v3814 = vpop.f32.mrb[0].mxu0
  %3815 = vmatprep.mubr.f32.mxu0 0.0
  %3816 = vmatmul.mubr.f32.gmra.mrb[0].mxu0 %v3669
  %v3817 = vpop.f32.mrb[0].mxu0
  %v3818 = vadd.f32 %v2831, %v3817
  %v3819 = vpop.f32.mrb[0].mxu0
  %3820 = vmatprep.mubr.f32.mxu0 0.0
  %3821 = vmatmul.mubr.f32.gmra.mrb[0].mxu0 %v3672
  %v3822 = vpop.f32.mrb[0].mxu0
  %v3823 = vadd.f32 %v2836, %v3822
  %v3824 = vpop.f32.mrb[0].mxu0
  %3825 = vmatprep.mubr.f32.mxu0 0.0
  %3826 = vmatmul.mubr.f32.gmra.mrb[0].mxu0 %v3675
  %v3827 = vpop.f32.mrb[0].mxu0
  %v3828 = vadd.f32 %v2841, %v3827
  %v3829 = vpop.f32.mrb[0].mxu0
  %3830 = vmatprep.mubr.f32.mxu0 0.0
  %3831 = vmatmul.mubr.f32.gmra.mrb[0].mxu0 %v3678
  %v3832 = vpop.f32.mrb[0].mxu0
  %v3833 = vadd.f32 %v2846, %v3832
  %v3834 = vpop.f32.mrb[0].mxu0
  %3835 = vmatprep.mubr.f32.mxu0 0.0
  %3836 = vmatmul.mubr.f32.gmra.mrb[0].mxu0 %v3681
  %v3837 = vpop.f32.mrb[0].mxu0
  %v3838 = vadd.f32 %v2851, %v3837
  %v3839 = vpop.f32.mrb[0].mxu0
  %3840 = vmatprep.mubr.f32.mxu0 0.0
  %3841 = vmatmul.mubr.f32.gmra.mrb[0].mxu0 %v3684
  %v3842 = vpop.f32.mrb[0].mxu0
  %v3843 = vadd.f32 %v2856, %v3842
  %v3844 = vpop.f32.mrb[0].mxu0
  %3845 = vmatprep.mubr.f32.mxu0 0.0
  %3846 = vmatmul.mubr.f32.gmra.mrb[0].mxu0 %v3687
  %v3847 = vpop.f32.mrb[0].mxu0
  %v3848 = vadd.f32 %v2861, %v3847
  %v3849 = vpop.f32.mrb[0].mxu0
  %3850 = vmatprep.mubr.f32.mxu0 0.0
  %3851 = vmatmul.mubr.f32.gmra.mrb[0].mxu0 %v3690
  %v3852 = vpop.f32.mrb[0].mxu0
  %v3853 = vadd.f32 %v2866, %v3852
  %v3854 = vpop.f32.mrb[0].mxu0
  %3855 = vmatprep.mubr.f32.mxu0 0.0
  %3856 = vmatmul.mubr.f32.gmra.mrb[0].mxu0 %v3693
  %v3857 = vpop.f32.mrb[0].mxu0
  %v3858 = vadd.f32 %v2871, %v3857
  %v3859 = vpop.f32.mrb[0].mxu0
  %3860 = vmatprep.mubr.f32.mxu0 0.0
  %3861 = vmatmul.mubr.f32.gmra.mrb[0].mxu0 %v3696
  %v3862 = vpop.f32.mrb[0].mxu0
  %v3863 = vadd.f32 %v2876, %v3862
  %v3864 = vpop.f32.mrb[0].mxu0
  %3865 = vmatprep.mubr.f32.mxu0 0.0
  %3866 = vmatmul.mubr.f32.gmra.mrb[0].mxu0 %v3699
  %v3867 = vpop.f32.mrb[0].mxu0
  %v3868 = vadd.f32 %v2881, %v3867
  %v3869 = vpop.f32.mrb[0].mxu0
  %3870 = vmatprep.mubr.f32.mxu0 0.0
  %3871 = vmatmul.mubr.f32.gmra.mrb[0].mxu0 %v3702
  %v3872 = vpop.f32.mrb[0].mxu0
  %v3873 = vadd.f32 %v2886, %v3872
  %v3874 = vpop.f32.mrb[0].mxu0
  %3875 = vmatprep.mubr.f32.mxu0 0.0
  %3876 = vmatmul.mubr.f32.gmra.mrb[0].mxu0 %v3705
  %v3877 = vpop.f32.mrb[0].mxu0
  %v3878 = vadd.f32 %v2891, %v3877
  %v3879 = vpop.f32.mrb[0].mxu0
  %3880 = vmatprep.mubr.f32.mxu0 0.0
  %3881 = vmatmul.mubr.f32.gmra.mrb[0].mxu0 %v3708
  %v3882 = vpop.f32.mrb[0].mxu0
  %v3883 = vadd.f32 %v2896, %v3882
  %v3884 = vpop.f32.mrb[0].mxu0
  %3885 = vmatprep.mubr.f32.mxu0 0.0
  %3886 = vmatmul.mubr.f32.gmra.mrb[0].mxu0 %v3711
  %v3887 = vpop.f32.mrb[0].mxu0
  %v3888 = vadd.f32 %v2901, %v3887
  %v3889 = vpop.f32.mrb[0].mxu0
  %3890 = vmatprep.mubr.f32.mxu0 0.0
  %3891 = vmatmul.mubr.f32.gmra.mrb[0].mxu0 %v3714
  %v3892 = vpop.f32.mrb[0].mxu0
  %v3893 = vadd.f32 %v2906, %v3892
  %v3894 = vpop.f32.mrb[0].mxu0
  %3895 = vmatprep.mubr.f32.mxu0 0.0
  %3896 = vmatmul.mubr.f32.gmra.mrb[0].mxu0 %v3717
  %v3897 = vpop.f32.mrb[0].mxu0
  %v3898 = vadd.f32 %v2911, %v3897
  %v3899 = vpop.f32.mrb[0].mxu0
  %3900 = vmatprep.mubr.f32.mxu0 0.0
  %3901 = vmatmul.mubr.f32.gmra.mrb[0].mxu0 %v3720
  %v3902 = vpop.f32.mrb[0].mxu0
  %v3903 = vadd.f32 %v2916, %v3902
  %v3904 = vpop.f32.mrb[0].mxu0
  %3905 = vmatprep.mubr.f32.mxu0 0.0
  %3906 = vmatmul.mubr.f32.gmra.mrb[0].mxu0 %v3723
  %v3907 = vpop.f32.mrb[0].mxu0
  %v3908 = vadd.f32 %v2921, %v3907
  %v3909 = vpop.f32.mrb[0].mxu0
  %3910 = vmatprep.mubr.f32.mxu0 0.0
  %3911 = vmatmul.mubr.f32.gmra.mrb[0].mxu0 %v3726
  %v3912 = vpop.f32.mrb[0].mxu0
  %v3913 = vadd.f32 %v2926, %v3912
  %v3914 = vpop.f32.mrb[0].mxu0
  %3915 = vmatprep.mubr.f32.mxu0 0.0
  %3916 = vmatmul.mubr.f32.gmra.mrb[0].mxu0 %v3729
  %v3917 = vpop.f32.mrb[0].mxu0
  %v3918 = vadd.f32 %v2931, %v3917
  %v3919 = vpop.f32.mrb[0].mxu0
  %3920 = vdwg.mxu0
  %v3922 = vsel %vm710, %v2984, 0
  %v3925 = vsel %vm710, %v2983, 0
  %v3928 = vsel %vm710, %v2982, 0
  %v3931 = vsel %vm710, %v2981, 0
  %v3934 = vsel %vm710, %v2980, 0
  %v3937 = vsel %vm710, %v2979, 0
  %v3940 = vsel %vm710, %v2978, 0
  %v3943 = vsel %vm710, %v2977, 0
  %v3946 = vsel %vm710, %v2976, 0
  %v3949 = vsel %vm710, %v2975, 0
  %v3952 = vsel %vm710, %v2974, 0
  %v3955 = vsel %vm710, %v2973, 0
  %v3958 = vsel %vm710, %v2972, 0
  %v3961 = vsel %vm710, %v2971, 0
  %v3964 = vsel %vm710, %v2970, 0
  %v3967 = vsel %vm710, %v2969, 0
  %v3970 = vsel %vm710, %v2968, 0
  %v3973 = vsel %vm710, %v2967, 0
  %v3976 = vsel %vm710, %v2966, 0
  %v3979 = vsel %vm710, %v2965, 0
  %v3982 = vsel %vm710, %v2964, 0
  %v3985 = vsel %vm710, %v2963, 0
  %v3988 = vsel %vm710, %v2962, 0
  %v3991 = vsel %vm710, %v2961, 0
  %v3994 = vsel %vm710, %v2960, 0
  %3996 = vmatprep.subr.mxu0 0.0
  %3997 = vmatpush1.msra.mxu0 %v2986
  %3998 = vmatprep.subr.mxu0 0.0
  %3999 = vmatpush1.msra.mxu0 %v2987
  %4000 = vmatprep.subr.mxu0 0.0
  %4001 = vmatpush1.msra.mxu0 %v2988
  %4002 = vmatprep.subr.mxu0 0.0
  %4003 = vmatpush1.msra.mxu0 %v2989
  %4004 = vmatprep.subr.mxu0 0.0
  %4005 = vmatpush1.msra.mxu0 %v2990
  %4006 = vmatprep.subr.mxu0 0.0
  %4007 = vmatpush1.msra.mxu0 %v2991
  %4008 = vmatprep.subr.mxu0 0.0
  %4009 = vmatpush1.msra.mxu0 %v2992
  %4010 = vmatprep.subr.mxu0 0.0
  %4011 = vmatpush1.msra.mxu0 %v2993
  %4012 = vmatprep.subr.mxu0 0.0
  %4013 = vmatpush1.msra.mxu0 %v2994
  %4014 = vmatprep.subr.mxu0 0.0
  %4015 = vmatpush1.msra.mxu0 %v2995
  %4016 = vmatprep.subr.mxu0 0.0
  %4017 = vmatpush1.msra.mxu0 %v2996
  %4018 = vmatprep.subr.mxu0 0.0
  %4019 = vmatpush1.msra.mxu0 %v2997
  %4020 = vmatprep.subr.mxu0 0.0
  %4021 = vmatpush1.msra.mxu0 0.0
  %4022 = vmatprep.subr.mxu0 0.0
  %4023 = vmatpush1.msra.mxu0 0.0
  %4024 = vmatprep.subr.mxu0 0.0
  %4025 = vmatpush1.msra.mxu0 0.0
  %4026 = vmatprep.subr.mxu0 0.0
  %4027 = vmatpush1.msra.mxu0 0.0
  %4028 = vmatprep.subr.mxu0 0.0
  %4029 = vmatpush1.msra.mxu0 0.0
  %4030 = vmatprep.subr.mxu0 0.0
  %4031 = vmatpush1.msra.mxu0 0.0
  %4032 = vmatprep.subr.mxu0 0.0
  %4033 = vmatpush1.msra.mxu0 0.0
  %4034 = vmatprep.subr.mxu0 0.0
  %4035 = vmatpush1.msra.mxu0 0.0
  %4036 = vmatprep.subr.mxu0 0.0
  %4037 = vmatpush1.msra.mxu0 0.0
  %4038 = vmatprep.subr.mxu0 0.0
  %4039 = vmatpush1.msra.mxu0 0.0
  %4040 = vmatprep.subr.mxu0 0.0
  %4041 = vmatpush1.msra.mxu0 0.0
  %4042 = vmatprep.subr.mxu0 0.0
  %4043 = vmatpush1.msra.mxu0 0.0
  %4044 = vmatprep.subr.mxu0 0.0
  %4045 = vmatpush1.msra.mxu0 0.0
  %4046 = vmatprep.subr.mxu0 0.0
  %4047 = vmatpush1.msra.mxu0 0.0
  %4048 = vmatprep.subr.mxu0 0.0
  %4049 = vmatpush1.msra.mxu0 0.0
  %4050 = vmatprep.subr.mxu0 0.0
  %4051 = vmatpush1.msra.mxu0 0.0
  %4052 = vmatprep.subr.mxu0 0.0
  %4053 = vmatpush1.msra.mxu0 0.0
  %4054 = vmatprep.subr.mxu0 0.0
  %4055 = vmatpush1.msra.mxu0 0.0
  %4056 = vmatprep.subr.mxu0 0.0
  %4057 = vmatpush1.msra.mxu0 0.0
  %4058 = vmatprep.subr.mxu0 0.0
  %4059 = vmatpush1.msra.mxu0 0.0
  %4060 = vmatprep.mubr.f32.mxu0 0.0
  %4061 = vmatmul.mubr.f32.gmra.mrb[0].mxu0 %v3922
  %v4062 = vpop.f32.mrb[0].mxu0
  %v4063 = vadd.f32 %v3204, %v4062
  %v4064 = vpop.f32.mrb[0].mxu0
  %4065 = vmatprep.mubr.f32.mxu0 0.0
  %4066 = vmatmul.mubr.f32.gmra.mrb[0].mxu0 %v3925
  %v4067 = vpop.f32.mrb[0].mxu0
  %v4068 = vadd.f32 %v3209, %v4067
  %v4069 = vpop.f32.mrb[0].mxu0
  %4070 = vmatprep.mubr.f32.mxu0 0.0
  %4071 = vmatmul.mubr.f32.gmra.mrb[0].mxu0 %v3928
  %v4072 = vpop.f32.mrb[0].mxu0
  %v4073 = vadd.f32 %v3214, %v4072
  %v4074 = vpop.f32.mrb[0].mxu0
  %4075 = vmatprep.mubr.f32.mxu0 0.0
  %4076 = vmatmul.mubr.f32.gmra.mrb[0].mxu0 %v3931
  %v4077 = vpop.f32.mrb[0].mxu0
  %v4078 = vadd.f32 %v3219, %v4077
  %v4079 = vpop.f32.mrb[0].mxu0
  %4080 = vmatprep.mubr.f32.mxu0 0.0
  %4081 = vmatmul.mubr.f32.gmra.mrb[0].mxu0 %v3934
  %v4082 = vpop.f32.mrb[0].mxu0
  %v4083 = vadd.f32 %v3224, %v4082
  %v4084 = vpop.f32.mrb[0].mxu0
  %4085 = vmatprep.mubr.f32.mxu0 0.0
  %4086 = vmatmul.mubr.f32.gmra.mrb[0].mxu0 %v3937
  %v4087 = vpop.f32.mrb[0].mxu0
  %v4088 = vadd.f32 %v3229, %v4087
  %v4089 = vpop.f32.mrb[0].mxu0
  %4090 = vmatprep.mubr.f32.mxu0 0.0
  %4091 = vmatmul.mubr.f32.gmra.mrb[0].mxu0 %v3940
  %v4092 = vpop.f32.mrb[0].mxu0
  %v4093 = vadd.f32 %v3234, %v4092
  %v4094 = vpop.f32.mrb[0].mxu0
  %4095 = vmatprep.mubr.f32.mxu0 0.0
  %4096 = vmatmul.mubr.f32.gmra.mrb[0].mxu0 %v3943
  %v4097 = vpop.f32.mrb[0].mxu0
  %v4098 = vadd.f32 %v3239, %v4097
  %v4099 = vpop.f32.mrb[0].mxu0
  %4100 = vmatprep.mubr.f32.mxu0 0.0
  %4101 = vmatmul.mubr.f32.gmra.mrb[0].mxu0 %v3946
  %v4102 = vpop.f32.mrb[0].mxu0
  %v4103 = vadd.f32 %v3244, %v4102
  %v4104 = vpop.f32.mrb[0].mxu0
  %4105 = vmatprep.mubr.f32.mxu0 0.0
  %4106 = vmatmul.mubr.f32.gmra.mrb[0].mxu0 %v3949
  %v4107 = vpop.f32.mrb[0].mxu0
  %v4108 = vadd.f32 %v3249, %v4107
  %v4109 = vpop.f32.mrb[0].mxu0
  %4110 = vmatprep.mubr.f32.mxu0 0.0
  %4111 = vmatmul.mubr.f32.gmra.mrb[0].mxu0 %v3952
  %v4112 = vpop.f32.mrb[0].mxu0
  %v4113 = vadd.f32 %v3254, %v4112
  %v4114 = vpop.f32.mrb[0].mxu0
  %4115 = vmatprep.mubr.f32.mxu0 0.0
  %4116 = vmatmul.mubr.f32.gmra.mrb[0].mxu0 %v3955
  %v4117 = vpop.f32.mrb[0].mxu0
  %v4118 = vadd.f32 %v3259, %v4117
  %v4119 = vpop.f32.mrb[0].mxu0
  %4120 = vmatprep.mubr.f32.mxu0 0.0
  %4121 = vmatmul.mubr.f32.gmra.mrb[0].mxu0 %v3958
  %v4122 = vpop.f32.mrb[0].mxu0
  %v4123 = vadd.f32 %v3264, %v4122
  %v4124 = vpop.f32.mrb[0].mxu0
  %4125 = vmatprep.mubr.f32.mxu0 0.0
  %4126 = vmatmul.mubr.f32.gmra.mrb[0].mxu0 %v3961
  %v4127 = vpop.f32.mrb[0].mxu0
  %v4128 = vadd.f32 %v3269, %v4127
  %v4129 = vpop.f32.mrb[0].mxu0
  %4130 = vmatprep.mubr.f32.mxu0 0.0
  %4131 = vmatmul.mubr.f32.gmra.mrb[0].mxu0 %v3964
  %v4132 = vpop.f32.mrb[0].mxu0
  %v4133 = vadd.f32 %v3274, %v4132
  %v4134 = vpop.f32.mrb[0].mxu0
  %4135 = vmatprep.mubr.f32.mxu0 0.0
  %4136 = vmatmul.mubr.f32.gmra.mrb[0].mxu0 %v3967
  %v4137 = vpop.f32.mrb[0].mxu0
  %v4138 = vadd.f32 %v3279, %v4137
  %v4139 = vpop.f32.mrb[0].mxu0
  %4140 = vmatprep.mubr.f32.mxu0 0.0
  %4141 = vmatmul.mubr.f32.gmra.mrb[0].mxu0 %v3970
  %v4142 = vpop.f32.mrb[0].mxu0
  %v4143 = vadd.f32 %v3284, %v4142
  %v4144 = vpop.f32.mrb[0].mxu0
  %4145 = vmatprep.mubr.f32.mxu0 0.0
  %4146 = vmatmul.mubr.f32.gmra.mrb[0].mxu0 %v3973
  %v4147 = vpop.f32.mrb[0].mxu0
  %v4148 = vadd.f32 %v3289, %v4147
  %v4149 = vpop.f32.mrb[0].mxu0
  %4150 = vmatprep.mubr.f32.mxu0 0.0
  %4151 = vmatmul.mubr.f32.gmra.mrb[0].mxu0 %v3976
  %v4152 = vpop.f32.mrb[0].mxu0
  %v4153 = vadd.f32 %v3294, %v4152
  %v4154 = vpop.f32.mrb[0].mxu0
  %4155 = vmatprep.mubr.f32.mxu0 0.0
  %4156 = vmatmul.mubr.f32.gmra.mrb[0].mxu0 %v3979
  %v4157 = vpop.f32.mrb[0].mxu0
  %v4158 = vadd.f32 %v3299, %v4157
  %v4159 = vpop.f32.mrb[0].mxu0
  %4160 = vmatprep.mubr.f32.mxu0 0.0
  %4161 = vmatmul.mubr.f32.gmra.mrb[0].mxu0 %v3982
  %v4162 = vpop.f32.mrb[0].mxu0
  %v4163 = vadd.f32 %v3304, %v4162
  %v4164 = vpop.f32.mrb[0].mxu0
  %4165 = vmatprep.mubr.f32.mxu0 0.0
  %4166 = vmatmul.mubr.f32.gmra.mrb[0].mxu0 %v3985
  %v4167 = vpop.f32.mrb[0].mxu0
  %v4168 = vadd.f32 %v3309, %v4167
  %v4169 = vpop.f32.mrb[0].mxu0
  %4170 = vmatprep.mubr.f32.mxu0 0.0
  %4171 = vmatmul.mubr.f32.gmra.mrb[0].mxu0 %v3988
  %v4172 = vpop.f32.mrb[0].mxu0
  %v4173 = vadd.f32 %v3314, %v4172
  %v4174 = vpop.f32.mrb[0].mxu0
  %4175 = vmatprep.mubr.f32.mxu0 0.0
  %4176 = vmatmul.mubr.f32.gmra.mrb[0].mxu0 %v3991
  %v4177 = vpop.f32.mrb[0].mxu0
  %v4178 = vadd.f32 %v3319, %v4177
  %v4179 = vpop.f32.mrb[0].mxu0
  %4180 = vmatprep.mubr.f32.mxu0 0.0
  %4181 = vmatmul.mubr.f32.gmra.mrb[0].mxu0 %v3994
  %v4182 = vpop.f32.mrb[0].mxu0
  %v4183 = vadd.f32 %v3324, %v4182
  %v4184 = vpop.f32.mrb[0].mxu0
  %4185 = vdwg.mxu0
  %v4186 = vadd.f32 %v3798, %v4063
  %v4187 = vadd.f32 %v3803, %v4068
  %v4188 = vadd.f32 %v3808, %v4073
  %v4189 = vadd.f32 %v3813, %v4078
  %v4190 = vadd.f32 %v3818, %v4083
  %v4191 = vadd.f32 %v3823, %v4088
  %v4192 = vadd.f32 %v3828, %v4093
  %v4193 = vadd.f32 %v3833, %v4098
  %v4194 = vadd.f32 %v3838, %v4103
  %v4195 = vadd.f32 %v3843, %v4108
  %v4196 = vadd.f32 %v3848, %v4113
  %v4197 = vadd.f32 %v3853, %v4118
  %v4198 = vadd.f32 %v3858, %v4123
  %v4199 = vadd.f32 %v3863, %v4128
  %v4200 = vadd.f32 %v3868, %v4133
  %v4201 = vadd.f32 %v3873, %v4138
  %v4202 = vadd.f32 %v3878, %v4143
  %v4203 = vadd.f32 %v3883, %v4148
  %v4204 = vadd.f32 %v3888, %v4153
  %v4205 = vadd.f32 %v3893, %v4158
  %v4206 = vadd.f32 %v3898, %v4163
  %v4207 = vadd.f32 %v3903, %v4168
  %v4208 = vadd.f32 %v3908, %v4173
  %v4209 = vadd.f32 %v3913, %v4178
  %v4210 = vadd.f32 %v3918, %v4183
  %v4211 = vadd.f32 %v4186, %v3533
  %v4212 = vadd.f32 %v4187, %v3538
  %v4213 = vadd.f32 %v4188, %v3543
  %v4214 = vadd.f32 %v4189, %v3548
  %v4215 = vadd.f32 %v4190, %v3553
  %v4216 = vadd.f32 %v4191, %v3558
  %v4217 = vadd.f32 %v4192, %v3563
  %v4218 = vadd.f32 %v4193, %v3568
  %v4219 = vadd.f32 %v4194, %v3573
  %v4220 = vadd.f32 %v4195, %v3578
  %v4221 = vadd.f32 %v4196, %v3583
  %v4222 = vadd.f32 %v4197, %v3588
  %v4223 = vadd.f32 %v4198, %v3593
  %v4224 = vadd.f32 %v4199, %v3598
  %v4225 = vadd.f32 %v4200, %v3603
  %v4226 = vadd.f32 %v4201, %v3608
  %v4227 = vadd.f32 %v4202, %v3613
  %v4228 = vadd.f32 %v4203, %v3618
  %v4229 = vadd.f32 %v4204, %v3623
  %v4230 = vadd.f32 %v4205, %v3628
  %v4231 = vadd.f32 %v4206, %v3633
  %v4232 = vadd.f32 %v4207, %v3638
  %v4233 = vadd.f32 %v4208, %v3643
  %v4234 = vadd.f32 %v4209, %v3648
  %v4235 = vadd.f32 %v4210, %v3653
  %v4236 = vlaneseq
  %v4237 = vshrl.u32 %v4236, 7
  %v4238 = vsub.s32 2, %v4237
  %v4239 = vrot.slane %v38, %v4238
  %v4240 = vadd.f32 %v4211, %v4239
  %v4241 = vadd.f32 %v4212, %v4239
  %v4242 = vadd.f32 %v4213, %v4239
  %v4243 = vadd.f32 %v4214, %v4239
  %v4244 = vadd.f32 %v4215, %v4239
  %v4245 = vadd.f32 %v4216, %v4239
  %v4246 = vadd.f32 %v4217, %v4239
  %v4247 = vadd.f32 %v4218, %v4239
  %v4248 = vadd.f32 %v4219, %v4239
  %v4249 = vadd.f32 %v4220, %v4239
  %v4250 = vadd.f32 %v4221, %v4239
  %v4251 = vadd.f32 %v4222, %v4239
  %v4252 = vadd.f32 %v4223, %v4239
  %v4253 = vadd.f32 %v4224, %v4239
  %v4254 = vadd.f32 %v4225, %v4239
  %v4255 = vadd.f32 %v4226, %v4239
  %v4256 = vadd.f32 %v4227, %v4239
  %v4257 = vadd.f32 %v4228, %v4239
  %v4258 = vadd.f32 %v4229, %v4239
  %v4259 = vadd.f32 %v4230, %v4239
  %v4260 = vadd.f32 %v4231, %v4239
  %v4261 = vadd.f32 %v4232, %v4239
  %v4262 = vadd.f32 %v4233, %v4239
  %v4263 = vadd.f32 %v4234, %v4239
  %v4264 = vadd.f32 %v4235, %v4239
  %v4265 = vadd.f32 %v1444, %v4240
  %v4266 = vadd.f32 %v1443, %v4241
  %v4267 = vadd.f32 %v1442, %v4242
  %v4268 = vadd.f32 %v1441, %v4243
  %v4269 = vadd.f32 %v1440, %v4244
  %v4270 = vadd.f32 %v1439, %v4245
  %v4271 = vadd.f32 %v1438, %v4246
  %v4272 = vadd.f32 %v1437, %v4247
  %v4273 = vadd.f32 %v1436, %v4248
  %v4274 = vadd.f32 %v1435, %v4249
  %v4275 = vadd.f32 %v1434, %v4250
  %v4276 = vadd.f32 %v1433, %v4251
  %v4277 = vadd.f32 %v1432, %v4252
  %v4278 = vadd.f32 %v1431, %v4253
  %v4279 = vadd.f32 %v1430, %v4254
  %v4280 = vadd.f32 %v1429, %v4255
  %v4281 = vadd.f32 %v1428, %v4256
  %v4282 = vadd.f32 %v1427, %v4257
  %v4283 = vadd.f32 %v1426, %v4258
  %v4284 = vadd.f32 %v1425, %v4259
  %v4285 = vadd.f32 %v1424, %v4260
  %v4286 = vadd.f32 %v1423, %v4261
  %v4287 = vadd.f32 %v1422, %v4262
  %v4288 = vadd.f32 %v1421, %v4263
  %v4289 = vadd.f32 %v1420, %v4264
  %v4290 = vmax.f32 %v4265, 0.0
  %v4291 = vmax.f32 %v4266, 0.0
  %v4292 = vmax.f32 %v4267, 0.0
  %v4293 = vmax.f32 %v4268, 0.0
  %v4294 = vmax.f32 %v4269, 0.0
  %v4295 = vmax.f32 %v4270, 0.0
  %v4296 = vmax.f32 %v4271, 0.0
  %v4297 = vmax.f32 %v4272, 0.0
  %v4298 = vmax.f32 %v4273, 0.0
  %v4299 = vmax.f32 %v4274, 0.0
  %v4300 = vmax.f32 %v4275, 0.0
  %v4301 = vmax.f32 %v4276, 0.0
  %v4302 = vmax.f32 %v4277, 0.0
  %v4303 = vmax.f32 %v4278, 0.0
  %v4304 = vmax.f32 %v4279, 0.0
  %v4305 = vmax.f32 %v4280, 0.0
  %v4306 = vmax.f32 %v4281, 0.0
  %v4307 = vmax.f32 %v4282, 0.0
  %v4308 = vmax.f32 %v4283, 0.0
  %v4309 = vmax.f32 %v4284, 0.0
  %v4310 = vmax.f32 %v4285, 0.0
  %v4311 = vmax.f32 %v4286, 0.0
  %v4312 = vmax.f32 %v4287, 0.0
  %v4313 = vmax.f32 %v4288, 0.0
  %v4314 = vmax.f32 %v4289, 0.0
  %v4315 = vld [vmem:[%s1] sm:$0xff]
  %v4316 = vld [vmem:[%s1 + $0x8] sm:$0xff]
  %v4317 = vld [vmem:[%s1 + $0x10] sm:$0xff]
  %v4318 = vld [vmem:[%s1 + $0x18] sm:$0xff]
  %v4319 = vld [vmem:[%s1 + $0x20] sm:$0x3]
  %v4320 = vld [vmem:[%s1 + $0x28] sm:$0x3]
  %vm4321 = vcmask 588800
  %v4323 = vsel %vm4321, %v4316, 0
  %v4326 = vsel %vm4321, %v4318, 0
  %v4329 = vsel %vm4321, %v4320, 0
  %4331 = vmatprep.subr.mxu0 0.0
  %4332 = vmatpush1.msra.mxu0 %v4290
  %4333 = vmatprep.subr.mxu0 0.0
  %4334 = vmatpush1.msra.mxu0 %v4291
  %4335 = vmatprep.subr.mxu0 0.0
  %4336 = vmatpush1.msra.mxu0 %v4292
  %4337 = vmatprep.subr.mxu0 0.0
  %4338 = vmatpush1.msra.mxu0 %v4293
  %4339 = vmatprep.subr.mxu0 0.0
  %4340 = vmatpush1.msra.mxu0 %v4294
  %4341 = vmatprep.subr.mxu0 0.0
  %4342 = vmatpush1.msra.mxu0 %v4295
  %4343 = vmatprep.subr.mxu0 0.0
  %4344 = vmatpush1.msra.mxu0 %v4296
  %4345 = vmatprep.subr.mxu0 0.0
  %4346 = vmatpush1.msra.mxu0 %v4297
  %4347 = vmatprep.subr.mxu0 0.0
  %4348 = vmatpush1.msra.mxu0 %v4298
  %4349 = vmatprep.subr.mxu0 0.0
  %4350 = vmatpush1.msra.mxu0 %v4299
  %4351 = vmatprep.subr.mxu0 0.0
  %4352 = vmatpush1.msra.mxu0 %v4300
  %4353 = vmatprep.subr.mxu0 0.0
  %4354 = vmatpush1.msra.mxu0 %v4301
  %4355 = vmatprep.subr.mxu0 0.0
  %4356 = vmatpush1.msra.mxu0 %v4302
  %4357 = vmatprep.subr.mxu0 0.0
  %4358 = vmatpush1.msra.mxu0 %v4303
  %4359 = vmatprep.subr.mxu0 0.0
  %4360 = vmatpush1.msra.mxu0 %v4304
  %4361 = vmatprep.subr.mxu0 0.0
  %4362 = vmatpush1.msra.mxu0 %v4305
  %4363 = vmatprep.subr.mxu0 0.0
  %4364 = vmatpush1.msra.mxu0 %v4306
  %4365 = vmatprep.subr.mxu0 0.0
  %4366 = vmatpush1.msra.mxu0 %v4307
  %4367 = vmatprep.subr.mxu0 0.0
  %4368 = vmatpush1.msra.mxu0 %v4308
  %4369 = vmatprep.subr.mxu0 0.0
  %4370 = vmatpush1.msra.mxu0 %v4309
  %4371 = vmatprep.subr.mxu0 0.0
  %4372 = vmatpush1.msra.mxu0 %v4310
  %4373 = vmatprep.subr.mxu0 0.0
  %4374 = vmatpush1.msra.mxu0 %v4311
  %4375 = vmatprep.subr.mxu0 0.0
  %4376 = vmatpush1.msra.mxu0 %v4312
  %4377 = vmatprep.subr.mxu0 0.0
  %4378 = vmatpush1.msra.mxu0 %v4313
  %4379 = vmatprep.subr.mxu0 0.0
  %4380 = vmatpush1.msra.mxu0 %v4314
  %4381 = vmatprep.subr.mxu0 0.0
  %4382 = vmatpush1.msra.mxu0 0.0
  %4383 = vmatprep.subr.mxu0 0.0
  %4384 = vmatpush1.msra.mxu0 0.0
  %4385 = vmatprep.subr.mxu0 0.0
  %4386 = vmatpush1.msra.mxu0 0.0
  %4387 = vmatprep.subr.mxu0 0.0
  %4388 = vmatpush1.msra.mxu0 0.0
  %4389 = vmatprep.subr.mxu0 0.0
  %4390 = vmatpush1.msra.mxu0 0.0
  %4391 = vmatprep.subr.mxu0 0.0
  %4392 = vmatpush1.msra.mxu0 0.0
  %4393 = vmatprep.subr.mxu0 0.0
  %4394 = vmatpush1.msra.mxu0 0.0
  %4395 = vmatprep.mubr.f32.mxu0 %v4323
  %4396 = vmatmul.mubr.f32.gmra.mrb[0].mxu0 %v4315
  %v4397 = vpop.f32.mrb[0].mxu0
  %v4398 = vadd.f32 0.0, %v4397
  %v4399 = vpop.f32.mrb[0].mxu0
  %4400 = vmatprep.mubr.f32.mxu0 %v4326
  %4401 = vmatmul.mubr.f32.gmra.mrb[0].mxu0 %v4317
  %v4402 = vpop.f32.mrb[0].mxu0
  %v4403 = vadd.f32 0.0, %v4402
  %v4404 = vpop.f32.mrb[0].mxu0
  %4405 = vmatprep.mubr.f32.mxu0 %v4329
  %4406 = vmatmul.mubr.f32.gmra.mrb[0].mxu0 %v4319
  %v4407 = vpop.f32.mrb[0].mxu0
  %v4408 = vadd.f32 0.0, %v4407
  %v4409 = vpop.f32.mrb[0].mxu0
  %4410 = vdwg.mxu0
  %s4411 = smul.u32 8, 9
  %s4412 = smul.u32 %s4411, 12
  %s4413 = smul.u32 %s4412, 2
  %s4414 = sshll.u32 %s4413, 4
  %4415 = dma.done [#allocation3], %s4414
  %v4416 = vld [vmem:[#allocation2] sm:$0xff]
  %v4417 = vld [vmem:[#allocation2 + $0x8] sm:$0xff]
  %v4418 = vld [vmem:[#allocation2 + $0x10] sm:$0xff]
  %v4419 = vld [vmem:[#allocation2 + $0x18] sm:$0xff]
  %v4420 = vld [vmem:[#allocation2 + $0x20] sm:$0xff]
  %v4421 = vld [vmem:[#allocation2 + $0x28] sm:$0xff]
  %v4422 = vld [vmem:[#allocation2 + $0x30] sm:$0xff]
  %v4423 = vld [vmem:[#allocation2 + $0x38] sm:$0xff]
  %v4424 = vld [vmem:[#allocation2 + $0x40] sm:$0xff]
  %v4425 = vld [vmem:[#allocation2 + $0x48] sm:$0xff]
  %v4426 = vld [vmem:[#allocation2 + $0x50] sm:$0xff]
  %v4427 = vld [vmem:[#allocation2 + $0x58] sm:$0xff]
  %v4428 = vld [vmem:[#allocation2 + $0x60] sm:$0xff]
  %v4429 = vld [vmem:[#allocation2 + $0x68] sm:$0xff]
  %v4430 = vld [vmem:[#allocation2 + $0x70] sm:$0xff]
  %v4431 = vld [vmem:[#allocation2 + $0x78] sm:$0xff]
  %v4432 = vld [vmem:[#allocation2 + $0x80] sm:$0xff]
  %v4433 = vld [vmem:[#allocation2 + $0x88] sm:$0xff]
  %v4434 = vld [vmem:[#allocation2 + $0x90] sm:$0xff]
  %v4435 = vld [vmem:[#allocation2 + $0x98] sm:$0xff]
  %v4436 = vld [vmem:[#allocation2 + $0xa0] sm:$0xff]
  %v4437 = vld [vmem:[#allocation2 + $0xa8] sm:$0xff]
  %v4438 = vld [vmem:[#allocation2 + $0xb0] sm:$0xff]
  %v4439 = vld [vmem:[#allocation2 + $0xb8] sm:$0xff]
  %s4440 = scalar_lea.vmem [#allocation2], 192
  %v4441 = vld [vmem:[%s4440] sm:$0xff]
  %v4442 = vld [vmem:[%s4440 + $0x8] sm:$0xff]
  %v4443 = vld [vmem:[%s4440 + $0x10] sm:$0xff]
  %v4444 = vld [vmem:[%s4440 + $0x18] sm:$0xff]
  %v4445 = vld [vmem:[%s4440 + $0x20] sm:$0xff]
  %v4446 = vld [vmem:[%s4440 + $0x28] sm:$0xff]
  %v4447 = vld [vmem:[%s4440 + $0x30] sm:$0xff]
  %v4448 = vld [vmem:[%s4440 + $0x38] sm:$0xff]
  %v4449 = vld [vmem:[%s4440 + $0x40] sm:$0xff]
  %v4450 = vld [vmem:[%s4440 + $0x48] sm:$0xff]
  %v4451 = vld [vmem:[%s4440 + $0x50] sm:$0xff]
  %v4452 = vld [vmem:[%s4440 + $0x58] sm:$0xff]
  %v4453 = vld [vmem:[%s4440 + $0x60] sm:$0xff]
  %v4454 = vld [vmem:[%s4440 + $0x68] sm:$0xff]
  %v4455 = vld [vmem:[%s4440 + $0x70] sm:$0xff]
  %v4456 = vld [vmem:[%s4440 + $0x78] sm:$0xff]
  %v4457 = vld [vmem:[%s4440 + $0x80] sm:$0xff]
  %v4458 = vld [vmem:[%s4440 + $0x88] sm:$0xff]
  %v4459 = vld [vmem:[%s4440 + $0x90] sm:$0xff]
  %v4460 = vld [vmem:[%s4440 + $0x98] sm:$0xff]
  %v4461 = vld [vmem:[%s4440 + $0xa0] sm:$0xff]
  %v4462 = vld [vmem:[%s4440 + $0xa8] sm:$0xff]
  %v4463 = vld [vmem:[%s4440 + $0xb0] sm:$0xff]
  %v4464 = vld [vmem:[%s4440 + $0xb8] sm:$0xff]
  %v4466 = vrot.slane %v4398, 2
  %v4467 = vsel %vm710, %v4466, 0
  %4469 = vmatprep.subr.mxu0 %v4442
  %4470 = vmatpush1.msra.mxu0 %v4441
  %4471 = vmatprep.subr.mxu0 %v4444
  %4472 = vmatpush1.msra.mxu0 %v4443
  %4473 = vmatprep.subr.mxu0 %v4446
  %4474 = vmatpush1.msra.mxu0 %v4445
  %4475 = vmatprep.subr.mxu0 %v4448
  %4476 = vmatpush1.msra.mxu0 %v4447
  %4477 = vmatprep.subr.mxu0 %v4450
  %4478 = vmatpush1.msra.mxu0 %v4449
  %4479 = vmatprep.subr.mxu0 %v4452
  %4480 = vmatpush1.msra.mxu0 %v4451
  %4481 = vmatprep.subr.mxu0 %v4454
  %4482 = vmatpush1.msra.mxu0 %v4453
  %4483 = vmatprep.subr.mxu0 %v4456
  %4484 = vmatpush1.msra.mxu0 %v4455
  %4485 = vmatprep.subr.mxu0 %v4458
  %4486 = vmatpush1.msra.mxu0 %v4457
  %4487 = vmatprep.subr.mxu0 %v4460
  %4488 = vmatpush1.msra.mxu0 %v4459
  %4489 = vmatprep.subr.mxu0 %v4462
  %4490 = vmatpush1.msra.mxu0 %v4461
  %4491 = vmatprep.subr.mxu0 %v4464
  %4492 = vmatpush1.msra.mxu0 %v4463
  %4493 = vmatprep.subr.mxu0 0.0
  %4494 = vmatpush1.msra.mxu0 0.0
  %4495 = vmatprep.subr.mxu0 0.0
  %4496 = vmatpush1.msra.mxu0 0.0
  %4497 = vmatprep.subr.mxu0 0.0
  %4498 = vmatpush1.msra.mxu0 0.0
  %4499 = vmatprep.subr.mxu0 0.0
  %4500 = vmatpush1.msra.mxu0 0.0
  %4501 = vmatprep.subr.mxu0 0.0
  %4502 = vmatpush1.msra.mxu0 0.0
  %4503 = vmatprep.subr.mxu0 0.0
  %4504 = vmatpush1.msra.mxu0 0.0
  %4505 = vmatprep.subr.mxu0 0.0
  %4506 = vmatpush1.msra.mxu0 0.0
  %4507 = vmatprep.subr.mxu0 0.0
  %4508 = vmatpush1.msra.mxu0 0.0
  %4509 = vmatprep.subr.mxu0 0.0
  %4510 = vmatpush1.msra.mxu0 0.0
  %4511 = vmatprep.subr.mxu0 0.0
  %4512 = vmatpush1.msra.mxu0 0.0
  %4513 = vmatprep.subr.mxu0 0.0
  %4514 = vmatpush1.msra.mxu0 0.0
  %4515 = vmatprep.subr.mxu0 0.0
  %4516 = vmatpush1.msra.mxu0 0.0
  %4517 = vmatprep.subr.mxu0 0.0
  %4518 = vmatpush1.msra.mxu0 0.0
  %4519 = vmatprep.subr.mxu0 0.0
  %4520 = vmatpush1.msra.mxu0 0.0
  %4521 = vmatprep.subr.mxu0 0.0
  %4522 = vmatpush1.msra.mxu0 0.0
  %4523 = vmatprep.subr.mxu0 0.0
  %4524 = vmatpush1.msra.mxu0 0.0
  %4525 = vmatprep.subr.mxu0 0.0
  %4526 = vmatpush1.msra.mxu0 0.0
  %4527 = vmatprep.subr.mxu0 0.0
  %4528 = vmatpush1.msra.mxu0 0.0
  %4529 = vmatprep.subr.mxu0 0.0
  %4530 = vmatpush1.msra.mxu0 0.0
  %4531 = vmatprep.subr.mxu0 0.0
  %4532 = vmatpush1.msra.mxu0 0.0
  %4533 = vmatprep.mubr.f32.mxu0 0.0
  %4534 = vmatmul.mubr.f32.gmra.mrb[0].mxu0 %v4467
  %v4535 = vpop.f32.mrb[0].mxu0
  %v4536 = vadd.f32 0.0, %v4535
  %v4537 = vpop.f32.mrb[0].mxu0
  %v4538 = vadd.f32 0.0, %v4537
  %4539 = vdwg.mxu0
  %s4540 = scalar_lea.vmem [#allocation2], 384
  %v4541 = vld [vmem:[%s4540] sm:$0xff]
  %v4542 = vld [vmem:[%s4540 + $0x8] sm:$0xff]
  %v4543 = vld [vmem:[%s4540 + $0x10] sm:$0xff]
  %v4544 = vld [vmem:[%s4540 + $0x18] sm:$0xff]
  %v4545 = vld [vmem:[%s4540 + $0x20] sm:$0xff]
  %v4546 = vld [vmem:[%s4540 + $0x28] sm:$0xff]
  %v4547 = vld [vmem:[%s4540 + $0x30] sm:$0xff]
  %v4548 = vld [vmem:[%s4540 + $0x38] sm:$0xff]
  %v4549 = vld [vmem:[%s4540 + $0x40] sm:$0xff]
  %v4550 = vld [vmem:[%s4540 + $0x48] sm:$0xff]
  %v4551 = vld [vmem:[%s4540 + $0x50] sm:$0xff]
  %v4552 = vld [vmem:[%s4540 + $0x58] sm:$0xff]
  %v4553 = vld [vmem:[%s4540 + $0x60] sm:$0xff]
  %v4554 = vld [vmem:[%s4540 + $0x68] sm:$0xff]
  %v4555 = vld [vmem:[%s4540 + $0x70] sm:$0xff]
  %v4556 = vld [vmem:[%s4540 + $0x78] sm:$0xff]
  %v4557 = vld [vmem:[%s4540 + $0x80] sm:$0xff]
  %v4558 = vld [vmem:[%s4540 + $0x88] sm:$0xff]
  %v4559 = vld [vmem:[%s4540 + $0x90] sm:$0xff]
  %v4560 = vld [vmem:[%s4540 + $0x98] sm:$0xff]
  %v4561 = vld [vmem:[%s4540 + $0xa0] sm:$0xff]
  %v4562 = vld [vmem:[%s4540 + $0xa8] sm:$0xff]
  %v4563 = vld [vmem:[%s4540 + $0xb0] sm:$0xff]
  %v4564 = vld [vmem:[%s4540 + $0xb8] sm:$0xff]
  %s4565 = scalar_lea.vmem [#allocation2], 576
  %v4566 = vld [vmem:[%s4565] sm:$0xff]
  %v4567 = vld [vmem:[%s4565 + $0x8] sm:$0xff]
  %v4568 = vld [vmem:[%s4565 + $0x10] sm:$0xff]
  %v4569 = vld [vmem:[%s4565 + $0x18] sm:$0xff]
  %v4570 = vld [vmem:[%s4565 + $0x20] sm:$0xff]
  %v4571 = vld [vmem:[%s4565 + $0x28] sm:$0xff]
  %v4572 = vld [vmem:[%s4565 + $0x30] sm:$0xff]
  %v4573 = vld [vmem:[%s4565 + $0x38] sm:$0xff]
  %v4574 = vld [vmem:[%s4565 + $0x40] sm:$0xff]
  %v4575 = vld [vmem:[%s4565 + $0x48] sm:$0xff]
  %v4576 = vld [vmem:[%s4565 + $0x50] sm:$0xff]
  %v4577 = vld [vmem:[%s4565 + $0x58] sm:$0xff]
  %v4578 = vld [vmem:[%s4565 + $0x60] sm:$0xff]
  %v4579 = vld [vmem:[%s4565 + $0x68] sm:$0xff]
  %v4580 = vld [vmem:[%s4565 + $0x70] sm:$0xff]
  %v4581 = vld [vmem:[%s4565 + $0x78] sm:$0xff]
  %v4582 = vld [vmem:[%s4565 + $0x80] sm:$0xff]
  %v4583 = vld [vmem:[%s4565 + $0x88] sm:$0xff]
  %v4584 = vld [vmem:[%s4565 + $0x90] sm:$0xff]
  %v4585 = vld [vmem:[%s4565 + $0x98] sm:$0xff]
  %v4586 = vld [vmem:[%s4565 + $0xa0] sm:$0xff]
  %v4587 = vld [vmem:[%s4565 + $0xa8] sm:$0xff]
  %v4588 = vld [vmem:[%s4565 + $0xb0] sm:$0xff]
  %v4589 = vld [vmem:[%s4565 + $0xb8] sm:$0xff]
  %v4590 = vrot.slane %v4398, 6
  %v4591 = vsel %vm710, %v4590, 0
  %4593 = vmatprep.subr.mxu0 %v4567
  %4594 = vmatpush1.msra.mxu0 %v4566
  %4595 = vmatprep.subr.mxu0 %v4569
  %4596 = vmatpush1.msra.mxu0 %v4568
  %4597 = vmatprep.subr.mxu0 %v4571
  %4598 = vmatpush1.msra.mxu0 %v4570
  %4599 = vmatprep.subr.mxu0 %v4573
  %4600 = vmatpush1.msra.mxu0 %v4572
  %4601 = vmatprep.subr.mxu0 %v4575
  %4602 = vmatpush1.msra.mxu0 %v4574
  %4603 = vmatprep.subr.mxu0 %v4577
  %4604 = vmatpush1.msra.mxu0 %v4576
  %4605 = vmatprep.subr.mxu0 %v4579
  %4606 = vmatpush1.msra.mxu0 %v4578
  %4607 = vmatprep.subr.mxu0 %v4581
  %4608 = vmatpush1.msra.mxu0 %v4580
  %4609 = vmatprep.subr.mxu0 %v4583
  %4610 = vmatpush1.msra.mxu0 %v4582
  %4611 = vmatprep.subr.mxu0 %v4585
  %4612 = vmatpush1.msra.mxu0 %v4584
  %4613 = vmatprep.subr.mxu0 %v4587
  %4614 = vmatpush1.msra.mxu0 %v4586
  %4615 = vmatprep.subr.mxu0 %v4589
  %4616 = vmatpush1.msra.mxu0 %v4588
  %4617 = vmatprep.subr.mxu0 0.0
  %4618 = vmatpush1.msra.mxu0 0.0
  %4619 = vmatprep.subr.mxu0 0.0
  %4620 = vmatpush1.msra.mxu0 0.0
  %4621 = vmatprep.subr.mxu0 0.0
  %4622 = vmatpush1.msra.mxu0 0.0
  %4623 = vmatprep.subr.mxu0 0.0
  %4624 = vmatpush1.msra.mxu0 0.0
  %4625 = vmatprep.subr.mxu0 0.0
  %4626 = vmatpush1.msra.mxu0 0.0
  %4627 = vmatprep.subr.mxu0 0.0
  %4628 = vmatpush1.msra.mxu0 0.0
  %4629 = vmatprep.subr.mxu0 0.0
  %4630 = vmatpush1.msra.mxu0 0.0
  %4631 = vmatprep.subr.mxu0 0.0
  %4632 = vmatpush1.msra.mxu0 0.0
  %4633 = vmatprep.subr.mxu0 0.0
  %4634 = vmatpush1.msra.mxu0 0.0
  %4635 = vmatprep.subr.mxu0 0.0
  %4636 = vmatpush1.msra.mxu0 0.0
  %4637 = vmatprep.subr.mxu0 0.0
  %4638 = vmatpush1.msra.mxu0 0.0
  %4639 = vmatprep.subr.mxu0 0.0
  %4640 = vmatpush1.msra.mxu0 0.0
  %4641 = vmatprep.subr.mxu0 0.0
  %4642 = vmatpush1.msra.mxu0 0.0
  %4643 = vmatprep.subr.mxu0 0.0
  %4644 = vmatpush1.msra.mxu0 0.0
  %4645 = vmatprep.subr.mxu0 0.0
  %4646 = vmatpush1.msra.mxu0 0.0
  %4647 = vmatprep.subr.mxu0 0.0
  %4648 = vmatpush1.msra.mxu0 0.0
  %4649 = vmatprep.subr.mxu0 0.0
  %4650 = vmatpush1.msra.mxu0 0.0
  %4651 = vmatprep.subr.mxu0 0.0
  %4652 = vmatpush1.msra.mxu0 0.0
  %4653 = vmatprep.subr.mxu0 0.0
  %4654 = vmatpush1.msra.mxu0 0.0
  %4655 = vmatprep.subr.mxu0 0.0
  %4656 = vmatpush1.msra.mxu0 0.0
  %4657 = vmatprep.mubr.f32.mxu0 0.0
  %4658 = vmatmul.mubr.f32.gmra.mrb[0].mxu0 %v4591
  %v4659 = vpop.f32.mrb[0].mxu0
  %v4660 = vadd.f32 0.0, %v4659
  %v4661 = vpop.f32.mrb[0].mxu0
  %v4662 = vadd.f32 0.0, %v4661
  %4663 = vdwg.mxu0
  %s4664 = scalar_lea.vmem [#allocation2], 768
  %v4665 = vld [vmem:[%s4664] sm:$0xff]
  %v4666 = vld [vmem:[%s4664 + $0x8] sm:$0xff]
  %v4667 = vld [vmem:[%s4664 + $0x10] sm:$0xff]
  %v4668 = vld [vmem:[%s4664 + $0x18] sm:$0xff]
  %v4669 = vld [vmem:[%s4664 + $0x20] sm:$0xff]
  %v4670 = vld [vmem:[%s4664 + $0x28] sm:$0xff]
  %v4671 = vld [vmem:[%s4664 + $0x30] sm:$0xff]
  %v4672 = vld [vmem:[%s4664 + $0x38] sm:$0xff]
  %v4673 = vld [vmem:[%s4664 + $0x40] sm:$0xff]
  %v4674 = vld [vmem:[%s4664 + $0x48] sm:$0xff]
  %v4675 = vld [vmem:[%s4664 + $0x50] sm:$0xff]
  %v4676 = vld [vmem:[%s4664 + $0x58] sm:$0xff]
  %v4677 = vld [vmem:[%s4664 + $0x60] sm:$0xff]
  %v4678 = vld [vmem:[%s4664 + $0x68] sm:$0xff]
  %v4679 = vld [vmem:[%s4664 + $0x70] sm:$0xff]
  %v4680 = vld [vmem:[%s4664 + $0x78] sm:$0xff]
  %v4681 = vld [vmem:[%s4664 + $0x80] sm:$0xff]
  %v4682 = vld [vmem:[%s4664 + $0x88] sm:$0xff]
  %v4683 = vld [vmem:[%s4664 + $0x90] sm:$0xff]
  %v4684 = vld [vmem:[%s4664 + $0x98] sm:$0xff]
  %v4685 = vld [vmem:[%s4664 + $0xa0] sm:$0xff]
  %v4686 = vld [vmem:[%s4664 + $0xa8] sm:$0xff]
  %v4687 = vld [vmem:[%s4664 + $0xb0] sm:$0xff]
  %v4688 = vld [vmem:[%s4664 + $0xb8] sm:$0xff]
  %s4689 = scalar_lea.vmem [#allocation2], 960
  %v4690 = vld [vmem:[%s4689] sm:$0xff]
  %v4691 = vld [vmem:[%s4689 + $0x8] sm:$0xff]
  %v4692 = vld [vmem:[%s4689 + $0x10] sm:$0xff]
  %v4693 = vld [vmem:[%s4689 + $0x18] sm:$0xff]
  %v4694 = vld [vmem:[%s4689 + $0x20] sm:$0xff]
  %v4695 = vld [vmem:[%s4689 + $0x28] sm:$0xff]
  %v4696 = vld [vmem:[%s4689 + $0x30] sm:$0xff]
  %v4697 = vld [vmem:[%s4689 + $0x38] sm:$0xff]
  %v4698 = vld [vmem:[%s4689 + $0x40] sm:$0xff]
  %v4699 = vld [vmem:[%s4689 + $0x48] sm:$0xff]
  %v4700 = vld [vmem:[%s4689 + $0x50] sm:$0xff]
  %v4701 = vld [vmem:[%s4689 + $0x58] sm:$0xff]
  %v4702 = vld [vmem:[%s4689 + $0x60] sm:$0xff]
  %v4703 = vld [vmem:[%s4689 + $0x68] sm:$0xff]
  %v4704 = vld [vmem:[%s4689 + $0x70] sm:$0xff]
  %v4705 = vld [vmem:[%s4689 + $0x78] sm:$0xff]
  %v4706 = vld [vmem:[%s4689 + $0x80] sm:$0xff]
  %v4707 = vld [vmem:[%s4689 + $0x88] sm:$0xff]
  %v4708 = vld [vmem:[%s4689 + $0x90] sm:$0xff]
  %v4709 = vld [vmem:[%s4689 + $0x98] sm:$0xff]
  %v4710 = vld [vmem:[%s4689 + $0xa0] sm:$0xff]
  %v4711 = vld [vmem:[%s4689 + $0xa8] sm:$0xff]
  %v4712 = vld [vmem:[%s4689 + $0xb0] sm:$0xff]
  %v4713 = vld [vmem:[%s4689 + $0xb8] sm:$0xff]
  %v4715 = vrot.slane %v4403, 2
  %v4716 = vsel %vm710, %v4715, 0
  %4718 = vmatprep.subr.mxu0 %v4691
  %4719 = vmatpush1.msra.mxu0 %v4690
  %4720 = vmatprep.subr.mxu0 %v4693
  %4721 = vmatpush1.msra.mxu0 %v4692
  %4722 = vmatprep.subr.mxu0 %v4695
  %4723 = vmatpush1.msra.mxu0 %v4694
  %4724 = vmatprep.subr.mxu0 %v4697
  %4725 = vmatpush1.msra.mxu0 %v4696
  %4726 = vmatprep.subr.mxu0 %v4699
  %4727 = vmatpush1.msra.mxu0 %v4698
  %4728 = vmatprep.subr.mxu0 %v4701
  %4729 = vmatpush1.msra.mxu0 %v4700
  %4730 = vmatprep.subr.mxu0 %v4703
  %4731 = vmatpush1.msra.mxu0 %v4702
  %4732 = vmatprep.subr.mxu0 %v4705
  %4733 = vmatpush1.msra.mxu0 %v4704
  %4734 = vmatprep.subr.mxu0 %v4707
  %4735 = vmatpush1.msra.mxu0 %v4706
  %4736 = vmatprep.subr.mxu0 %v4709
  %4737 = vmatpush1.msra.mxu0 %v4708
  %4738 = vmatprep.subr.mxu0 %v4711
  %4739 = vmatpush1.msra.mxu0 %v4710
  %4740 = vmatprep.subr.mxu0 %v4713
  %4741 = vmatpush1.msra.mxu0 %v4712
  %4742 = vmatprep.subr.mxu0 0.0
  %4743 = vmatpush1.msra.mxu0 0.0
  %4744 = vmatprep.subr.mxu0 0.0
  %4745 = vmatpush1.msra.mxu0 0.0
  %4746 = vmatprep.subr.mxu0 0.0
  %4747 = vmatpush1.msra.mxu0 0.0
  %4748 = vmatprep.subr.mxu0 0.0
  %4749 = vmatpush1.msra.mxu0 0.0
  %4750 = vmatprep.subr.mxu0 0.0
  %4751 = vmatpush1.msra.mxu0 0.0
  %4752 = vmatprep.subr.mxu0 0.0
  %4753 = vmatpush1.msra.mxu0 0.0
  %4754 = vmatprep.subr.mxu0 0.0
  %4755 = vmatpush1.msra.mxu0 0.0
  %4756 = vmatprep.subr.mxu0 0.0
  %4757 = vmatpush1.msra.mxu0 0.0
  %4758 = vmatprep.subr.mxu0 0.0
  %4759 = vmatpush1.msra.mxu0 0.0
  %4760 = vmatprep.subr.mxu0 0.0
  %4761 = vmatpush1.msra.mxu0 0.0
  %4762 = vmatprep.subr.mxu0 0.0
  %4763 = vmatpush1.msra.mxu0 0.0
  %4764 = vmatprep.subr.mxu0 0.0
  %4765 = vmatpush1.msra.mxu0 0.0
  %4766 = vmatprep.subr.mxu0 0.0
  %4767 = vmatpush1.msra.mxu0 0.0
  %4768 = vmatprep.subr.mxu0 0.0
  %4769 = vmatpush1.msra.mxu0 0.0
  %4770 = vmatprep.subr.mxu0 0.0
  %4771 = vmatpush1.msra.mxu0 0.0
  %4772 = vmatprep.subr.mxu0 0.0
  %4773 = vmatpush1.msra.mxu0 0.0
  %4774 = vmatprep.subr.mxu0 0.0
  %4775 = vmatpush1.msra.mxu0 0.0
  %4776 = vmatprep.subr.mxu0 0.0
  %4777 = vmatpush1.msra.mxu0 0.0
  %4778 = vmatprep.subr.mxu0 0.0
  %4779 = vmatpush1.msra.mxu0 0.0
  %4780 = vmatprep.subr.mxu0 0.0
  %4781 = vmatpush1.msra.mxu0 0.0
  %4782 = vmatprep.mubr.f32.mxu0 0.0
  %4783 = vmatmul.mubr.f32.gmra.mrb[0].mxu0 %v4716
  %v4784 = vpop.f32.mrb[0].mxu0
  %v4785 = vadd.f32 0.0, %v4784
  %v4786 = vpop.f32.mrb[0].mxu0
  %v4787 = vadd.f32 0.0, %v4786
  %4788 = vdwg.mxu0
  %s4789 = scalar_lea.vmem [#allocation2], 1152
  %v4790 = vld [vmem:[%s4789] sm:$0xff]
  %v4791 = vld [vmem:[%s4789 + $0x8] sm:$0xff]
  %v4792 = vld [vmem:[%s4789 + $0x10] sm:$0xff]
  %v4793 = vld [vmem:[%s4789 + $0x18] sm:$0xff]
  %v4794 = vld [vmem:[%s4789 + $0x20] sm:$0xff]
  %v4795 = vld [vmem:[%s4789 + $0x28] sm:$0xff]
  %v4796 = vld [vmem:[%s4789 + $0x30] sm:$0xff]
  %v4797 = vld [vmem:[%s4789 + $0x38] sm:$0xff]
  %v4798 = vld [vmem:[%s4789 + $0x40] sm:$0xff]
  %v4799 = vld [vmem:[%s4789 + $0x48] sm:$0xff]
  %v4800 = vld [vmem:[%s4789 + $0x50] sm:$0xff]
  %v4801 = vld [vmem:[%s4789 + $0x58] sm:$0xff]
  %v4802 = vld [vmem:[%s4789 + $0x60] sm:$0xff]
  %v4803 = vld [vmem:[%s4789 + $0x68] sm:$0xff]
  %v4804 = vld [vmem:[%s4789 + $0x70] sm:$0xff]
  %v4805 = vld [vmem:[%s4789 + $0x78] sm:$0xff]
  %v4806 = vld [vmem:[%s4789 + $0x80] sm:$0xff]
  %v4807 = vld [vmem:[%s4789 + $0x88] sm:$0xff]
  %v4808 = vld [vmem:[%s4789 + $0x90] sm:$0xff]
  %v4809 = vld [vmem:[%s4789 + $0x98] sm:$0xff]
  %v4810 = vld [vmem:[%s4789 + $0xa0] sm:$0xff]
  %v4811 = vld [vmem:[%s4789 + $0xa8] sm:$0xff]
  %v4812 = vld [vmem:[%s4789 + $0xb0] sm:$0xff]
  %v4813 = vld [vmem:[%s4789 + $0xb8] sm:$0xff]
  %s4814 = scalar_lea.vmem [#allocation2], 1344
  %v4815 = vld [vmem:[%s4814] sm:$0xff]
  %v4816 = vld [vmem:[%s4814 + $0x8] sm:$0xff]
  %v4817 = vld [vmem:[%s4814 + $0x10] sm:$0xff]
  %v4818 = vld [vmem:[%s4814 + $0x18] sm:$0xff]
  %v4819 = vld [vmem:[%s4814 + $0x20] sm:$0xff]
  %v4820 = vld [vmem:[%s4814 + $0x28] sm:$0xff]
  %v4821 = vld [vmem:[%s4814 + $0x30] sm:$0xff]
  %v4822 = vld [vmem:[%s4814 + $0x38] sm:$0xff]
  %v4823 = vld [vmem:[%s4814 + $0x40] sm:$0xff]
  %v4824 = vld [vmem:[%s4814 + $0x48] sm:$0xff]
  %v4825 = vld [vmem:[%s4814 + $0x50] sm:$0xff]
  %v4826 = vld [vmem:[%s4814 + $0x58] sm:$0xff]
  %v4827 = vld [vmem:[%s4814 + $0x60] sm:$0xff]
  %v4828 = vld [vmem:[%s4814 + $0x68] sm:$0xff]
  %v4829 = vld [vmem:[%s4814 + $0x70] sm:$0xff]
  %v4830 = vld [vmem:[%s4814 + $0x78] sm:$0xff]
  %v4831 = vld [vmem:[%s4814 + $0x80] sm:$0xff]
  %v4832 = vld [vmem:[%s4814 + $0x88] sm:$0xff]
  %v4833 = vld [vmem:[%s4814 + $0x90] sm:$0xff]
  %v4834 = vld [vmem:[%s4814 + $0x98] sm:$0xff]
  %v4835 = vld [vmem:[%s4814 + $0xa0] sm:$0xff]
  %v4836 = vld [vmem:[%s4814 + $0xa8] sm:$0xff]
  %v4837 = vld [vmem:[%s4814 + $0xb0] sm:$0xff]
  %v4838 = vld [vmem:[%s4814 + $0xb8] sm:$0xff]
  %v4839 = vrot.slane %v4403, 6
  %v4840 = vsel %vm710, %v4839, 0
  %4842 = vmatprep.subr.mxu0 %v4816
  %4843 = vmatpush1.msra.mxu0 %v4815
  %4844 = vmatprep.subr.mxu0 %v4818
  %4845 = vmatpush1.msra.mxu0 %v4817
  %4846 = vmatprep.subr.mxu0 %v4820
  %4847 = vmatpush1.msra.mxu0 %v4819
  %4848 = vmatprep.subr.mxu0 %v4822
  %4849 = vmatpush1.msra.mxu0 %v4821
  %4850 = vmatprep.subr.mxu0 %v4824
  %4851 = vmatpush1.msra.mxu0 %v4823
  %4852 = vmatprep.subr.mxu0 %v4826
  %4853 = vmatpush1.msra.mxu0 %v4825
  %4854 = vmatprep.subr.mxu0 %v4828
  %4855 = vmatpush1.msra.mxu0 %v4827
  %4856 = vmatprep.subr.mxu0 %v4830
  %4857 = vmatpush1.msra.mxu0 %v4829
  %4858 = vmatprep.subr.mxu0 %v4832
  %4859 = vmatpush1.msra.mxu0 %v4831
  %4860 = vmatprep.subr.mxu0 %v4834
  %4861 = vmatpush1.msra.mxu0 %v4833
  %4862 = vmatprep.subr.mxu0 %v4836
  %4863 = vmatpush1.msra.mxu0 %v4835
  %4864 = vmatprep.subr.mxu0 %v4838
  %4865 = vmatpush1.msra.mxu0 %v4837
  %4866 = vmatprep.subr.mxu0 0.0
  %4867 = vmatpush1.msra.mxu0 0.0
  %4868 = vmatprep.subr.mxu0 0.0
  %4869 = vmatpush1.msra.mxu0 0.0
  %4870 = vmatprep.subr.mxu0 0.0
  %4871 = vmatpush1.msra.mxu0 0.0
  %4872 = vmatprep.subr.mxu0 0.0
  %4873 = vmatpush1.msra.mxu0 0.0
  %4874 = vmatprep.subr.mxu0 0.0
  %4875 = vmatpush1.msra.mxu0 0.0
  %4876 = vmatprep.subr.mxu0 0.0
  %4877 = vmatpush1.msra.mxu0 0.0
  %4878 = vmatprep.subr.mxu0 0.0
  %4879 = vmatpush1.msra.mxu0 0.0
  %4880 = vmatprep.subr.mxu0 0.0
  %4881 = vmatpush1.msra.mxu0 0.0
  %4882 = vmatprep.subr.mxu0 0.0
  %4883 = vmatpush1.msra.mxu0 0.0
  %4884 = vmatprep.subr.mxu0 0.0
  %4885 = vmatpush1.msra.mxu0 0.0
  %4886 = vmatprep.subr.mxu0 0.0
  %4887 = vmatpush1.msra.mxu0 0.0
  %4888 = vmatprep.subr.mxu0 0.0
  %4889 = vmatpush1.msra.mxu0 0.0
  %4890 = vmatprep.subr.mxu0 0.0
  %4891 = vmatpush1.msra.mxu0 0.0
  %4892 = vmatprep.subr.mxu0 0.0
  %4893 = vmatpush1.msra.mxu0 0.0
  %4894 = vmatprep.subr.mxu0 0.0
  %4895 = vmatpush1.msra.mxu0 0.0
  %4896 = vmatprep.subr.mxu0 0.0
  %4897 = vmatpush1.msra.mxu0 0.0
  %4898 = vmatprep.subr.mxu0 0.0
  %4899 = vmatpush1.msra.mxu0 0.0
  %4900 = vmatprep.subr.mxu0 0.0
  %4901 = vmatpush1.msra.mxu0 0.0
  %4902 = vmatprep.subr.mxu0 0.0
  %4903 = vmatpush1.msra.mxu0 0.0
  %4904 = vmatprep.subr.mxu0 0.0
  %4905 = vmatpush1.msra.mxu0 0.0
  %4906 = vmatprep.mubr.f32.mxu0 0.0
  %4907 = vmatmul.mubr.f32.gmra.mrb[0].mxu0 %v4840
  %v4908 = vpop.f32.mrb[0].mxu0
  %v4909 = vadd.f32 0.0, %v4908
  %v4910 = vpop.f32.mrb[0].mxu0
  %v4911 = vadd.f32 0.0, %v4910
  %4912 = vdwg.mxu0
  %s4913 = scalar_lea.vmem [#allocation2], 1536
  %v4914 = vld [vmem:[%s4913] sm:$0xff]
  %v4915 = vld [vmem:[%s4913 + $0x8] sm:$0xff]
  %v4916 = vld [vmem:[%s4913 + $0x10] sm:$0xff]
  %v4917 = vld [vmem:[%s4913 + $0x18] sm:$0xff]
  %v4918 = vld [vmem:[%s4913 + $0x20] sm:$0xff]
  %v4919 = vld [vmem:[%s4913 + $0x28] sm:$0xff]
  %v4920 = vld [vmem:[%s4913 + $0x30] sm:$0xff]
  %v4921 = vld [vmem:[%s4913 + $0x38] sm:$0xff]
  %v4922 = vld [vmem:[%s4913 + $0x40] sm:$0xff]
  %v4923 = vld [vmem:[%s4913 + $0x48] sm:$0xff]
  %v4924 = vld [vmem:[%s4913 + $0x50] sm:$0xff]
  %v4925 = vld [vmem:[%s4913 + $0x58] sm:$0xff]
  %v4926 = vld [vmem:[%s4913 + $0x60] sm:$0xff]
  %v4927 = vld [vmem:[%s4913 + $0x68] sm:$0xff]
  %v4928 = vld [vmem:[%s4913 + $0x70] sm:$0xff]
  %v4929 = vld [vmem:[%s4913 + $0x78] sm:$0xff]
  %v4930 = vld [vmem:[%s4913 + $0x80] sm:$0xff]
  %v4931 = vld [vmem:[%s4913 + $0x88] sm:$0xff]
  %v4932 = vld [vmem:[%s4913 + $0x90] sm:$0xff]
  %v4933 = vld [vmem:[%s4913 + $0x98] sm:$0xff]
  %v4934 = vld [vmem:[%s4913 + $0xa0] sm:$0xff]
  %v4935 = vld [vmem:[%s4913 + $0xa8] sm:$0xff]
  %v4936 = vld [vmem:[%s4913 + $0xb0] sm:$0xff]
  %v4937 = vld [vmem:[%s4913 + $0xb8] sm:$0xff]
  %v4939 = vsel %vm710, %v4408, 0
  %4941 = vmatprep.subr.mxu0 %v4915
  %4942 = vmatpush1.msra.mxu0 %v4914
  %4943 = vmatprep.subr.mxu0 %v4917
  %4944 = vmatpush1.msra.mxu0 %v4916
  %4945 = vmatprep.subr.mxu0 %v4919
  %4946 = vmatpush1.msra.mxu0 %v4918
  %4947 = vmatprep.subr.mxu0 %v4921
  %4948 = vmatpush1.msra.mxu0 %v4920
  %4949 = vmatprep.subr.mxu0 %v4923
  %4950 = vmatpush1.msra.mxu0 %v4922
  %4951 = vmatprep.subr.mxu0 %v4925
  %4952 = vmatpush1.msra.mxu0 %v4924
  %4953 = vmatprep.subr.mxu0 %v4927
  %4954 = vmatpush1.msra.mxu0 %v4926
  %4955 = vmatprep.subr.mxu0 %v4929
  %4956 = vmatpush1.msra.mxu0 %v4928
  %4957 = vmatprep.subr.mxu0 %v4931
  %4958 = vmatpush1.msra.mxu0 %v4930
  %4959 = vmatprep.subr.mxu0 %v4933
  %4960 = vmatpush1.msra.mxu0 %v4932
  %4961 = vmatprep.subr.mxu0 %v4935
  %4962 = vmatpush1.msra.mxu0 %v4934
  %4963 = vmatprep.subr.mxu0 %v4937
  %4964 = vmatpush1.msra.mxu0 %v4936
  %4965 = vmatprep.subr.mxu0 0.0
  %4966 = vmatpush1.msra.mxu0 0.0
  %4967 = vmatprep.subr.mxu0 0.0
  %4968 = vmatpush1.msra.mxu0 0.0
  %4969 = vmatprep.subr.mxu0 0.0
  %4970 = vmatpush1.msra.mxu0 0.0
  %4971 = vmatprep.subr.mxu0 0.0
  %4972 = vmatpush1.msra.mxu0 0.0
  %4973 = vmatprep.subr.mxu0 0.0
  %4974 = vmatpush1.msra.mxu0 0.0
  %4975 = vmatprep.subr.mxu0 0.0
  %4976 = vmatpush1.msra.mxu0 0.0
  %4977 = vmatprep.subr.mxu0 0.0
  %4978 = vmatpush1.msra.mxu0 0.0
  %4979 = vmatprep.subr.mxu0 0.0
  %4980 = vmatpush1.msra.mxu0 0.0
  %4981 = vmatprep.subr.mxu0 0.0
  %4982 = vmatpush1.msra.mxu0 0.0
  %4983 = vmatprep.subr.mxu0 0.0
  %4984 = vmatpush1.msra.mxu0 0.0
  %4985 = vmatprep.subr.mxu0 0.0
  %4986 = vmatpush1.msra.mxu0 0.0
  %4987 = vmatprep.subr.mxu0 0.0
  %4988 = vmatpush1.msra.mxu0 0.0
  %4989 = vmatprep.subr.mxu0 0.0
  %4990 = vmatpush1.msra.mxu0 0.0
  %4991 = vmatprep.subr.mxu0 0.0
  %4992 = vmatpush1.msra.mxu0 0.0
  %4993 = vmatprep.subr.mxu0 0.0
  %4994 = vmatpush1.msra.mxu0 0.0
  %4995 = vmatprep.subr.mxu0 0.0
  %4996 = vmatpush1.msra.mxu0 0.0
  %4997 = vmatprep.subr.mxu0 0.0
  %4998 = vmatpush1.msra.mxu0 0.0
  %4999 = vmatprep.subr.mxu0 0.0
  %5000 = vmatpush1.msra.mxu0 0.0
  %5001 = vmatprep.subr.mxu0 0.0
  %5002 = vmatpush1.msra.mxu0 0.0
  %5003 = vmatprep.subr.mxu0 0.0
  %5004 = vmatpush1.msra.mxu0 0.0
  %5005 = vmatprep.mubr.f32.mxu0 0.0
  %5006 = vmatmul.mubr.f32.gmra.mrb[0].mxu0 %v4939
  %v5007 = vpop.f32.mrb[0].mxu0
  %v5008 = vadd.f32 0.0, %v5007
  %v5009 = vpop.f32.mrb[0].mxu0
  %v5010 = vadd.f32 0.0, %v5009
  %5011 = vdwg.mxu0
  %v5012 = vsel %vm710, %v4398, 0
  %5014 = vmatprep.subr.mxu0 %v4417
  %5015 = vmatpush1.msra.mxu0 %v4416
  %5016 = vmatprep.subr.mxu0 %v4419
  %5017 = vmatpush1.msra.mxu0 %v4418
  %5018 = vmatprep.subr.mxu0 %v4421
  %5019 = vmatpush1.msra.mxu0 %v4420
  %5020 = vmatprep.subr.mxu0 %v4423
  %5021 = vmatpush1.msra.mxu0 %v4422
  %5022 = vmatprep.subr.mxu0 %v4425
  %5023 = vmatpush1.msra.mxu0 %v4424
  %5024 = vmatprep.subr.mxu0 %v4427
  %5025 = vmatpush1.msra.mxu0 %v4426
  %5026 = vmatprep.subr.mxu0 %v4429
  %5027 = vmatpush1.msra.mxu0 %v4428
  %5028 = vmatprep.subr.mxu0 %v4431
  %5029 = vmatpush1.msra.mxu0 %v4430
  %5030 = vmatprep.subr.mxu0 %v4433
  %5031 = vmatpush1.msra.mxu0 %v4432
  %5032 = vmatprep.subr.mxu0 %v4435
  %5033 = vmatpush1.msra.mxu0 %v4434
  %5034 = vmatprep.subr.mxu0 %v4437
  %5035 = vmatpush1.msra.mxu0 %v4436
  %5036 = vmatprep.subr.mxu0 %v4439
  %5037 = vmatpush1.msra.mxu0 %v4438
  %5038 = vmatprep.subr.mxu0 0.0
  %5039 = vmatpush1.msra.mxu0 0.0
  %5040 = vmatprep.subr.mxu0 0.0
  %5041 = vmatpush1.msra.mxu0 0.0
  %5042 = vmatprep.subr.mxu0 0.0
  %5043 = vmatpush1.msra.mxu0 0.0
  %5044 = vmatprep.subr.mxu0 0.0
  %5045 = vmatpush1.msra.mxu0 0.0
  %5046 = vmatprep.subr.mxu0 0.0
  %5047 = vmatpush1.msra.mxu0 0.0
  %5048 = vmatprep.subr.mxu0 0.0
  %5049 = vmatpush1.msra.mxu0 0.0
  %5050 = vmatprep.subr.mxu0 0.0
  %5051 = vmatpush1.msra.mxu0 0.0
  %5052 = vmatprep.subr.mxu0 0.0
  %5053 = vmatpush1.msra.mxu0 0.0
  %5054 = vmatprep.subr.mxu0 0.0
  %5055 = vmatpush1.msra.mxu0 0.0
  %5056 = vmatprep.subr.mxu0 0.0
  %5057 = vmatpush1.msra.mxu0 0.0
  %5058 = vmatprep.subr.mxu0 0.0
  %5059 = vmatpush1.msra.mxu0 0.0
  %5060 = vmatprep.subr.mxu0 0.0
  %5061 = vmatpush1.msra.mxu0 0.0
  %5062 = vmatprep.subr.mxu0 0.0
  %5063 = vmatpush1.msra.mxu0 0.0
  %5064 = vmatprep.subr.mxu0 0.0
  %5065 = vmatpush1.msra.mxu0 0.0
  %5066 = vmatprep.subr.mxu0 0.0
  %5067 = vmatpush1.msra.mxu0 0.0
  %5068 = vmatprep.subr.mxu0 0.0
  %5069 = vmatpush1.msra.mxu0 0.0
  %5070 = vmatprep.subr.mxu0 0.0
  %5071 = vmatpush1.msra.mxu0 0.0
  %5072 = vmatprep.subr.mxu0 0.0
  %5073 = vmatpush1.msra.mxu0 0.0
  %5074 = vmatprep.subr.mxu0 0.0
  %5075 = vmatpush1.msra.mxu0 0.0
  %5076 = vmatprep.subr.mxu0 0.0
  %5077 = vmatpush1.msra.mxu0 0.0
  %5078 = vmatprep.mubr.f32.mxu0 0.0
  %5079 = vmatmul.mubr.f32.gmra.mrb[0].mxu0 %v5012
  %v5080 = vpop.f32.mrb[0].mxu0
  %v5081 = vadd.f32 %v4536, %v5080
  %v5082 = vpop.f32.mrb[0].mxu0
  %v5083 = vadd.f32 %v4538, %v5082
  %5084 = vdwg.mxu0
  %v5085 = vrot.slane %v4398, 4
  %v5086 = vsel %vm710, %v5085, 0
  %5088 = vmatprep.subr.mxu0 %v4542
  %5089 = vmatpush1.msra.mxu0 %v4541
  %5090 = vmatprep.subr.mxu0 %v4544
  %5091 = vmatpush1.msra.mxu0 %v4543
  %5092 = vmatprep.subr.mxu0 %v4546
  %5093 = vmatpush1.msra.mxu0 %v4545
  %5094 = vmatprep.subr.mxu0 %v4548
  %5095 = vmatpush1.msra.mxu0 %v4547
  %5096 = vmatprep.subr.mxu0 %v4550
  %5097 = vmatpush1.msra.mxu0 %v4549
  %5098 = vmatprep.subr.mxu0 %v4552
  %5099 = vmatpush1.msra.mxu0 %v4551
  %5100 = vmatprep.subr.mxu0 %v4554
  %5101 = vmatpush1.msra.mxu0 %v4553
  %5102 = vmatprep.subr.mxu0 %v4556
  %5103 = vmatpush1.msra.mxu0 %v4555
  %5104 = vmatprep.subr.mxu0 %v4558
  %5105 = vmatpush1.msra.mxu0 %v4557
  %5106 = vmatprep.subr.mxu0 %v4560
  %5107 = vmatpush1.msra.mxu0 %v4559
  %5108 = vmatprep.subr.mxu0 %v4562
  %5109 = vmatpush1.msra.mxu0 %v4561
  %5110 = vmatprep.subr.mxu0 %v4564
  %5111 = vmatpush1.msra.mxu0 %v4563
  %5112 = vmatprep.subr.mxu0 0.0
  %5113 = vmatpush1.msra.mxu0 0.0
  %5114 = vmatprep.subr.mxu0 0.0
  %5115 = vmatpush1.msra.mxu0 0.0
  %5116 = vmatprep.subr.mxu0 0.0
  %5117 = vmatpush1.msra.mxu0 0.0
  %5118 = vmatprep.subr.mxu0 0.0
  %5119 = vmatpush1.msra.mxu0 0.0
  %5120 = vmatprep.subr.mxu0 0.0
  %5121 = vmatpush1.msra.mxu0 0.0
  %5122 = vmatprep.subr.mxu0 0.0
  %5123 = vmatpush1.msra.mxu0 0.0
  %5124 = vmatprep.subr.mxu0 0.0
  %5125 = vmatpush1.msra.mxu0 0.0
  %5126 = vmatprep.subr.mxu0 0.0
  %5127 = vmatpush1.msra.mxu0 0.0
  %5128 = vmatprep.subr.mxu0 0.0
  %5129 = vmatpush1.msra.mxu0 0.0
  %5130 = vmatprep.subr.mxu0 0.0
  %5131 = vmatpush1.msra.mxu0 0.0
  %5132 = vmatprep.subr.mxu0 0.0
  %5133 = vmatpush1.msra.mxu0 0.0
  %5134 = vmatprep.subr.mxu0 0.0
  %5135 = vmatpush1.msra.mxu0 0.0
  %5136 = vmatprep.subr.mxu0 0.0
  %5137 = vmatpush1.msra.mxu0 0.0
  %5138 = vmatprep.subr.mxu0 0.0
  %5139 = vmatpush1.msra.mxu0 0.0
  %5140 = vmatprep.subr.mxu0 0.0
  %5141 = vmatpush1.msra.mxu0 0.0
  %5142 = vmatprep.subr.mxu0 0.0
  %5143 = vmatpush1.msra.mxu0 0.0
  %5144 = vmatprep.subr.mxu0 0.0
  %5145 = vmatpush1.msra.mxu0 0.0
  %5146 = vmatprep.subr.mxu0 0.0
  %5147 = vmatpush1.msra.mxu0 0.0
  %5148 = vmatprep.subr.mxu0 0.0
  %5149 = vmatpush1.msra.mxu0 0.0
  %5150 = vmatprep.subr.mxu0 0.0
  %5151 = vmatpush1.msra.mxu0 0.0
  %5152 = vmatprep.mubr.f32.mxu0 0.0
  %5153 = vmatmul.mubr.f32.gmra.mrb[0].mxu0 %v5086
  %v5154 = vpop.f32.mrb[0].mxu0
  %v5155 = vadd.f32 %v4660, %v5154
  %v5156 = vpop.f32.mrb[0].mxu0
  %v5157 = vadd.f32 %v4662, %v5156
  %5158 = vdwg.mxu0
  %v5159 = vadd.f32 %v5081, %v5155
  %v5160 = vadd.f32 %v5083, %v5157
  %v5161 = vsel %vm710, %v4403, 0
  %5163 = vmatprep.subr.mxu0 %v4666
  %5164 = vmatpush1.msra.mxu0 %v4665
  %5165 = vmatprep.subr.mxu0 %v4668
  %5166 = vmatpush1.msra.mxu0 %v4667
  %5167 = vmatprep.subr.mxu0 %v4670
  %5168 = vmatpush1.msra.mxu0 %v4669
  %5169 = vmatprep.subr.mxu0 %v4672
  %5170 = vmatpush1.msra.mxu0 %v4671
  %5171 = vmatprep.subr.mxu0 %v4674
  %5172 = vmatpush1.msra.mxu0 %v4673
  %5173 = vmatprep.subr.mxu0 %v4676
  %5174 = vmatpush1.msra.mxu0 %v4675
  %5175 = vmatprep.subr.mxu0 %v4678
  %5176 = vmatpush1.msra.mxu0 %v4677
  %5177 = vmatprep.subr.mxu0 %v4680
  %5178 = vmatpush1.msra.mxu0 %v4679
  %5179 = vmatprep.subr.mxu0 %v4682
  %5180 = vmatpush1.msra.mxu0 %v4681
  %5181 = vmatprep.subr.mxu0 %v4684
  %5182 = vmatpush1.msra.mxu0 %v4683
  %5183 = vmatprep.subr.mxu0 %v4686
  %5184 = vmatpush1.msra.mxu0 %v4685
  %5185 = vmatprep.subr.mxu0 %v4688
  %5186 = vmatpush1.msra.mxu0 %v4687
  %5187 = vmatprep.subr.mxu0 0.0
  %5188 = vmatpush1.msra.mxu0 0.0
  %5189 = vmatprep.subr.mxu0 0.0
  %5190 = vmatpush1.msra.mxu0 0.0
  %5191 = vmatprep.subr.mxu0 0.0
  %5192 = vmatpush1.msra.mxu0 0.0
  %5193 = vmatprep.subr.mxu0 0.0
  %5194 = vmatpush1.msra.mxu0 0.0
  %5195 = vmatprep.subr.mxu0 0.0
  %5196 = vmatpush1.msra.mxu0 0.0
  %5197 = vmatprep.subr.mxu0 0.0
  %5198 = vmatpush1.msra.mxu0 0.0
  %5199 = vmatprep.subr.mxu0 0.0
  %5200 = vmatpush1.msra.mxu0 0.0
  %5201 = vmatprep.subr.mxu0 0.0
  %5202 = vmatpush1.msra.mxu0 0.0
  %5203 = vmatprep.subr.mxu0 0.0
  %5204 = vmatpush1.msra.mxu0 0.0
  %5205 = vmatprep.subr.mxu0 0.0
  %5206 = vmatpush1.msra.mxu0 0.0
  %5207 = vmatprep.subr.mxu0 0.0
  %5208 = vmatpush1.msra.mxu0 0.0
  %5209 = vmatprep.subr.mxu0 0.0
  %5210 = vmatpush1.msra.mxu0 0.0
  %5211 = vmatprep.subr.mxu0 0.0
  %5212 = vmatpush1.msra.mxu0 0.0
  %5213 = vmatprep.subr.mxu0 0.0
  %5214 = vmatpush1.msra.mxu0 0.0
  %5215 = vmatprep.subr.mxu0 0.0
  %5216 = vmatpush1.msra.mxu0 0.0
  %5217 = vmatprep.subr.mxu0 0.0
  %5218 = vmatpush1.msra.mxu0 0.0
  %5219 = vmatprep.subr.mxu0 0.0
  %5220 = vmatpush1.msra.mxu0 0.0
  %5221 = vmatprep.subr.mxu0 0.0
  %5222 = vmatpush1.msra.mxu0 0.0
  %5223 = vmatprep.subr.mxu0 0.0
  %5224 = vmatpush1.msra.mxu0 0.0
  %5225 = vmatprep.subr.mxu0 0.0
  %5226 = vmatpush1.msra.mxu0 0.0
  %5227 = vmatprep.mubr.f32.mxu0 0.0
  %5228 = vmatmul.mubr.f32.gmra.mrb[0].mxu0 %v5161
  %v5229 = vpop.f32.mrb[0].mxu0
  %v5230 = vadd.f32 %v4785, %v5229
  %v5231 = vpop.f32.mrb[0].mxu0
  %v5232 = vadd.f32 %v4787, %v5231
  %5233 = vdwg.mxu0
  %v5234 = vrot.slane %v4403, 4
  %v5235 = vsel %vm710, %v5234, 0
  %5237 = vmatprep.subr.mxu0 %v4791
  %5238 = vmatpush1.msra.mxu0 %v4790
  %5239 = vmatprep.subr.mxu0 %v4793
  %5240 = vmatpush1.msra.mxu0 %v4792
  %5241 = vmatprep.subr.mxu0 %v4795
  %5242 = vmatpush1.msra.mxu0 %v4794
  %5243 = vmatprep.subr.mxu0 %v4797
  %5244 = vmatpush1.msra.mxu0 %v4796
  %5245 = vmatprep.subr.mxu0 %v4799
  %5246 = vmatpush1.msra.mxu0 %v4798
  %5247 = vmatprep.subr.mxu0 %v4801
  %5248 = vmatpush1.msra.mxu0 %v4800
  %5249 = vmatprep.subr.mxu0 %v4803
  %5250 = vmatpush1.msra.mxu0 %v4802
  %5251 = vmatprep.subr.mxu0 %v4805
  %5252 = vmatpush1.msra.mxu0 %v4804
  %5253 = vmatprep.subr.mxu0 %v4807
  %5254 = vmatpush1.msra.mxu0 %v4806
  %5255 = vmatprep.subr.mxu0 %v4809
  %5256 = vmatpush1.msra.mxu0 %v4808
  %5257 = vmatprep.subr.mxu0 %v4811
  %5258 = vmatpush1.msra.mxu0 %v4810
  %5259 = vmatprep.subr.mxu0 %v4813
  %5260 = vmatpush1.msra.mxu0 %v4812
  %5261 = vmatprep.subr.mxu0 0.0
  %5262 = vmatpush1.msra.mxu0 0.0
  %5263 = vmatprep.subr.mxu0 0.0
  %5264 = vmatpush1.msra.mxu0 0.0
  %5265 = vmatprep.subr.mxu0 0.0
  %5266 = vmatpush1.msra.mxu0 0.0
  %5267 = vmatprep.subr.mxu0 0.0
  %5268 = vmatpush1.msra.mxu0 0.0
  %5269 = vmatprep.subr.mxu0 0.0
  %5270 = vmatpush1.msra.mxu0 0.0
  %5271 = vmatprep.subr.mxu0 0.0
  %5272 = vmatpush1.msra.mxu0 0.0
  %5273 = vmatprep.subr.mxu0 0.0
  %5274 = vmatpush1.msra.mxu0 0.0
  %5275 = vmatprep.subr.mxu0 0.0
  %5276 = vmatpush1.msra.mxu0 0.0
  %5277 = vmatprep.subr.mxu0 0.0
  %5278 = vmatpush1.msra.mxu0 0.0
  %5279 = vmatprep.subr.mxu0 0.0
  %5280 = vmatpush1.msra.mxu0 0.0
  %5281 = vmatprep.subr.mxu0 0.0
  %5282 = vmatpush1.msra.mxu0 0.0
  %5283 = vmatprep.subr.mxu0 0.0
  %5284 = vmatpush1.msra.mxu0 0.0
  %5285 = vmatprep.subr.mxu0 0.0
  %5286 = vmatpush1.msra.mxu0 0.0
  %5287 = vmatprep.subr.mxu0 0.0
  %5288 = vmatpush1.msra.mxu0 0.0
  %5289 = vmatprep.subr.mxu0 0.0
  %5290 = vmatpush1.msra.mxu0 0.0
  %5291 = vmatprep.subr.mxu0 0.0
  %5292 = vmatpush1.msra.mxu0 0.0
  %5293 = vmatprep.subr.mxu0 0.0
  %5294 = vmatpush1.msra.mxu0 0.0
  %5295 = vmatprep.subr.mxu0 0.0
  %5296 = vmatpush1.msra.mxu0 0.0
  %5297 = vmatprep.subr.mxu0 0.0
  %5298 = vmatpush1.msra.mxu0 0.0
  %5299 = vmatprep.subr.mxu0 0.0
  %5300 = vmatpush1.msra.mxu0 0.0
  %5301 = vmatprep.mubr.f32.mxu0 0.0
  %5302 = vmatmul.mubr.f32.gmra.mrb[0].mxu0 %v5235
  %v5303 = vpop.f32.mrb[0].mxu0
  %v5304 = vadd.f32 %v4909, %v5303
  %v5305 = vpop.f32.mrb[0].mxu0
  %v5306 = vadd.f32 %v4911, %v5305
  %5307 = vdwg.mxu0
  %v5308 = vadd.f32 %v5230, %v5304
  %v5309 = vadd.f32 %v5232, %v5306
  %v5310 = vadd.f32 %v5159, %v5308
  %v5311 = vadd.f32 %v5160, %v5309
  %v5312 = vadd.f32 %v5310, %v5008
  %v5313 = vadd.f32 %v5311, %v5010
  %v5314 = vlaneseq
  %v5315 = vshrl.u32 %v5314, 7
  %v5316 = vsub.s32 0, %v5315
  %v5317 = vrot.slane %v39, %v5316
  %v5318 = vlaneseq
  %v5319 = vshrl.u32 %v5318, 7
  %v5320 = vsub.s32 0, %v5319
  %v5321 = vrot.slane %v40, %v5320
  %v5322 = vadd.f32 %v5312, %v5317
  %v5323 = vadd.f32 %v5313, %v5321
  %v5324 = vmax.f32 %v5322, 0.0
  %v5325 = vmax.f32 %v5323, 0.0
  %v5326 = vlaneseq
  %v5327 = vshrl.u32 %v5326, 7
  %v5328 = vsub.s32 1, %v5327
  %v5329 = vrot.slane %v39, %v5328
  %v5330 = vlaneseq
  %v5331 = vshrl.u32 %v5330, 7
  %v5332 = vsub.s32 1, %v5331
  %v5333 = vrot.slane %v40, %v5332
  %v5334 = vmul.f32 %v5324, %v5329
  %v5335 = vmul.f32 %v5325, %v5333
  %vm5336 = vcmask 1041408
  %v5337 = vsel %vm5336, %v5334, 0.0
  %vm5338 = vcmask 549888
  %v5339 = vsel %vm5338, %v5335, 0.0
  %v5340 = vadd.f32 %v5337, %v5339
  %5341 = vadd.xlane.f32.xlu0 %v5340
  %v5342 = vpop.xlane.xlu0 %5341
  %v5343 = vlaneseq
  %v5344 = vshrl.u32 %v5343, 7
  %v5345 = vsub.s32 2, %v5344
  %v5346 = vrot.slane %v39, %v5345
  %v5347 = vadd.f32 %v5342, %v5346
  %vm5348 = vcmask 1024
  %5349 = vst.msk [vmem:[%s8] sm:$0x3] %vm5348, %v5347
  // Predicated region
  $region34: #{residual_degrade_forward.1} parent=0 // pred_check
    _
  $region35: #{residual_degrade_forward.1} parent=0 // pred_check_branch
    %5351 = sbr.rel (0) target = $region37
  $region36: #{residual_degrade_forward.1} parent=0 // pred_region
    _
  $region37: #{residual_degrade_forward.1} parent=0 // pred_fallthru
    _
  // Predicated region
  $region38: #{residual_degrade_forward.1} parent=0 // pred_check
    _
  $region39: #{residual_degrade_forward.1} parent=0 // pred_check_branch
    %5353 = sbr.rel (0) target = $region41
  $region40: #{residual_degrade_forward.1} parent=0 // pred_region
    _
  $region41: #{residual_degrade_forward.1} parent=0 // pred_fallthru
    _
  %5354 = vsyncmov [#allocation3]
  %s5355 = vpop.sfrf %5354
  %p5356 = scmp.eq.s32.totalorder %s5355, 0
  %p5357 = pneg %p5356
  %5359 = shalt.err (%p5357)

</llo_original>
